<compile_context>
chip_gen: v7x
topology: tpu7x:2x2x1
jax: 0.10.0
libtpu: 0.0.40
codegen_flags: <defaults>
</compile_context>

<pallas_src>
import math
import functools

import numpy as np
import jax
import jax.numpy as jnp
from jax import lax
from jax.experimental import pallas as pl
from jax.experimental.pallas import tpu as pltpu


# ------------------------------ fused Pallas kernel ------------------------------

def _fused_kernel(x_ref, bng_ref, bnb_ref, msel_ref, bias_ref, pswap_ref, hmask_ref,
                  wq_ref, wk_ref, wv_ref, bq_ref, bk_ref, bv_ref, wo_ref, bo_ref,
                  dcw_ref, dcb_ref, o_ref, *, num_layers, num_heads, seq_len, eps):
    """Whole TimingsTransformer forward (minus the embedding gather) in one kernel.

    x_ref: (N, D) with N = batch*seq, rows r = b*seq_len + s (batch-first flattened).
    All weights are stacked along a leading layer axis and indexed statically.
    """
    f32 = jnp.float32
    cur = x_ref[...]                                   # (N, D)
    N, D = cur.shape
    inv_cnt = 1.0 / float((N // seq_len) * D)          # BatchNorm1d element count per channel
    msel = msel_ref[...]                               # (N, N) same-channel selector (0/1)
    bias = bias_ref[...]                               # (N, N) block-diagonal attention bias

    for layer in range(num_layers):                    # static python loop (num_layers small)
        if layer > 0:
            # reference's inter-layer swapaxes(0, 1): a row permutation of the flattened
            # activation, executed as a single (N,N)@(N,D) MXU matmul (no transposes).
            cur = jnp.dot(pswap_ref[...], cur, preferred_element_type=f32)

        # ---- BatchNorm1d(seq_len), training-mode batch statistics ----
        # channel of row r is r % seq_len; (msel @ x) sums x over rows sharing a channel
        # and broadcasts the per-channel totals back to every row.
        mean = jnp.sum(jnp.dot(msel, cur, preferred_element_type=f32),
                       axis=-1, keepdims=True) * inv_cnt                    # (N, 1)
        xc = cur - mean
        var = jnp.sum(jnp.dot(msel, xc * xc, preferred_element_type=f32),
                      axis=-1, keepdims=True) * inv_cnt                     # (N, 1), biased var
        cur = xc * lax.rsqrt(var + eps) * bng_ref[layer] + bnb_ref[layer]

        # ---- multi-head self-attention over rows of the same batch group ----
        # TODO(synk): TimingsMultiheadAttention source was not provided; standard
        # scaled-dot-product MHA (dropout disabled / eval semantics) is assumed.
        q = jnp.dot(cur, wq_ref[layer], preferred_element_type=f32) + bq_ref[layer]  # 1/sqrt(hd) pre-folded
        k = jnp.dot(cur, wk_ref[layer], preferred_element_type=f32) + bk_ref[layer]
        v = jnp.dot(cur, wv_ref[layer], preferred_element_type=f32) + bv_ref[layer]
        ctx = jnp.zeros_like(cur)
        for h in range(num_heads):                     # static head loop
            m = hmask_ref[h]                           # (1, D) 0/1 lane mask for head h
            s = lax.dot_general(q, k * m, (((1,), (1,)), ((), ())),
                                preferred_element_type=f32) + bias          # (N, N)
            s = s - jnp.max(s, axis=-1, keepdims=True)
            p = jnp.exp(s)
            p = p * pl.reciprocal(jnp.sum(p, axis=-1, keepdims=True), approx=True)
            ctx = ctx + jnp.dot(p, v * m, preferred_element_type=f32)        # lands only in head-h lanes
        cur = jnp.dot(ctx, wo_ref[layer], preferred_element_type=f32) + bo_ref[layer]

    # ---- decoder (fused) ----
    o_ref[...] = (jnp.dot(cur, dcw_ref[...], preferred_element_type=f32)
                  + dcb_ref[...]).astype(o_ref.dtype)


# ------------------------------ Python wrapper ------------------------------

def timings_transformer_forward(tokens, params, *, num_inputs, num_heads, num_layers):
    """tokens: (S, B) int32.  Returns (S, B, num_tokens) for even num_layers."""
    S, B = tokens.shape
    D = num_inputs
    T = params["dec_w"].shape[-1]
    L = num_layers
    H = num_heads
    HD = D // H
    if L > 1 and S != B:
        raise ValueError("batch_size must equal sequence_length for num_layers > 1 "
                         "(inherited from the reference swapaxes/BatchNorm1d pattern)")
    N = S * B

    # glue kept in plain JAX: embedding gather + positional-feature concat.
    x = params["emb"][tokens] * math.sqrt(D)                        # (S, B, D-3)
    x = jnp.concatenate([x, params["pos_embeds"]], axis=2)          # (S, B, D)
    xb = jnp.swapaxes(x, 0, 1).reshape(N, D)                        # batch-first rows r = b*S + s

    # trace-time constants (become jit constants; built in numpy for zero lowering risk)
    rows = np.arange(N)
    chan = rows % S                 # BatchNorm channel (= logical seq position) of each row
    grp = rows // S                 # attention group (= logical batch) of each row
    msel = (chan[:, None] == chan[None, :]).astype(np.float32)                    # (N, N)
    attn_bias = np.where(grp[:, None] == grp[None, :], 0.0, -1e30).astype(np.float32)
    pswap = np.zeros((N, N), np.float32)
    pswap[rows, chan * B + grp] = 1.0            # swapaxes(0,1) as a row permutation matrix
    hmask = np.zeros((H, 1, D), np.float32)
    for h in range(H):
        hmask[h, 0, h * HD:(h + 1) * HD] = 1.0

    # per-layer BN gamma/beta broadcast to rows: gamma_rows[l, r] = bn_w[l, r % S]
    bn_g = jnp.tile(params["bn_w"], (1, B))[..., None]              # (L, N, 1)
    bn_bt = jnp.tile(params["bn_b"], (1, B))[..., None]             # (L, N, 1)

    # fold 1/sqrt(head_dim) into the Q projection (weights and bias)
    scale = 1.0 / math.sqrt(HD)
    wq = params["wq"] * scale
    bq = params["bq"] * scale

    def _full(shape):
        nd = len(shape)
        return pl.BlockSpec(shape, lambda i, _nd=nd: (0,) * _nd)

    args = (xb, bn_g, bn_bt,
            jnp.asarray(msel), jnp.asarray(attn_bias), jnp.asarray(pswap), jnp.asarray(hmask),
            wq, params["wk"], params["wv"], bq, params["bk"], params["bv"],
            params["wo"], params["bo"], params["dec_w"], params["dec_b"])

    out2 = pl.pallas_call(
        functools.partial(_fused_kernel, num_layers=L, num_heads=H, seq_len=S, eps=1e-5),
        out_shape=jax.ShapeDtypeStruct((N, T), jnp.float32),
        grid=(1,),
        in_specs=[_full(a.shape) for a in args],
        out_specs=_full((N, T)),
        compiler_params=pltpu.CompilerParams(dimension_semantics=("arbitrary",)),
    )(*args)

    lead = (S, B) if L % 2 == 0 else (B, S)
    return out2.reshape(*lead, T)


# ------------------------------ parameters ------------------------------

def init_params(key, *, seq_len, num_tokens, num_inputs, num_heads, num_layers, batch_size):
    assert num_inputs % num_heads == 0 and num_inputs > 3
    D = num_inputs
    keys = jax.random.split(key, 4 + num_layers)

    pos = jax.random.normal(keys[0], (seq_len, 1, 3), jnp.float32)
    pos_embeds = jnp.tile(pos, (1, batch_size, 1))                  # (S, B, 3)
    emb = jax.random.normal(keys[1], (num_tokens, D - 3), jnp.float32)

    bound = 1.0 / math.sqrt(D)
    dec_w = jax.random.uniform(keys[2], (D, num_tokens), jnp.float32, -bound, bound)
    dec_b = jax.random.uniform(keys[3], (1, num_tokens), jnp.float32, -bound, bound)

    wq, wk, wv, bq, bk, bv, wo, bo = ([] for _ in range(8))
    for l in range(num_layers):
        lk = jax.random.split(keys[4 + l], 8)
        sc = 1.0 / math.sqrt(D)
        wq.append(jax.random.uniform(lk[0], (D, D), jnp.float32, -sc, sc))
        wk.append(jax.random.uniform(lk[1], (D, D), jnp.float32, -sc, sc))
        wv.append(jax.random.uniform(lk[2], (D, D), jnp.float32, -sc, sc))
        bq.append(jax.random.uniform(lk[3], (1, D), jnp.float32, -sc, sc))
        bk.append(jax.random.uniform(lk[4], (1, D), jnp.float32, -sc, sc))
        bv.append(jax.random.uniform(lk[5], (1, D), jnp.float32, -sc, sc))
        wo.append(jax.random.uniform(lk[6], (D, D), jnp.float32, -sc, sc))
        bo.append(jax.random.uniform(lk[7], (1, D), jnp.float32, -sc, sc))

    return {
        "pos_embeds": pos_embeds, "emb": emb, "dec_w": dec_w, "dec_b": dec_b,
        "bn_w": jnp.ones((num_layers, seq_len), jnp.float32),
        "bn_b": jnp.zeros((num_layers, seq_len), jnp.float32),
        "wq": jnp.stack(wq), "wk": jnp.stack(wk), "wv": jnp.stack(wv),
        "bq": jnp.stack(bq), "bk": jnp.stack(bk), "bv": jnp.stack(bv),
        "wo": jnp.stack(wo), "bo": jnp.stack(bo),
    }


# ------------------------------ pure-JAX reference ------------------------------

def _reference_forward(tokens, params, *, num_inputs, num_heads, num_layers, eps=1e-5):
    """Straightforward JAX mirror of the PyTorch forward (same MHA/BN assumptions)."""
    D = num_inputs
    H = num_heads
    HD = D // H
    x = params["emb"][tokens] * math.sqrt(D)
    x = jnp.concatenate([x, params["pos_embeds"]], axis=2)          # (S, B, D)
    for l in range(num_layers):
        x = jnp.swapaxes(x, 0, 1)                                   # (N, C, L) for BatchNorm1d
        mean = jnp.mean(x, axis=(0, 2), keepdims=True)
        var = jnp.mean((x - mean) ** 2, axis=(0, 2), keepdims=True)
        x = (x - mean) / jnp.sqrt(var + eps)
        x = x * params["bn_w"][l][None, :, None] + params["bn_b"][l][None, :, None]
        x = jnp.swapaxes(x, 0, 1)                                   # seq-first for attention
        S_l, B_l, _ = x.shape
        q = (x @ params["wq"][l] + params["bq"][l]).reshape(S_l, B_l, H, HD)
        k = (x @ params["wk"][l] + params["bk"][l]).reshape(S_l, B_l, H, HD)
        v = (x @ params["wv"][l] + params["bv"][l]).reshape(S_l, B_l, H, HD)
        s = jnp.einsum("ibhe,jbhe->bhij", q, k) / math.sqrt(HD)
        p = jax.nn.softmax(s, axis=-1)
        ctx = jnp.einsum("bhij,jbhe->ibhe", p, v).reshape(S_l, B_l, D)
        x = ctx @ params["wo"][l] + params["bo"][l]
        x = jnp.swapaxes(x, 0, 1)
    return x @ params["dec_w"] + params["dec_b"]


# ------------------------------ main ------------------------------

if __name__ == "__main__":
    SEQ_LEN = 8
    BATCH = 8            # must equal SEQ_LEN for NUM_LAYERS > 1 (see note at top)
    NUM_TOKENS = 16
    NUM_INPUTS = 32
    NUM_HEADS = 4
    NUM_LAYERS = 2

    key = jax.random.PRNGKey(0)
    pkey, tkey = jax.random.split(key)

    params = init_params(pkey, seq_len=SEQ_LEN, num_tokens=NUM_TOKENS,
                         num_inputs=NUM_INPUTS, num_heads=NUM_HEADS,
                         num_layers=NUM_LAYERS, batch_size=BATCH)
    tokens = jax.random.randint(tkey, (SEQ_LEN, BATCH), 0, NUM_TOKENS, dtype=jnp.int32)

    fwd = jax.jit(functools.partial(timings_transformer_forward,
                                    num_inputs=NUM_INPUTS, num_heads=NUM_HEADS,
                                    num_layers=NUM_LAYERS))
    out = fwd(tokens, params)
    jax.block_until_ready(out)

    # num_layers is even -> output stays (seq, batch, num_tokens)
    assert out.shape == (SEQ_LEN, BATCH, NUM_TOKENS), out.shape
    assert bool(jnp.all(jnp.isfinite(out)))

    # correctness check against a plain-JAX reference of the same semantics
    # (approx reciprocal in the kernel softmax -> modest tolerance).
    ref = _reference_forward(tokens, params, num_inputs=NUM_INPUTS,
                             num_heads=NUM_HEADS, num_layers=NUM_LAYERS)
    assert ref.shape == out.shape
    max_err = float(jnp.max(jnp.abs(out - ref)))
    assert bool(jnp.allclose(out, ref, atol=3e-2, rtol=3e-2)), max_err

    print("KERNEL_OK")
</pallas_src>

<mosaic_0001>
module attributes {stable_mosaic.version = 11 : i64} {
  func.func @_fused_kernel(%arg0: i32, %arg1: memref<64x32xf32, #tpu.memory_space<vmem>>, %arg2: memref<2x64x1xf32, #tpu.memory_space<vmem>>, %arg3: memref<2x64x1xf32, #tpu.memory_space<vmem>>, %arg4: memref<64x64xf32, #tpu.memory_space<vmem>>, %arg5: memref<64x64xf32, #tpu.memory_space<vmem>>, %arg6: memref<64x64xf32, #tpu.memory_space<vmem>>, %arg7: memref<4x1x32xf32, #tpu.memory_space<vmem>>, %arg8: memref<2x32x32xf32, #tpu.memory_space<vmem>>, %arg9: memref<2x32x32xf32, #tpu.memory_space<vmem>>, %arg10: memref<2x32x32xf32, #tpu.memory_space<vmem>>, %arg11: memref<2x1x32xf32, #tpu.memory_space<vmem>>, %arg12: memref<2x1x32xf32, #tpu.memory_space<vmem>>, %arg13: memref<2x1x32xf32, #tpu.memory_space<vmem>>, %arg14: memref<2x32x32xf32, #tpu.memory_space<vmem>>, %arg15: memref<2x1x32xf32, #tpu.memory_space<vmem>>, %arg16: memref<32x16xf32, #tpu.memory_space<vmem>>, %arg17: memref<1x16xf32, #tpu.memory_space<vmem>>, %arg18: memref<64x16xf32, #tpu.memory_space<vmem>>) attributes {dimension_semantics = [#tpu.dimension_semantics<arbitrary>], iteration_bounds = array<i64: 1>, scalar_prefetch = 0 : i64, scratch_operands = 0 : i64, tpu.core_type = #tpu.core_type<tc>, window_params = [{pipeline_mode = #tpu.pipeline_mode<synchronous>, transform_indices = @transform_0, window_bounds = array<i64: 64, 32>}, {pipeline_mode = #tpu.pipeline_mode<synchronous>, transform_indices = @transform_1, window_bounds = array<i64: 2, 64, 1>}, {pipeline_mode = #tpu.pipeline_mode<synchronous>, transform_indices = @transform_2, window_bounds = array<i64: 2, 64, 1>}, {pipeline_mode = #tpu.pipeline_mode<synchronous>, transform_indices = @transform_3, window_bounds = array<i64: 64, 64>}, {pipeline_mode = #tpu.pipeline_mode<synchronous>, transform_indices = @transform_4, window_bounds = array<i64: 64, 64>}, {pipeline_mode = #tpu.pipeline_mode<synchronous>, transform_indices = @transform_5, window_bounds = array<i64: 64, 64>}, {pipeline_mode = #tpu.pipeline_mode<synchronous>, transform_indices = @transform_6, window_bounds = array<i64: 4, 1, 32>}, {pipeline_mode = #tpu.pipeline_mode<synchronous>, transform_indices = @transform_7, window_bounds = array<i64: 2, 32, 32>}, {pipeline_mode = #tpu.pipeline_mode<synchronous>, transform_indices = @transform_8, window_bounds = array<i64: 2, 32, 32>}, {pipeline_mode = #tpu.pipeline_mode<synchronous>, transform_indices = @transform_9, window_bounds = array<i64: 2, 32, 32>}, {pipeline_mode = #tpu.pipeline_mode<synchronous>, transform_indices = @transform_10, window_bounds = array<i64: 2, 1, 32>}, {pipeline_mode = #tpu.pipeline_mode<synchronous>, transform_indices = @transform_11, window_bounds = array<i64: 2, 1, 32>}, {pipeline_mode = #tpu.pipeline_mode<synchronous>, transform_indices = @transform_12, window_bounds = array<i64: 2, 1, 32>}, {pipeline_mode = #tpu.pipeline_mode<synchronous>, transform_indices = @transform_13, window_bounds = array<i64: 2, 32, 32>}, {pipeline_mode = #tpu.pipeline_mode<synchronous>, transform_indices = @transform_14, window_bounds = array<i64: 2, 1, 32>}, {pipeline_mode = #tpu.pipeline_mode<synchronous>, transform_indices = @transform_15, window_bounds = array<i64: 32, 16>}, {pipeline_mode = #tpu.pipeline_mode<synchronous>, transform_indices = @transform_16, window_bounds = array<i64: 1, 16>}, {pipeline_mode = #tpu.pipeline_mode<synchronous>, transform_indices = @transform_17, window_bounds = array<i64: 64, 16>}]} {
    %c0 = arith.constant 0 : index
    %c0_0 = arith.constant 0 : index
    %0 = vector.load %arg1[%c0, %c0_0] : memref<64x32xf32, #tpu.memory_space<vmem>>, vector<64x32xf32>
    %c0_1 = arith.constant 0 : index
    %c0_2 = arith.constant 0 : index
    %1 = vector.load %arg4[%c0_1, %c0_2] : memref<64x64xf32, #tpu.memory_space<vmem>>, vector<64x64xf32>
    %c0_3 = arith.constant 0 : index
    %c0_4 = arith.constant 0 : index
    %2 = vector.load %arg5[%c0_3, %c0_4] : memref<64x64xf32, #tpu.memory_space<vmem>>, vector<64x64xf32>
    %cst = arith.constant dense<0.000000e+00> : vector<64x32xf32>
    %3 = tpu.matmul %1, %0, %cst {dimension_numbers = #tpu.dot_dimension_numbers<[1], [0], [0], [1], [0, 0, 1, 1], [], []>} : vector<64x64xf32>, vector<64x32xf32>, vector<64x32xf32> -> vector<64x32xf32>
    %cst_5 = arith.constant dense<0.000000e+00> : vector<64xf32>
    %4 = vector.multi_reduction <add>, %3, %cst_5 [1] : vector<64x32xf32> to vector<64xf32>
    %5 = vector.shape_cast %4 : vector<64xf32> to vector<64x1xf32>
    %cst_6 = arith.constant 3.906250e-03 : f32
    %6 = vector.broadcast %cst_6 : f32 to vector<64x1xf32>
    %7 = arith.mulf %5, %6 : vector<64x1xf32>
    %8 = vector.broadcast %7 : vector<64x1xf32> to vector<64x32xf32>
    %9 = arith.subf %0, %8 : vector<64x32xf32>
    %10 = arith.mulf %9, %9 : vector<64x32xf32>
    %cst_7 = arith.constant dense<0.000000e+00> : vector<64x32xf32>
    %11 = tpu.matmul %1, %10, %cst_7 {dimension_numbers = #tpu.dot_dimension_numbers<[1], [0], [0], [1], [0, 0, 1, 1], [], []>} : vector<64x64xf32>, vector<64x32xf32>, vector<64x32xf32> -> vector<64x32xf32>
    %cst_8 = arith.constant dense<0.000000e+00> : vector<64xf32>
    %12 = vector.multi_reduction <add>, %11, %cst_8 [1] : vector<64x32xf32> to vector<64xf32>
    %13 = vector.shape_cast %12 : vector<64xf32> to vector<64x1xf32>
    %cst_9 = arith.constant 3.906250e-03 : f32
    %14 = vector.broadcast %cst_9 : f32 to vector<64x1xf32>
    %15 = arith.mulf %13, %14 : vector<64x1xf32>
    %cst_10 = arith.constant 9.99999974E-6 : f32
    %16 = vector.broadcast %cst_10 : f32 to vector<64x1xf32>
    %17 = arith.addf %15, %16 : vector<64x1xf32>
    %18 = math.rsqrt %17 : vector<64x1xf32>
    %19 = vector.broadcast %18 : vector<64x1xf32> to vector<64x32xf32>
    %20 = arith.mulf %9, %19 : vector<64x32xf32>
    %c0_11 = arith.constant 0 : index
    %c0_12 = arith.constant 0 : index
    %c0_13 = arith.constant 0 : index
    %21 = vector.load %arg2[%c0_11, %c0_12, %c0_13] : memref<2x64x1xf32, #tpu.memory_space<vmem>>, vector<1x64x1xf32>
    %22 = vector.shape_cast %21 : vector<1x64x1xf32> to vector<64x1xf32>
    %23 = vector.broadcast %22 : vector<64x1xf32> to vector<64x32xf32>
    %24 = arith.mulf %20, %23 : vector<64x32xf32>
    %c0_14 = arith.constant 0 : index
    %c0_15 = arith.constant 0 : index
    %c0_16 = arith.constant 0 : index
    %25 = vector.load %arg3[%c0_14, %c0_15, %c0_16] : memref<2x64x1xf32, #tpu.memory_space<vmem>>, vector<1x64x1xf32>
    %26 = vector.shape_cast %25 : vector<1x64x1xf32> to vector<64x1xf32>
    %27 = vector.broadcast %26 : vector<64x1xf32> to vector<64x32xf32>
    %28 = arith.addf %24, %27 : vector<64x32xf32>
    %c0_17 = arith.constant 0 : index
    %c0_18 = arith.constant 0 : index
    %c0_19 = arith.constant 0 : index
    %29 = vector.load %arg8[%c0_17, %c0_18, %c0_19] : memref<2x32x32xf32, #tpu.memory_space<vmem>>, vector<1x32x32xf32>
    %30 = vector.shape_cast %29 : vector<1x32x32xf32> to vector<32x32xf32>
    %cst_20 = arith.constant dense<0.000000e+00> : vector<64x32xf32>
    %31 = tpu.matmul %28, %30, %cst_20 {dimension_numbers = #tpu.dot_dimension_numbers<[1], [0], [0], [1], [0, 0, 1, 1], [], []>} : vector<64x32xf32>, vector<32x32xf32>, vector<64x32xf32> -> vector<64x32xf32>
    %c0_21 = arith.constant 0 : index
    %c0_22 = arith.constant 0 : index
    %c0_23 = arith.constant 0 : index
    %32 = vector.load %arg11[%c0_21, %c0_22, %c0_23] : memref<2x1x32xf32, #tpu.memory_space<vmem>>, vector<1x1x32xf32>
    %33 = vector.shape_cast %32 : vector<1x1x32xf32> to vector<1x32xf32>
    %34 = vector.broadcast %33 : vector<1x32xf32> to vector<64x32xf32>
    %35 = arith.addf %31, %34 : vector<64x32xf32>
    %c0_24 = arith.constant 0 : index
    %c0_25 = arith.constant 0 : index
    %c0_26 = arith.constant 0 : index
    %36 = vector.load %arg9[%c0_24, %c0_25, %c0_26] : memref<2x32x32xf32, #tpu.memory_space<vmem>>, vector<1x32x32xf32>
    %37 = vector.shape_cast %36 : vector<1x32x32xf32> to vector<32x32xf32>
    %cst_27 = arith.constant dense<0.000000e+00> : vector<64x32xf32>
    %38 = tpu.matmul %28, %37, %cst_27 {dimension_numbers = #tpu.dot_dimension_numbers<[1], [0], [0], [1], [0, 0, 1, 1], [], []>} : vector<64x32xf32>, vector<32x32xf32>, vector<64x32xf32> -> vector<64x32xf32>
    %c0_28 = arith.constant 0 : index
    %c0_29 = arith.constant 0 : index
    %c0_30 = arith.constant 0 : index
    %39 = vector.load %arg12[%c0_28, %c0_29, %c0_30] : memref<2x1x32xf32, #tpu.memory_space<vmem>>, vector<1x1x32xf32>
    %40 = vector.shape_cast %39 : vector<1x1x32xf32> to vector<1x32xf32>
    %41 = vector.broadcast %40 : vector<1x32xf32> to vector<64x32xf32>
    %42 = arith.addf %38, %41 : vector<64x32xf32>
    %c0_31 = arith.constant 0 : index
    %c0_32 = arith.constant 0 : index
    %c0_33 = arith.constant 0 : index
    %43 = vector.load %arg10[%c0_31, %c0_32, %c0_33] : memref<2x32x32xf32, #tpu.memory_space<vmem>>, vector<1x32x32xf32>
    %44 = vector.shape_cast %43 : vector<1x32x32xf32> to vector<32x32xf32>
    %cst_34 = arith.constant dense<0.000000e+00> : vector<64x32xf32>
    %45 = tpu.matmul %28, %44, %cst_34 {dimension_numbers = #tpu.dot_dimension_numbers<[1], [0], [0], [1], [0, 0, 1, 1], [], []>} : vector<64x32xf32>, vector<32x32xf32>, vector<64x32xf32> -> vector<64x32xf32>
    %c0_35 = arith.constant 0 : index
    %c0_36 = arith.constant 0 : index
    %c0_37 = arith.constant 0 : index
    %46 = vector.load %arg13[%c0_35, %c0_36, %c0_37] : memref<2x1x32xf32, #tpu.memory_space<vmem>>, vector<1x1x32xf32>
    %47 = vector.shape_cast %46 : vector<1x1x32xf32> to vector<1x32xf32>
    %48 = vector.broadcast %47 : vector<1x32xf32> to vector<64x32xf32>
    %49 = arith.addf %45, %48 : vector<64x32xf32>
    %cst_38 = arith.constant 0.000000e+00 : f32
    %50 = vector.broadcast %cst_38 : f32 to vector<64x32xf32>
    %c0_39 = arith.constant 0 : index
    %c0_40 = arith.constant 0 : index
    %c0_41 = arith.constant 0 : index
    %51 = vector.load %arg7[%c0_39, %c0_40, %c0_41] : memref<4x1x32xf32, #tpu.memory_space<vmem>>, vector<1x1x32xf32>
    %52 = vector.shape_cast %51 : vector<1x1x32xf32> to vector<1x32xf32>
    %53 = vector.broadcast %52 : vector<1x32xf32> to vector<64x32xf32>
    %54 = arith.mulf %42, %53 : vector<64x32xf32>
    %cst_42 = arith.constant dense<0.000000e+00> : vector<64x64xf32>
    %55 = tpu.matmul %35, %54, %cst_42 {dimension_numbers = #tpu.dot_dimension_numbers<[1], [1], [0], [0], [0, 0, 1, 0], [], []>} : vector<64x32xf32>, vector<64x32xf32>, vector<64x64xf32> -> vector<64x64xf32>
    %56 = arith.addf %55, %2 : vector<64x64xf32>
    %cst_43 = arith.constant dense<0xFF800000> : vector<64xf32>
    %57 = vector.multi_reduction <maximumf>, %56, %cst_43 [1] : vector<64x64xf32> to vector<64xf32>
    %58 = vector.shape_cast %57 : vector<64xf32> to vector<64x1xf32>
    %59 = vector.broadcast %58 : vector<64x1xf32> to vector<64x64xf32>
    %60 = arith.subf %56, %59 : vector<64x64xf32>
    %61 = math.exp %60 : vector<64x64xf32>
    %cst_44 = arith.constant dense<0.000000e+00> : vector<64xf32>
    %62 = vector.multi_reduction <add>, %61, %cst_44 [1] : vector<64x64xf32> to vector<64xf32>
    %63 = vector.shape_cast %62 : vector<64xf32> to vector<64x1xf32>
    %64 = tpu.reciprocal %63 {approx = true} : vector<64x1xf32> -> vector<64x1xf32>
    %65 = vector.broadcast %64 : vector<64x1xf32> to vector<64x64xf32>
    %66 = arith.mulf %61, %65 : vector<64x64xf32>
    %67 = vector.broadcast %52 : vector<1x32xf32> to vector<64x32xf32>
    %68 = arith.mulf %49, %67 : vector<64x32xf32>
    %cst_45 = arith.constant dense<0.000000e+00> : vector<64x32xf32>
    %69 = tpu.matmul %66, %68, %cst_45 {dimension_numbers = #tpu.dot_dimension_numbers<[1], [0], [0], [1], [0, 0, 1, 1], [], []>} : vector<64x64xf32>, vector<64x32xf32>, vector<64x32xf32> -> vector<64x32xf32>
    %70 = arith.addf %50, %69 : vector<64x32xf32>
    %c1 = arith.constant 1 : index
    %c0_46 = arith.constant 0 : index
    %c0_47 = arith.constant 0 : index
    %71 = vector.load %arg7[%c1, %c0_46, %c0_47] : memref<4x1x32xf32, #tpu.memory_space<vmem>>, vector<1x1x32xf32>
    %72 = vector.shape_cast %71 : vector<1x1x32xf32> to vector<1x32xf32>
    %73 = vector.broadcast %72 : vector<1x32xf32> to vector<64x32xf32>
    %74 = arith.mulf %42, %73 : vector<64x32xf32>
    %cst_48 = arith.constant dense<0.000000e+00> : vector<64x64xf32>
    %75 = tpu.matmul %35, %74, %cst_48 {dimension_numbers = #tpu.dot_dimension_numbers<[1], [1], [0], [0], [0, 0, 1, 0], [], []>} : vector<64x32xf32>, vector<64x32xf32>, vector<64x64xf32> -> vector<64x64xf32>
    %76 = arith.addf %75, %2 : vector<64x64xf32>
    %cst_49 = arith.constant dense<0xFF800000> : vector<64xf32>
    %77 = vector.multi_reduction <maximumf>, %76, %cst_49 [1] : vector<64x64xf32> to vector<64xf32>
    %78 = vector.shape_cast %77 : vector<64xf32> to vector<64x1xf32>
    %79 = vector.broadcast %78 : vector<64x1xf32> to vector<64x64xf32>
    %80 = arith.subf %76, %79 : vector<64x64xf32>
    %81 = math.exp %80 : vector<64x64xf32>
    %cst_50 = arith.constant dense<0.000000e+00> : vector<64xf32>
    %82 = vector.multi_reduction <add>, %81, %cst_50 [1] : vector<64x64xf32> to vector<64xf32>
    %83 = vector.shape_cast %82 : vector<64xf32> to vector<64x1xf32>
    %84 = tpu.reciprocal %83 {approx = true} : vector<64x1xf32> -> vector<64x1xf32>
    %85 = vector.broadcast %84 : vector<64x1xf32> to vector<64x64xf32>
    %86 = arith.mulf %81, %85 : vector<64x64xf32>
    %87 = vector.broadcast %72 : vector<1x32xf32> to vector<64x32xf32>
    %88 = arith.mulf %49, %87 : vector<64x32xf32>
    %cst_51 = arith.constant dense<0.000000e+00> : vector<64x32xf32>
    %89 = tpu.matmul %86, %88, %cst_51 {dimension_numbers = #tpu.dot_dimension_numbers<[1], [0], [0], [1], [0, 0, 1, 1], [], []>} : vector<64x64xf32>, vector<64x32xf32>, vector<64x32xf32> -> vector<64x32xf32>
    %90 = arith.addf %70, %89 : vector<64x32xf32>
    %c2 = arith.constant 2 : index
    %c0_52 = arith.constant 0 : index
    %c0_53 = arith.constant 0 : index
    %91 = vector.load %arg7[%c2, %c0_52, %c0_53] : memref<4x1x32xf32, #tpu.memory_space<vmem>>, vector<1x1x32xf32>
    %92 = vector.shape_cast %91 : vector<1x1x32xf32> to vector<1x32xf32>
    %93 = vector.broadcast %92 : vector<1x32xf32> to vector<64x32xf32>
    %94 = arith.mulf %42, %93 : vector<64x32xf32>
    %cst_54 = arith.constant dense<0.000000e+00> : vector<64x64xf32>
    %95 = tpu.matmul %35, %94, %cst_54 {dimension_numbers = #tpu.dot_dimension_numbers<[1], [1], [0], [0], [0, 0, 1, 0], [], []>} : vector<64x32xf32>, vector<64x32xf32>, vector<64x64xf32> -> vector<64x64xf32>
    %96 = arith.addf %95, %2 : vector<64x64xf32>
    %cst_55 = arith.constant dense<0xFF800000> : vector<64xf32>
    %97 = vector.multi_reduction <maximumf>, %96, %cst_55 [1] : vector<64x64xf32> to vector<64xf32>
    %98 = vector.shape_cast %97 : vector<64xf32> to vector<64x1xf32>
    %99 = vector.broadcast %98 : vector<64x1xf32> to vector<64x64xf32>
    %100 = arith.subf %96, %99 : vector<64x64xf32>
    %101 = math.exp %100 : vector<64x64xf32>
    %cst_56 = arith.constant dense<0.000000e+00> : vector<64xf32>
    %102 = vector.multi_reduction <add>, %101, %cst_56 [1] : vector<64x64xf32> to vector<64xf32>
    %103 = vector.shape_cast %102 : vector<64xf32> to vector<64x1xf32>
    %104 = tpu.reciprocal %103 {approx = true} : vector<64x1xf32> -> vector<64x1xf32>
    %105 = vector.broadcast %104 : vector<64x1xf32> to vector<64x64xf32>
    %106 = arith.mulf %101, %105 : vector<64x64xf32>
    %107 = vector.broadcast %92 : vector<1x32xf32> to vector<64x32xf32>
    %108 = arith.mulf %49, %107 : vector<64x32xf32>
    %cst_57 = arith.constant dense<0.000000e+00> : vector<64x32xf32>
    %109 = tpu.matmul %106, %108, %cst_57 {dimension_numbers = #tpu.dot_dimension_numbers<[1], [0], [0], [1], [0, 0, 1, 1], [], []>} : vector<64x64xf32>, vector<64x32xf32>, vector<64x32xf32> -> vector<64x32xf32>
    %110 = arith.addf %90, %109 : vector<64x32xf32>
    %c3 = arith.constant 3 : index
    %c0_58 = arith.constant 0 : index
    %c0_59 = arith.constant 0 : index
    %111 = vector.load %arg7[%c3, %c0_58, %c0_59] : memref<4x1x32xf32, #tpu.memory_space<vmem>>, vector<1x1x32xf32>
    %112 = vector.shape_cast %111 : vector<1x1x32xf32> to vector<1x32xf32>
    %113 = vector.broadcast %112 : vector<1x32xf32> to vector<64x32xf32>
    %114 = arith.mulf %42, %113 : vector<64x32xf32>
    %cst_60 = arith.constant dense<0.000000e+00> : vector<64x64xf32>
    %115 = tpu.matmul %35, %114, %cst_60 {dimension_numbers = #tpu.dot_dimension_numbers<[1], [1], [0], [0], [0, 0, 1, 0], [], []>} : vector<64x32xf32>, vector<64x32xf32>, vector<64x64xf32> -> vector<64x64xf32>
    %116 = arith.addf %115, %2 : vector<64x64xf32>
    %cst_61 = arith.constant dense<0xFF800000> : vector<64xf32>
    %117 = vector.multi_reduction <maximumf>, %116, %cst_61 [1] : vector<64x64xf32> to vector<64xf32>
    %118 = vector.shape_cast %117 : vector<64xf32> to vector<64x1xf32>
    %119 = vector.broadcast %118 : vector<64x1xf32> to vector<64x64xf32>
    %120 = arith.subf %116, %119 : vector<64x64xf32>
    %121 = math.exp %120 : vector<64x64xf32>
    %cst_62 = arith.constant dense<0.000000e+00> : vector<64xf32>
    %122 = vector.multi_reduction <add>, %121, %cst_62 [1] : vector<64x64xf32> to vector<64xf32>
    %123 = vector.shape_cast %122 : vector<64xf32> to vector<64x1xf32>
    %124 = tpu.reciprocal %123 {approx = true} : vector<64x1xf32> -> vector<64x1xf32>
    %125 = vector.broadcast %124 : vector<64x1xf32> to vector<64x64xf32>
    %126 = arith.mulf %121, %125 : vector<64x64xf32>
    %127 = vector.broadcast %112 : vector<1x32xf32> to vector<64x32xf32>
    %128 = arith.mulf %49, %127 : vector<64x32xf32>
    %cst_63 = arith.constant dense<0.000000e+00> : vector<64x32xf32>
    %129 = tpu.matmul %126, %128, %cst_63 {dimension_numbers = #tpu.dot_dimension_numbers<[1], [0], [0], [1], [0, 0, 1, 1], [], []>} : vector<64x64xf32>, vector<64x32xf32>, vector<64x32xf32> -> vector<64x32xf32>
    %130 = arith.addf %110, %129 : vector<64x32xf32>
    %c0_64 = arith.constant 0 : index
    %c0_65 = arith.constant 0 : index
    %c0_66 = arith.constant 0 : index
    %131 = vector.load %arg14[%c0_64, %c0_65, %c0_66] : memref<2x32x32xf32, #tpu.memory_space<vmem>>, vector<1x32x32xf32>
    %132 = vector.shape_cast %131 : vector<1x32x32xf32> to vector<32x32xf32>
    %cst_67 = arith.constant dense<0.000000e+00> : vector<64x32xf32>
    %133 = tpu.matmul %130, %132, %cst_67 {dimension_numbers = #tpu.dot_dimension_numbers<[1], [0], [0], [1], [0, 0, 1, 1], [], []>} : vector<64x32xf32>, vector<32x32xf32>, vector<64x32xf32> -> vector<64x32xf32>
    %c0_68 = arith.constant 0 : index
    %c0_69 = arith.constant 0 : index
    %c0_70 = arith.constant 0 : index
    %134 = vector.load %arg15[%c0_68, %c0_69, %c0_70] : memref<2x1x32xf32, #tpu.memory_space<vmem>>, vector<1x1x32xf32>
    %135 = vector.shape_cast %134 : vector<1x1x32xf32> to vector<1x32xf32>
    %136 = vector.broadcast %135 : vector<1x32xf32> to vector<64x32xf32>
    %137 = arith.addf %133, %136 : vector<64x32xf32>
    %c0_71 = arith.constant 0 : index
    %c0_72 = arith.constant 0 : index
    %138 = vector.load %arg6[%c0_71, %c0_72] : memref<64x64xf32, #tpu.memory_space<vmem>>, vector<64x64xf32>
    %cst_73 = arith.constant dense<0.000000e+00> : vector<64x32xf32>
    %139 = tpu.matmul %138, %137, %cst_73 {dimension_numbers = #tpu.dot_dimension_numbers<[1], [0], [0], [1], [0, 0, 1, 1], [], []>} : vector<64x64xf32>, vector<64x32xf32>, vector<64x32xf32> -> vector<64x32xf32>
    %cst_74 = arith.constant dense<0.000000e+00> : vector<64x32xf32>
    %140 = tpu.matmul %1, %139, %cst_74 {dimension_numbers = #tpu.dot_dimension_numbers<[1], [0], [0], [1], [0, 0, 1, 1], [], []>} : vector<64x64xf32>, vector<64x32xf32>, vector<64x32xf32> -> vector<64x32xf32>
    %cst_75 = arith.constant dense<0.000000e+00> : vector<64xf32>
    %141 = vector.multi_reduction <add>, %140, %cst_75 [1] : vector<64x32xf32> to vector<64xf32>
    %142 = vector.shape_cast %141 : vector<64xf32> to vector<64x1xf32>
    %cst_76 = arith.constant 3.906250e-03 : f32
    %143 = vector.broadcast %cst_76 : f32 to vector<64x1xf32>
    %144 = arith.mulf %142, %143 : vector<64x1xf32>
    %145 = vector.broadcast %144 : vector<64x1xf32> to vector<64x32xf32>
    %146 = arith.subf %139, %145 : vector<64x32xf32>
    %147 = arith.mulf %146, %146 : vector<64x32xf32>
    %cst_77 = arith.constant dense<0.000000e+00> : vector<64x32xf32>
    %148 = tpu.matmul %1, %147, %cst_77 {dimension_numbers = #tpu.dot_dimension_numbers<[1], [0], [0], [1], [0, 0, 1, 1], [], []>} : vector<64x64xf32>, vector<64x32xf32>, vector<64x32xf32> -> vector<64x32xf32>
    %cst_78 = arith.constant dense<0.000000e+00> : vector<64xf32>
    %149 = vector.multi_reduction <add>, %148, %cst_78 [1] : vector<64x32xf32> to vector<64xf32>
    %150 = vector.shape_cast %149 : vector<64xf32> to vector<64x1xf32>
    %cst_79 = arith.constant 3.906250e-03 : f32
    %151 = vector.broadcast %cst_79 : f32 to vector<64x1xf32>
    %152 = arith.mulf %150, %151 : vector<64x1xf32>
    %cst_80 = arith.constant 9.99999974E-6 : f32
    %153 = vector.broadcast %cst_80 : f32 to vector<64x1xf32>
    %154 = arith.addf %152, %153 : vector<64x1xf32>
    %155 = math.rsqrt %154 : vector<64x1xf32>
    %156 = vector.broadcast %155 : vector<64x1xf32> to vector<64x32xf32>
    %157 = arith.mulf %146, %156 : vector<64x32xf32>
    %c1_81 = arith.constant 1 : index
    %c0_82 = arith.constant 0 : index
    %c0_83 = arith.constant 0 : index
    %158 = vector.load %arg2[%c1_81, %c0_82, %c0_83] : memref<2x64x1xf32, #tpu.memory_space<vmem>>, vector<1x64x1xf32>
    %159 = vector.shape_cast %158 : vector<1x64x1xf32> to vector<64x1xf32>
    %160 = vector.broadcast %159 : vector<64x1xf32> to vector<64x32xf32>
    %161 = arith.mulf %157, %160 : vector<64x32xf32>
    %c1_84 = arith.constant 1 : index
    %c0_85 = arith.constant 0 : index
    %c0_86 = arith.constant 0 : index
    %162 = vector.load %arg3[%c1_84, %c0_85, %c0_86] : memref<2x64x1xf32, #tpu.memory_space<vmem>>, vector<1x64x1xf32>
    %163 = vector.shape_cast %162 : vector<1x64x1xf32> to vector<64x1xf32>
    %164 = vector.broadcast %163 : vector<64x1xf32> to vector<64x32xf32>
    %165 = arith.addf %161, %164 : vector<64x32xf32>
    %c1_87 = arith.constant 1 : index
    %c0_88 = arith.constant 0 : index
    %c0_89 = arith.constant 0 : index
    %166 = vector.load %arg8[%c1_87, %c0_88, %c0_89] : memref<2x32x32xf32, #tpu.memory_space<vmem>>, vector<1x32x32xf32>
    %167 = vector.shape_cast %166 : vector<1x32x32xf32> to vector<32x32xf32>
    %cst_90 = arith.constant dense<0.000000e+00> : vector<64x32xf32>
    %168 = tpu.matmul %165, %167, %cst_90 {dimension_numbers = #tpu.dot_dimension_numbers<[1], [0], [0], [1], [0, 0, 1, 1], [], []>} : vector<64x32xf32>, vector<32x32xf32>, vector<64x32xf32> -> vector<64x32xf32>
    %c1_91 = arith.constant 1 : index
    %c0_92 = arith.constant 0 : index
    %c0_93 = arith.constant 0 : index
    %169 = vector.load %arg11[%c1_91, %c0_92, %c0_93] : memref<2x1x32xf32, #tpu.memory_space<vmem>>, vector<1x1x32xf32>
    %170 = vector.shape_cast %169 : vector<1x1x32xf32> to vector<1x32xf32>
    %171 = vector.broadcast %170 : vector<1x32xf32> to vector<64x32xf32>
    %172 = arith.addf %168, %171 : vector<64x32xf32>
    %c1_94 = arith.constant 1 : index
    %c0_95 = arith.constant 0 : index
    %c0_96 = arith.constant 0 : index
    %173 = vector.load %arg9[%c1_94, %c0_95, %c0_96] : memref<2x32x32xf32, #tpu.memory_space<vmem>>, vector<1x32x32xf32>
    %174 = vector.shape_cast %173 : vector<1x32x32xf32> to vector<32x32xf32>
    %cst_97 = arith.constant dense<0.000000e+00> : vector<64x32xf32>
    %175 = tpu.matmul %165, %174, %cst_97 {dimension_numbers = #tpu.dot_dimension_numbers<[1], [0], [0], [1], [0, 0, 1, 1], [], []>} : vector<64x32xf32>, vector<32x32xf32>, vector<64x32xf32> -> vector<64x32xf32>
    %c1_98 = arith.constant 1 : index
    %c0_99 = arith.constant 0 : index
    %c0_100 = arith.constant 0 : index
    %176 = vector.load %arg12[%c1_98, %c0_99, %c0_100] : memref<2x1x32xf32, #tpu.memory_space<vmem>>, vector<1x1x32xf32>
    %177 = vector.shape_cast %176 : vector<1x1x32xf32> to vector<1x32xf32>
    %178 = vector.broadcast %177 : vector<1x32xf32> to vector<64x32xf32>
    %179 = arith.addf %175, %178 : vector<64x32xf32>
    %c1_101 = arith.constant 1 : index
    %c0_102 = arith.constant 0 : index
    %c0_103 = arith.constant 0 : index
    %180 = vector.load %arg10[%c1_101, %c0_102, %c0_103] : memref<2x32x32xf32, #tpu.memory_space<vmem>>, vector<1x32x32xf32>
    %181 = vector.shape_cast %180 : vector<1x32x32xf32> to vector<32x32xf32>
    %cst_104 = arith.constant dense<0.000000e+00> : vector<64x32xf32>
    %182 = tpu.matmul %165, %181, %cst_104 {dimension_numbers = #tpu.dot_dimension_numbers<[1], [0], [0], [1], [0, 0, 1, 1], [], []>} : vector<64x32xf32>, vector<32x32xf32>, vector<64x32xf32> -> vector<64x32xf32>
    %c1_105 = arith.constant 1 : index
    %c0_106 = arith.constant 0 : index
    %c0_107 = arith.constant 0 : index
    %183 = vector.load %arg13[%c1_105, %c0_106, %c0_107] : memref<2x1x32xf32, #tpu.memory_space<vmem>>, vector<1x1x32xf32>
    %184 = vector.shape_cast %183 : vector<1x1x32xf32> to vector<1x32xf32>
    %185 = vector.broadcast %184 : vector<1x32xf32> to vector<64x32xf32>
    %186 = arith.addf %182, %185 : vector<64x32xf32>
    %cst_108 = arith.constant 0.000000e+00 : f32
    %187 = vector.broadcast %cst_108 : f32 to vector<64x32xf32>
    %c0_109 = arith.constant 0 : index
    %c0_110 = arith.constant 0 : index
    %c0_111 = arith.constant 0 : index
    %188 = vector.load %arg7[%c0_109, %c0_110, %c0_111] : memref<4x1x32xf32, #tpu.memory_space<vmem>>, vector<1x1x32xf32>
    %189 = vector.shape_cast %188 : vector<1x1x32xf32> to vector<1x32xf32>
    %190 = vector.broadcast %189 : vector<1x32xf32> to vector<64x32xf32>
    %191 = arith.mulf %179, %190 : vector<64x32xf32>
    %cst_112 = arith.constant dense<0.000000e+00> : vector<64x64xf32>
    %192 = tpu.matmul %172, %191, %cst_112 {dimension_numbers = #tpu.dot_dimension_numbers<[1], [1], [0], [0], [0, 0, 1, 0], [], []>} : vector<64x32xf32>, vector<64x32xf32>, vector<64x64xf32> -> vector<64x64xf32>
    %193 = arith.addf %192, %2 : vector<64x64xf32>
    %cst_113 = arith.constant dense<0xFF800000> : vector<64xf32>
    %194 = vector.multi_reduction <maximumf>, %193, %cst_113 [1] : vector<64x64xf32> to vector<64xf32>
    %195 = vector.shape_cast %194 : vector<64xf32> to vector<64x1xf32>
    %196 = vector.broadcast %195 : vector<64x1xf32> to vector<64x64xf32>
    %197 = arith.subf %193, %196 : vector<64x64xf32>
    %198 = math.exp %197 : vector<64x64xf32>
    %cst_114 = arith.constant dense<0.000000e+00> : vector<64xf32>
    %199 = vector.multi_reduction <add>, %198, %cst_114 [1] : vector<64x64xf32> to vector<64xf32>
    %200 = vector.shape_cast %199 : vector<64xf32> to vector<64x1xf32>
    %201 = tpu.reciprocal %200 {approx = true} : vector<64x1xf32> -> vector<64x1xf32>
    %202 = vector.broadcast %201 : vector<64x1xf32> to vector<64x64xf32>
    %203 = arith.mulf %198, %202 : vector<64x64xf32>
    %204 = vector.broadcast %189 : vector<1x32xf32> to vector<64x32xf32>
    %205 = arith.mulf %186, %204 : vector<64x32xf32>
    %cst_115 = arith.constant dense<0.000000e+00> : vector<64x32xf32>
    %206 = tpu.matmul %203, %205, %cst_115 {dimension_numbers = #tpu.dot_dimension_numbers<[1], [0], [0], [1], [0, 0, 1, 1], [], []>} : vector<64x64xf32>, vector<64x32xf32>, vector<64x32xf32> -> vector<64x32xf32>
    %207 = arith.addf %187, %206 : vector<64x32xf32>
    %c1_116 = arith.constant 1 : index
    %c0_117 = arith.constant 0 : index
    %c0_118 = arith.constant 0 : index
    %208 = vector.load %arg7[%c1_116, %c0_117, %c0_118] : memref<4x1x32xf32, #tpu.memory_space<vmem>>, vector<1x1x32xf32>
    %209 = vector.shape_cast %208 : vector<1x1x32xf32> to vector<1x32xf32>
    %210 = vector.broadcast %209 : vector<1x32xf32> to vector<64x32xf32>
    %211 = arith.mulf %179, %210 : vector<64x32xf32>
    %cst_119 = arith.constant dense<0.000000e+00> : vector<64x64xf32>
    %212 = tpu.matmul %172, %211, %cst_119 {dimension_numbers = #tpu.dot_dimension_numbers<[1], [1], [0], [0], [0, 0, 1, 0], [], []>} : vector<64x32xf32>, vector<64x32xf32>, vector<64x64xf32> -> vector<64x64xf32>
    %213 = arith.addf %212, %2 : vector<64x64xf32>
    %cst_120 = arith.constant dense<0xFF800000> : vector<64xf32>
    %214 = vector.multi_reduction <maximumf>, %213, %cst_120 [1] : vector<64x64xf32> to vector<64xf32>
    %215 = vector.shape_cast %214 : vector<64xf32> to vector<64x1xf32>
    %216 = vector.broadcast %215 : vector<64x1xf32> to vector<64x64xf32>
    %217 = arith.subf %213, %216 : vector<64x64xf32>
    %218 = math.exp %217 : vector<64x64xf32>
    %cst_121 = arith.constant dense<0.000000e+00> : vector<64xf32>
    %219 = vector.multi_reduction <add>, %218, %cst_121 [1] : vector<64x64xf32> to vector<64xf32>
    %220 = vector.shape_cast %219 : vector<64xf32> to vector<64x1xf32>
    %221 = tpu.reciprocal %220 {approx = true} : vector<64x1xf32> -> vector<64x1xf32>
    %222 = vector.broadcast %221 : vector<64x1xf32> to vector<64x64xf32>
    %223 = arith.mulf %218, %222 : vector<64x64xf32>
    %224 = vector.broadcast %209 : vector<1x32xf32> to vector<64x32xf32>
    %225 = arith.mulf %186, %224 : vector<64x32xf32>
    %cst_122 = arith.constant dense<0.000000e+00> : vector<64x32xf32>
    %226 = tpu.matmul %223, %225, %cst_122 {dimension_numbers = #tpu.dot_dimension_numbers<[1], [0], [0], [1], [0, 0, 1, 1], [], []>} : vector<64x64xf32>, vector<64x32xf32>, vector<64x32xf32> -> vector<64x32xf32>
    %227 = arith.addf %207, %226 : vector<64x32xf32>
    %c2_123 = arith.constant 2 : index
    %c0_124 = arith.constant 0 : index
    %c0_125 = arith.constant 0 : index
    %228 = vector.load %arg7[%c2_123, %c0_124, %c0_125] : memref<4x1x32xf32, #tpu.memory_space<vmem>>, vector<1x1x32xf32>
    %229 = vector.shape_cast %228 : vector<1x1x32xf32> to vector<1x32xf32>
    %230 = vector.broadcast %229 : vector<1x32xf32> to vector<64x32xf32>
    %231 = arith.mulf %179, %230 : vector<64x32xf32>
    %cst_126 = arith.constant dense<0.000000e+00> : vector<64x64xf32>
    %232 = tpu.matmul %172, %231, %cst_126 {dimension_numbers = #tpu.dot_dimension_numbers<[1], [1], [0], [0], [0, 0, 1, 0], [], []>} : vector<64x32xf32>, vector<64x32xf32>, vector<64x64xf32> -> vector<64x64xf32>
    %233 = arith.addf %232, %2 : vector<64x64xf32>
    %cst_127 = arith.constant dense<0xFF800000> : vector<64xf32>
    %234 = vector.multi_reduction <maximumf>, %233, %cst_127 [1] : vector<64x64xf32> to vector<64xf32>
    %235 = vector.shape_cast %234 : vector<64xf32> to vector<64x1xf32>
    %236 = vector.broadcast %235 : vector<64x1xf32> to vector<64x64xf32>
    %237 = arith.subf %233, %236 : vector<64x64xf32>
    %238 = math.exp %237 : vector<64x64xf32>
    %cst_128 = arith.constant dense<0.000000e+00> : vector<64xf32>
    %239 = vector.multi_reduction <add>, %238, %cst_128 [1] : vector<64x64xf32> to vector<64xf32>
    %240 = vector.shape_cast %239 : vector<64xf32> to vector<64x1xf32>
    %241 = tpu.reciprocal %240 {approx = true} : vector<64x1xf32> -> vector<64x1xf32>
    %242 = vector.broadcast %241 : vector<64x1xf32> to vector<64x64xf32>
    %243 = arith.mulf %238, %242 : vector<64x64xf32>
    %244 = vector.broadcast %229 : vector<1x32xf32> to vector<64x32xf32>
    %245 = arith.mulf %186, %244 : vector<64x32xf32>
    %cst_129 = arith.constant dense<0.000000e+00> : vector<64x32xf32>
    %246 = tpu.matmul %243, %245, %cst_129 {dimension_numbers = #tpu.dot_dimension_numbers<[1], [0], [0], [1], [0, 0, 1, 1], [], []>} : vector<64x64xf32>, vector<64x32xf32>, vector<64x32xf32> -> vector<64x32xf32>
    %247 = arith.addf %227, %246 : vector<64x32xf32>
    %c3_130 = arith.constant 3 : index
    %c0_131 = arith.constant 0 : index
    %c0_132 = arith.constant 0 : index
    %248 = vector.load %arg7[%c3_130, %c0_131, %c0_132] : memref<4x1x32xf32, #tpu.memory_space<vmem>>, vector<1x1x32xf32>
    %249 = vector.shape_cast %248 : vector<1x1x32xf32> to vector<1x32xf32>
    %250 = vector.broadcast %249 : vector<1x32xf32> to vector<64x32xf32>
    %251 = arith.mulf %179, %250 : vector<64x32xf32>
    %cst_133 = arith.constant dense<0.000000e+00> : vector<64x64xf32>
    %252 = tpu.matmul %172, %251, %cst_133 {dimension_numbers = #tpu.dot_dimension_numbers<[1], [1], [0], [0], [0, 0, 1, 0], [], []>} : vector<64x32xf32>, vector<64x32xf32>, vector<64x64xf32> -> vector<64x64xf32>
    %253 = arith.addf %252, %2 : vector<64x64xf32>
    %cst_134 = arith.constant dense<0xFF800000> : vector<64xf32>
    %254 = vector.multi_reduction <maximumf>, %253, %cst_134 [1] : vector<64x64xf32> to vector<64xf32>
    %255 = vector.shape_cast %254 : vector<64xf32> to vector<64x1xf32>
    %256 = vector.broadcast %255 : vector<64x1xf32> to vector<64x64xf32>
    %257 = arith.subf %253, %256 : vector<64x64xf32>
    %258 = math.exp %257 : vector<64x64xf32>
    %cst_135 = arith.constant dense<0.000000e+00> : vector<64xf32>
    %259 = vector.multi_reduction <add>, %258, %cst_135 [1] : vector<64x64xf32> to vector<64xf32>
    %260 = vector.shape_cast %259 : vector<64xf32> to vector<64x1xf32>
    %261 = tpu.reciprocal %260 {approx = true} : vector<64x1xf32> -> vector<64x1xf32>
    %262 = vector.broadcast %261 : vector<64x1xf32> to vector<64x64xf32>
    %263 = arith.mulf %258, %262 : vector<64x64xf32>
    %264 = vector.broadcast %249 : vector<1x32xf32> to vector<64x32xf32>
    %265 = arith.mulf %186, %264 : vector<64x32xf32>
    %cst_136 = arith.constant dense<0.000000e+00> : vector<64x32xf32>
    %266 = tpu.matmul %263, %265, %cst_136 {dimension_numbers = #tpu.dot_dimension_numbers<[1], [0], [0], [1], [0, 0, 1, 1], [], []>} : vector<64x64xf32>, vector<64x32xf32>, vector<64x32xf32> -> vector<64x32xf32>
    %267 = arith.addf %247, %266 : vector<64x32xf32>
    %c1_137 = arith.constant 1 : index
    %c0_138 = arith.constant 0 : index
    %c0_139 = arith.constant 0 : index
    %268 = vector.load %arg14[%c1_137, %c0_138, %c0_139] : memref<2x32x32xf32, #tpu.memory_space<vmem>>, vector<1x32x32xf32>
    %269 = vector.shape_cast %268 : vector<1x32x32xf32> to vector<32x32xf32>
    %cst_140 = arith.constant dense<0.000000e+00> : vector<64x32xf32>
    %270 = tpu.matmul %267, %269, %cst_140 {dimension_numbers = #tpu.dot_dimension_numbers<[1], [0], [0], [1], [0, 0, 1, 1], [], []>} : vector<64x32xf32>, vector<32x32xf32>, vector<64x32xf32> -> vector<64x32xf32>
    %c1_141 = arith.constant 1 : index
    %c0_142 = arith.constant 0 : index
    %c0_143 = arith.constant 0 : index
    %271 = vector.load %arg15[%c1_141, %c0_142, %c0_143] : memref<2x1x32xf32, #tpu.memory_space<vmem>>, vector<1x1x32xf32>
    %272 = vector.shape_cast %271 : vector<1x1x32xf32> to vector<1x32xf32>
    %273 = vector.broadcast %272 : vector<1x32xf32> to vector<64x32xf32>
    %274 = arith.addf %270, %273 : vector<64x32xf32>
    %c0_144 = arith.constant 0 : index
    %c0_145 = arith.constant 0 : index
    %275 = vector.load %arg16[%c0_144, %c0_145] : memref<32x16xf32, #tpu.memory_space<vmem>>, vector<32x16xf32>
    %cst_146 = arith.constant dense<0.000000e+00> : vector<64x16xf32>
    %276 = tpu.matmul %274, %275, %cst_146 {dimension_numbers = #tpu.dot_dimension_numbers<[1], [0], [0], [1], [0, 0, 1, 1], [], []>} : vector<64x32xf32>, vector<32x16xf32>, vector<64x16xf32> -> vector<64x16xf32>
    %c0_147 = arith.constant 0 : index
    %c0_148 = arith.constant 0 : index
    %277 = vector.load %arg17[%c0_147, %c0_148] : memref<1x16xf32, #tpu.memory_space<vmem>>, vector<1x16xf32>
    %278 = vector.broadcast %277 : vector<1x16xf32> to vector<64x16xf32>
    %279 = arith.addf %276, %278 : vector<64x16xf32>
    %c0_149 = arith.constant 0 : index
    %c0_150 = arith.constant 0 : index
    %280 = vector.load %arg18[%c0_149, %c0_150] : memref<64x16xf32, #tpu.memory_space<vmem>>, vector<64x16xf32>
    tpu.vector_store %arg18[%c0_149, %c0_150], %279 {strides = array<i32>} : memref<64x16xf32, #tpu.memory_space<vmem>>, vector<64x16xf32>,
    return
  }
  func.func @transform_0(%arg0: i32) -> (i32, i32) {
    %c0_i32 = arith.constant 0 : i32
    %c0_i32_0 = arith.constant 0 : i32
    %c0_i32_1 = arith.constant 0 : i32
    return %c0_i32, %c0_i32_0 : i32, i32
  }
  func.func @transform_1(%arg0: i32) -> (i32, i32, i32) {
    %c0_i32 = arith.constant 0 : i32
    %c0_i32_0 = arith.constant 0 : i32
    %c0_i32_1 = arith.constant 0 : i32
    %c0_i32_2 = arith.constant 0 : i32
    return %c0_i32, %c0_i32_0, %c0_i32_1 : i32, i32, i32
  }
  func.func @transform_2(%arg0: i32) -> (i32, i32, i32) {
    %c0_i32 = arith.constant 0 : i32
    %c0_i32_0 = arith.constant 0 : i32
    %c0_i32_1 = arith.constant 0 : i32
    %c0_i32_2 = arith.constant 0 : i32
    return %c0_i32, %c0_i32_0, %c0_i32_1 : i32, i32, i32
  }
  func.func @transform_3(%arg0: i32) -> (i32, i32) {
    %c0_i32 = arith.constant 0 : i32
    %c0_i32_0 = arith.constant 0 : i32
    %c0_i32_1 = arith.constant 0 : i32
    return %c0_i32, %c0_i32_0 : i32, i32
  }
  func.func @transform_4(%arg0: i32) -> (i32, i32) {
    %c0_i32 = arith.constant 0 : i32
    %c0_i32_0 = arith.constant 0 : i32
    %c0_i32_1 = arith.constant 0 : i32
    return %c0_i32, %c0_i32_0 : i32, i32
  }
  func.func @transform_5(%arg0: i32) -> (i32, i32) {
    %c0_i32 = arith.constant 0 : i32
    %c0_i32_0 = arith.constant 0 : i32
    %c0_i32_1 = arith.constant 0 : i32
    return %c0_i32, %c0_i32_0 : i32, i32
  }
  func.func @transform_6(%arg0: i32) -> (i32, i32, i32) {
    %c0_i32 = arith.constant 0 : i32
    %c0_i32_0 = arith.constant 0 : i32
    %c0_i32_1 = arith.constant 0 : i32
    %c0_i32_2 = arith.constant 0 : i32
    return %c0_i32, %c0_i32_0, %c0_i32_1 : i32, i32, i32
  }
  func.func @transform_7(%arg0: i32) -> (i32, i32, i32) {
    %c0_i32 = arith.constant 0 : i32
    %c0_i32_0 = arith.constant 0 : i32
    %c0_i32_1 = arith.constant 0 : i32
    %c0_i32_2 = arith.constant 0 : i32
    return %c0_i32, %c0_i32_0, %c0_i32_1 : i32, i32, i32
  }
  func.func @transform_8(%arg0: i32) -> (i32, i32, i32) {
    %c0_i32 = arith.constant 0 : i32
    %c0_i32_0 = arith.constant 0 : i32
    %c0_i32_1 = arith.constant 0 : i32
    %c0_i32_2 = arith.constant 0 : i32
    return %c0_i32, %c0_i32_0, %c0_i32_1 : i32, i32, i32
  }
  func.func @transform_9(%arg0: i32) -> (i32, i32, i32) {
    %c0_i32 = arith.constant 0 : i32
    %c0_i32_0 = arith.constant 0 : i32
    %c0_i32_1 = arith.constant 0 : i32
    %c0_i32_2 = arith.constant 0 : i32
    return %c0_i32, %c0_i32_0, %c0_i32_1 : i32, i32, i32
  }
  func.func @transform_10(%arg0: i32) -> (i32, i32, i32) {
    %c0_i32 = arith.constant 0 : i32
    %c0_i32_0 = arith.constant 0 : i32
    %c0_i32_1 = arith.constant 0 : i32
    %c0_i32_2 = arith.constant 0 : i32
    return %c0_i32, %c0_i32_0, %c0_i32_1 : i32, i32, i32
  }
  func.func @transform_11(%arg0: i32) -> (i32, i32, i32) {
    %c0_i32 = arith.constant 0 : i32
    %c0_i32_0 = arith.constant 0 : i32
    %c0_i32_1 = arith.constant 0 : i32
    %c0_i32_2 = arith.constant 0 : i32
    return %c0_i32, %c0_i32_0, %c0_i32_1 : i32, i32, i32
  }
  func.func @transform_12(%arg0: i32) -> (i32, i32, i32) {
    %c0_i32 = arith.constant 0 : i32
    %c0_i32_0 = arith.constant 0 : i32
    %c0_i32_1 = arith.constant 0 : i32
    %c0_i32_2 = arith.constant 0 : i32
    return %c0_i32, %c0_i32_0, %c0_i32_1 : i32, i32, i32
  }
  func.func @transform_13(%arg0: i32) -> (i32, i32, i32) {
    %c0_i32 = arith.constant 0 : i32
    %c0_i32_0 = arith.constant 0 : i32
    %c0_i32_1 = arith.constant 0 : i32
    %c0_i32_2 = arith.constant 0 : i32
    return %c0_i32, %c0_i32_0, %c0_i32_1 : i32, i32, i32
  }
  func.func @transform_14(%arg0: i32) -> (i32, i32, i32) {
    %c0_i32 = arith.constant 0 : i32
    %c0_i32_0 = arith.constant 0 : i32
    %c0_i32_1 = arith.constant 0 : i32
    %c0_i32_2 = arith.constant 0 : i32
    return %c0_i32, %c0_i32_0, %c0_i32_1 : i32, i32, i32
  }
  func.func @transform_15(%arg0: i32) -> (i32, i32) {
    %c0_i32 = arith.constant 0 : i32
    %c0_i32_0 = arith.constant 0 : i32
    %c0_i32_1 = arith.constant 0 : i32
    return %c0_i32, %c0_i32_0 : i32, i32
  }
  func.func @transform_16(%arg0: i32) -> (i32, i32) {
    %c0_i32 = arith.constant 0 : i32
    %c0_i32_0 = arith.constant 0 : i32
    %c0_i32_1 = arith.constant 0 : i32
    return %c0_i32, %c0_i32_0 : i32, i32
  }
  func.func @transform_17(%arg0: i32) -> (i32, i32) {
    %c0_i32 = arith.constant 0 : i32
    %c0_i32_0 = arith.constant 0 : i32
    %c0_i32_1 = arith.constant 0 : i32
    return %c0_i32, %c0_i32_0 : i32, i32
  }
}

</mosaic_0001>

<llo_original>
// kernel: timings_transformer_forward.1
$region0: #{timings_transformer_forward.1}
  #allocation0 [shape = 'u32[]', space=smem, size = 0x4, offset = 0x4, fixed_abs, tag = 'smem constant byte address 0x4 - core index']
  #allocation1 [shape = 'u32[144,128]{1,0:T(1,128)}', space=vmem, size = 0x12000, scoped, tag = 'internal scratch']
  %s0 = inlined_call_operand.vmem [shape: f32[64,32], index: 0, kind: input, shape index: {}]
  %s1 = inlined_call_operand.vmem [shape: f32[2,64,1], index: 1, kind: input, shape index: {}]
  %s2 = inlined_call_operand.vmem [shape: f32[2,64,1], index: 2, kind: input, shape index: {}]
  %s3 = inlined_call_operand.vmem [shape: f32[64,64], index: 3, kind: input, shape index: {}]
  %s4 = inlined_call_operand.vmem [shape: f32[64,64], index: 4, kind: input, shape index: {}]
  %s5 = inlined_call_operand.vmem [shape: f32[64,64], index: 5, kind: input, shape index: {}]
  %s6 = inlined_call_operand.vmem [shape: f32[4,1,32], index: 6, kind: input, shape index: {}]
  %s7 = inlined_call_operand.vmem [shape: f32[2,32,32], index: 7, kind: input, shape index: {}]
  %s8 = inlined_call_operand.vmem [shape: f32[2,32,32], index: 8, kind: input, shape index: {}]
  %s9 = inlined_call_operand.vmem [shape: f32[2,32,32], index: 9, kind: input, shape index: {}]
  %s10 = inlined_call_operand.vmem [shape: f32[2,1,32], index: 10, kind: input, shape index: {}]
  %s11 = inlined_call_operand.vmem [shape: f32[2,1,32], index: 11, kind: input, shape index: {}]
  %s12 = inlined_call_operand.vmem [shape: f32[2,1,32], index: 12, kind: input, shape index: {}]
  %s13 = inlined_call_operand.vmem [shape: f32[2,32,32], index: 13, kind: input, shape index: {}]
  %s14 = inlined_call_operand.vmem [shape: f32[2,1,32], index: 14, kind: input, shape index: {}]
  %s15 = inlined_call_operand.vmem [shape: f32[32,16], index: 15, kind: input, shape index: {}]
  %s16 = inlined_call_operand.vmem [shape: f32[1,16], index: 16, kind: input, shape index: {}]
  %s17 = inlined_call_operand.hbm [shape: f32[64,16], index: 17, kind: output, shape index: {}]
  %s18 = sld [smem:[#allocation0]]
  $region78: #{timings_transformer_forward.1} parent=0
    _
  %s20 = ssub.s32 1, %s18
  %s21 = scalar_select 0, %s20, %s18
  $region1: #{timings_transformer_forward.1} parent=0
    #allocation2 [shape = 'u8[32768]{0}', space=vmem, size = 0x8000, scoped, tag = 'output window, operand 0, single buffered']
    #allocation3 [shape = 's32[1]{0}', space=sflag, size = 0x4, scoped, tag = 'scoped memory for timings_transformer_forward.1']
    %22 = vsyncpa [#allocation3], 0
    // Predicated region
    $region2: #{timings_transformer_forward.1} parent=1 // pred_check
      _
    $region3: #{timings_transformer_forward.1} parent=1 // pred_check_branch
      %24 = sbr.rel (0) target = $region5
    $region4: #{timings_transformer_forward.1} parent=1 // pred_region
      _
    $region5: #{timings_transformer_forward.1} parent=1 // pred_fallthru
      _
    // Predicated region
    $region6: #{timings_transformer_forward.1} parent=1 // pred_check
      _
    $region7: #{timings_transformer_forward.1} parent=1 // pred_check_branch
      %26 = sbr.rel (0) target = $region9
    $region8: #{timings_transformer_forward.1} parent=1 // pred_region
      _
    $region9: #{timings_transformer_forward.1} parent=1 // pred_fallthru
      _
    // Predicated region
    $region10: #{timings_transformer_forward.1} parent=1 // pred_check
      _
    $region11: #{timings_transformer_forward.1} parent=1 // pred_check_branch
      %28 = sbr.rel (0) target = $region13
    $region12: #{timings_transformer_forward.1} parent=1 // pred_region
      _
    $region13: #{timings_transformer_forward.1} parent=1 // pred_fallthru
      _
    // Predicated region
    $region14: #{timings_transformer_forward.1} parent=1 // pred_check
      _
    $region15: #{timings_transformer_forward.1} parent=1 // pred_check_branch
      %30 = sbr.rel (0) target = $region17
    $region16: #{timings_transformer_forward.1} parent=1 // pred_region
      _
    $region17: #{timings_transformer_forward.1} parent=1 // pred_fallthru
      _
    // Predicated region
    $region18: #{timings_transformer_forward.1} parent=1 // pred_check
      _
    $region19: #{timings_transformer_forward.1} parent=1 // pred_check_branch
      %32 = sbr.rel (0) target = $region21
    $region20: #{timings_transformer_forward.1} parent=1 // pred_region
      _
    $region21: #{timings_transformer_forward.1} parent=1 // pred_fallthru
      _
    // Predicated region
    $region22: #{timings_transformer_forward.1} parent=1 // pred_check
      _
    $region23: #{timings_transformer_forward.1} parent=1 // pred_check_branch
      %34 = sbr.rel (0) target = $region25
    $region24: #{timings_transformer_forward.1} parent=1 // pred_region
      _
    $region25: #{timings_transformer_forward.1} parent=1 // pred_fallthru
      _
    // Predicated region
    $region26: #{timings_transformer_forward.1} parent=1 // pred_check
      _
    $region27: #{timings_transformer_forward.1} parent=1 // pred_check_branch
      %36 = sbr.rel (0) target = $region29
    $region28: #{timings_transformer_forward.1} parent=1 // pred_region
      _
    $region29: #{timings_transformer_forward.1} parent=1 // pred_fallthru
      _
    // Predicated region
    $region30: #{timings_transformer_forward.1} parent=1 // pred_check
      _
    $region31: #{timings_transformer_forward.1} parent=1 // pred_check_branch
      %38 = sbr.rel (0) target = $region33
    $region32: #{timings_transformer_forward.1} parent=1 // pred_region
      _
    $region33: #{timings_transformer_forward.1} parent=1 // pred_fallthru
      _
    // Predicated region
    $region34: #{timings_transformer_forward.1} parent=1 // pred_check
      _
    $region35: #{timings_transformer_forward.1} parent=1 // pred_check_branch
      %40 = sbr.rel (0) target = $region37
    $region36: #{timings_transformer_forward.1} parent=1 // pred_region
      _
    $region37: #{timings_transformer_forward.1} parent=1 // pred_fallthru
      _
    // Predicated region
    $region38: #{timings_transformer_forward.1} parent=1 // pred_check
      _
    $region39: #{timings_transformer_forward.1} parent=1 // pred_check_branch
      %42 = sbr.rel (0) target = $region41
    $region40: #{timings_transformer_forward.1} parent=1 // pred_region
      _
    $region41: #{timings_transformer_forward.1} parent=1 // pred_fallthru
      _
    // Predicated region
    $region42: #{timings_transformer_forward.1} parent=1 // pred_check
      _
    $region43: #{timings_transformer_forward.1} parent=1 // pred_check_branch
      %44 = sbr.rel (0) target = $region45
    $region44: #{timings_transformer_forward.1} parent=1 // pred_region
      _
    $region45: #{timings_transformer_forward.1} parent=1 // pred_fallthru
      _
    // Predicated region
    $region46: #{timings_transformer_forward.1} parent=1 // pred_check
      _
    $region47: #{timings_transformer_forward.1} parent=1 // pred_check_branch
      %46 = sbr.rel (0) target = $region49
    $region48: #{timings_transformer_forward.1} parent=1 // pred_region
      _
    $region49: #{timings_transformer_forward.1} parent=1 // pred_fallthru
      _
    // Predicated region
    $region50: #{timings_transformer_forward.1} parent=1 // pred_check
      _
    $region51: #{timings_transformer_forward.1} parent=1 // pred_check_branch
      %48 = sbr.rel (0) target = $region53
    $region52: #{timings_transformer_forward.1} parent=1 // pred_region
      _
    $region53: #{timings_transformer_forward.1} parent=1 // pred_fallthru
      _
    // Predicated region
    $region54: #{timings_transformer_forward.1} parent=1 // pred_check
      _
    $region55: #{timings_transformer_forward.1} parent=1 // pred_check_branch
      %50 = sbr.rel (0) target = $region57
    $region56: #{timings_transformer_forward.1} parent=1 // pred_region
      _
    $region57: #{timings_transformer_forward.1} parent=1 // pred_fallthru
      _
    // Predicated region
    $region58: #{timings_transformer_forward.1} parent=1 // pred_check
      _
    $region59: #{timings_transformer_forward.1} parent=1 // pred_check_branch
      %52 = sbr.rel (0) target = $region61
    $region60: #{timings_transformer_forward.1} parent=1 // pred_region
      _
    $region61: #{timings_transformer_forward.1} parent=1 // pred_fallthru
      _
    // Predicated region
    $region62: #{timings_transformer_forward.1} parent=1 // pred_check
      _
    $region63: #{timings_transformer_forward.1} parent=1 // pred_check_branch
      %54 = sbr.rel (0) target = $region65
    $region64: #{timings_transformer_forward.1} parent=1 // pred_region
      _
    $region65: #{timings_transformer_forward.1} parent=1 // pred_fallthru
      _
    // Predicated region
    $region66: #{timings_transformer_forward.1} parent=1 // pred_check
      _
    $region67: #{timings_transformer_forward.1} parent=1 // pred_check_branch
      %56 = sbr.rel (0) target = $region69
    $region68: #{timings_transformer_forward.1} parent=1 // pred_region
      _
    $region69: #{timings_transformer_forward.1} parent=1 // pred_fallthru
      _
    %v57 = vld [vmem:[%s0] sm:$0xff]
    %v58 = vld [vmem:[%s0 + $0x8] sm:$0xff]
    %v59 = vld [vmem:[%s0 + $0x10] sm:$0xff]
    %v60 = vld [vmem:[%s0 + $0x18] sm:$0xff]
    %v61 = vld [vmem:[%s0 + $0x20] sm:$0xff]
    %v62 = vld [vmem:[%s0 + $0x28] sm:$0xff]
    %v63 = vld [vmem:[%s0 + $0x30] sm:$0xff]
    %v64 = vld [vmem:[%s0 + $0x38] sm:$0xff]
    %v65 = vld [vmem:[%s3] sm:$0xff]
    %v66 = vld [vmem:[%s3 + $0x8] sm:$0xff]
    %v67 = vld [vmem:[%s3 + $0x10] sm:$0xff]
    %v68 = vld [vmem:[%s3 + $0x18] sm:$0xff]
    %v69 = vld [vmem:[%s3 + $0x20] sm:$0xff]
    %v70 = vld [vmem:[%s3 + $0x28] sm:$0xff]
    %v71 = vld [vmem:[%s3 + $0x30] sm:$0xff]
    %v72 = vld [vmem:[%s3 + $0x38] sm:$0xff]
    %v73 = vld [vmem:[%s4] sm:$0xff]
    %v74 = vld [vmem:[%s4 + $0x8] sm:$0xff]
    %v75 = vld [vmem:[%s4 + $0x10] sm:$0xff]
    %v76 = vld [vmem:[%s4 + $0x18] sm:$0xff]
    %v77 = vld [vmem:[%s4 + $0x20] sm:$0xff]
    %v78 = vld [vmem:[%s4 + $0x28] sm:$0xff]
    %v79 = vld [vmem:[%s4 + $0x30] sm:$0xff]
    %v80 = vld [vmem:[%s4 + $0x38] sm:$0xff]
    %vm81 = vcmask 523264
    %v83 = vsel %vm81, %v65, 0
    %v86 = vsel %vm81, %v66, 0
    %v89 = vsel %vm81, %v67, 0
    %v92 = vsel %vm81, %v68, 0
    %v95 = vsel %vm81, %v69, 0
    %v98 = vsel %vm81, %v70, 0
    %v101 = vsel %vm81, %v71, 0
    %v104 = vsel %vm81, %v72, 0
    %106 = vmatprep.subr.mxu0 0.0
    %107 = vmatpush1.msra.mxu0 %v57
    %108 = vmatprep.subr.mxu0 0.0
    %109 = vmatpush1.msra.mxu0 %v58
    %110 = vmatprep.subr.mxu0 0.0
    %111 = vmatpush1.msra.mxu0 %v59
    %112 = vmatprep.subr.mxu0 0.0
    %113 = vmatpush1.msra.mxu0 %v60
    %114 = vmatprep.subr.mxu0 0.0
    %115 = vmatpush1.msra.mxu0 %v61
    %116 = vmatprep.subr.mxu0 0.0
    %117 = vmatpush1.msra.mxu0 %v62
    %118 = vmatprep.subr.mxu0 0.0
    %119 = vmatpush1.msra.mxu0 %v63
    %120 = vmatprep.subr.mxu0 0.0
    %121 = vmatpush1.msra.mxu0 %v64
    %122 = vmatprep.subr.mxu0 0.0
    %123 = vmatpush1.msra.mxu0 0.0
    %124 = vmatprep.subr.mxu0 0.0
    %125 = vmatpush1.msra.mxu0 0.0
    %126 = vmatprep.subr.mxu0 0.0
    %127 = vmatpush1.msra.mxu0 0.0
    %128 = vmatprep.subr.mxu0 0.0
    %129 = vmatpush1.msra.mxu0 0.0
    %130 = vmatprep.subr.mxu0 0.0
    %131 = vmatpush1.msra.mxu0 0.0
    %132 = vmatprep.subr.mxu0 0.0
    %133 = vmatpush1.msra.mxu0 0.0
    %134 = vmatprep.subr.mxu0 0.0
    %135 = vmatpush1.msra.mxu0 0.0
    %136 = vmatprep.subr.mxu0 0.0
    %137 = vmatpush1.msra.mxu0 0.0
    %138 = vmatprep.subr.mxu0 0.0
    %139 = vmatpush1.msra.mxu0 0.0
    %140 = vmatprep.subr.mxu0 0.0
    %141 = vmatpush1.msra.mxu0 0.0
    %142 = vmatprep.subr.mxu0 0.0
    %143 = vmatpush1.msra.mxu0 0.0
    %144 = vmatprep.subr.mxu0 0.0
    %145 = vmatpush1.msra.mxu0 0.0
    %146 = vmatprep.subr.mxu0 0.0
    %147 = vmatpush1.msra.mxu0 0.0
    %148 = vmatprep.subr.mxu0 0.0
    %149 = vmatpush1.msra.mxu0 0.0
    %150 = vmatprep.subr.mxu0 0.0
    %151 = vmatpush1.msra.mxu0 0.0
    %152 = vmatprep.subr.mxu0 0.0
    %153 = vmatpush1.msra.mxu0 0.0
    %154 = vmatprep.subr.mxu0 0.0
    %155 = vmatpush1.msra.mxu0 0.0
    %156 = vmatprep.subr.mxu0 0.0
    %157 = vmatpush1.msra.mxu0 0.0
    %158 = vmatprep.subr.mxu0 0.0
    %159 = vmatpush1.msra.mxu0 0.0
    %160 = vmatprep.subr.mxu0 0.0
    %161 = vmatpush1.msra.mxu0 0.0
    %162 = vmatprep.subr.mxu0 0.0
    %163 = vmatpush1.msra.mxu0 0.0
    %164 = vmatprep.subr.mxu0 0.0
    %165 = vmatpush1.msra.mxu0 0.0
    %166 = vmatprep.subr.mxu0 0.0
    %167 = vmatpush1.msra.mxu0 0.0
    %168 = vmatprep.subr.mxu0 0.0
    %169 = vmatpush1.msra.mxu0 0.0
    %170 = vmatprep.mubr.f32.mxu0 0.0
    %171 = vmatmul.mubr.f32.gmra.mrb[0].mxu0 %v83
    %v172 = vpop.f32.mrb[0].mxu0
    %v173 = vadd.f32 0.0, %v172
    %v174 = vpop.f32.mrb[0].mxu0
    %175 = vmatprep.mubr.f32.mxu0 0.0
    %176 = vmatmul.mubr.f32.gmra.mrb[0].mxu0 %v86
    %v177 = vpop.f32.mrb[0].mxu0
    %v178 = vadd.f32 0.0, %v177
    %v179 = vpop.f32.mrb[0].mxu0
    %180 = vmatprep.mubr.f32.mxu0 0.0
    %181 = vmatmul.mubr.f32.gmra.mrb[0].mxu0 %v89
    %v182 = vpop.f32.mrb[0].mxu0
    %v183 = vadd.f32 0.0, %v182
    %v184 = vpop.f32.mrb[0].mxu0
    %185 = vmatprep.mubr.f32.mxu0 0.0
    %186 = vmatmul.mubr.f32.gmra.mrb[0].mxu0 %v92
    %v187 = vpop.f32.mrb[0].mxu0
    %v188 = vadd.f32 0.0, %v187
    %v189 = vpop.f32.mrb[0].mxu0
    %190 = vmatprep.mubr.f32.mxu0 0.0
    %191 = vmatmul.mubr.f32.gmra.mrb[0].mxu0 %v95
    %v192 = vpop.f32.mrb[0].mxu0
    %v193 = vadd.f32 0.0, %v192
    %v194 = vpop.f32.mrb[0].mxu0
    %195 = vmatprep.mubr.f32.mxu0 0.0
    %196 = vmatmul.mubr.f32.gmra.mrb[0].mxu0 %v98
    %v197 = vpop.f32.mrb[0].mxu0
    %v198 = vadd.f32 0.0, %v197
    %v199 = vpop.f32.mrb[0].mxu0
    %200 = vmatprep.mubr.f32.mxu0 0.0
    %201 = vmatmul.mubr.f32.gmra.mrb[0].mxu0 %v101
    %v202 = vpop.f32.mrb[0].mxu0
    %v203 = vadd.f32 0.0, %v202
    %v204 = vpop.f32.mrb[0].mxu0
    %205 = vmatprep.mubr.f32.mxu0 0.0
    %206 = vmatmul.mubr.f32.gmra.mrb[0].mxu0 %v104
    %v207 = vpop.f32.mrb[0].mxu0
    %v208 = vadd.f32 0.0, %v207
    %v209 = vpop.f32.mrb[0].mxu0
    %210 = vdwg.mxu0
    %vm211 = vcmask 261120
    %v212 = vsel %vm211, %v173, 0.0
    %213 = vadd.xlane.f32.xlu0 %v212
    %v214 = vpop.xlane.xlu0 %213
    %v215 = vsel %vm211, %v178, 0.0
    %216 = vadd.xlane.f32.xlu0 %v215
    %v217 = vpop.xlane.xlu0 %216
    %v218 = vsel %vm211, %v183, 0.0
    %219 = vadd.xlane.f32.xlu0 %v218
    %v220 = vpop.xlane.xlu0 %219
    %v221 = vsel %vm211, %v188, 0.0
    %222 = vadd.xlane.f32.xlu0 %v221
    %v223 = vpop.xlane.xlu0 %222
    %v224 = vsel %vm211, %v193, 0.0
    %225 = vadd.xlane.f32.xlu0 %v224
    %v226 = vpop.xlane.xlu0 %225
    %v227 = vsel %vm211, %v198, 0.0
    %228 = vadd.xlane.f32.xlu0 %v227
    %v229 = vpop.xlane.xlu0 %228
    %v230 = vsel %vm211, %v203, 0.0
    %231 = vadd.xlane.f32.xlu0 %v230
    %v232 = vpop.xlane.xlu0 %231
    %v233 = vsel %vm211, %v208, 0.0
    %234 = vadd.xlane.f32.xlu0 %v233
    %v235 = vpop.xlane.xlu0 %234
    %v236 = vmul.f32 %v214, 0.00390625
    %v237 = vmul.f32 %v217, 0.00390625
    %v238 = vmul.f32 %v220, 0.00390625
    %v239 = vmul.f32 %v223, 0.00390625
    %v240 = vmul.f32 %v226, 0.00390625
    %v241 = vmul.f32 %v229, 0.00390625
    %v242 = vmul.f32 %v232, 0.00390625
    %v243 = vmul.f32 %v235, 0.00390625
    %v244 = vsub.f32 %v57, %v236
    %v245 = vsub.f32 %v58, %v237
    %v246 = vsub.f32 %v59, %v238
    %v247 = vsub.f32 %v60, %v239
    %v248 = vsub.f32 %v61, %v240
    %v249 = vsub.f32 %v62, %v241
    %v250 = vsub.f32 %v63, %v242
    %v251 = vsub.f32 %v64, %v243
    %v252 = vmul.f32 %v244, %v244
    %v253 = vmul.f32 %v245, %v245
    %v254 = vmul.f32 %v246, %v246
    %v255 = vmul.f32 %v247, %v247
    %v256 = vmul.f32 %v248, %v248
    %v257 = vmul.f32 %v249, %v249
    %v258 = vmul.f32 %v250, %v250
    %v259 = vmul.f32 %v251, %v251
    %260 = vmatprep.subr.mxu0 0.0
    %261 = vmatpush1.msra.mxu0 %v252
    %262 = vmatprep.subr.mxu0 0.0
    %263 = vmatpush1.msra.mxu0 %v253
    %264 = vmatprep.subr.mxu0 0.0
    %265 = vmatpush1.msra.mxu0 %v254
    %266 = vmatprep.subr.mxu0 0.0
    %267 = vmatpush1.msra.mxu0 %v255
    %268 = vmatprep.subr.mxu0 0.0
    %269 = vmatpush1.msra.mxu0 %v256
    %270 = vmatprep.subr.mxu0 0.0
    %271 = vmatpush1.msra.mxu0 %v257
    %272 = vmatprep.subr.mxu0 0.0
    %273 = vmatpush1.msra.mxu0 %v258
    %274 = vmatprep.subr.mxu0 0.0
    %275 = vmatpush1.msra.mxu0 %v259
    %276 = vmatprep.subr.mxu0 0.0
    %277 = vmatpush1.msra.mxu0 0.0
    %278 = vmatprep.subr.mxu0 0.0
    %279 = vmatpush1.msra.mxu0 0.0
    %280 = vmatprep.subr.mxu0 0.0
    %281 = vmatpush1.msra.mxu0 0.0
    %282 = vmatprep.subr.mxu0 0.0
    %283 = vmatpush1.msra.mxu0 0.0
    %284 = vmatprep.subr.mxu0 0.0
    %285 = vmatpush1.msra.mxu0 0.0
    %286 = vmatprep.subr.mxu0 0.0
    %287 = vmatpush1.msra.mxu0 0.0
    %288 = vmatprep.subr.mxu0 0.0
    %289 = vmatpush1.msra.mxu0 0.0
    %290 = vmatprep.subr.mxu0 0.0
    %291 = vmatpush1.msra.mxu0 0.0
    %292 = vmatprep.subr.mxu0 0.0
    %293 = vmatpush1.msra.mxu0 0.0
    %294 = vmatprep.subr.mxu0 0.0
    %295 = vmatpush1.msra.mxu0 0.0
    %296 = vmatprep.subr.mxu0 0.0
    %297 = vmatpush1.msra.mxu0 0.0
    %298 = vmatprep.subr.mxu0 0.0
    %299 = vmatpush1.msra.mxu0 0.0
    %300 = vmatprep.subr.mxu0 0.0
    %301 = vmatpush1.msra.mxu0 0.0
    %302 = vmatprep.subr.mxu0 0.0
    %303 = vmatpush1.msra.mxu0 0.0
    %304 = vmatprep.subr.mxu0 0.0
    %305 = vmatpush1.msra.mxu0 0.0
    %306 = vmatprep.subr.mxu0 0.0
    %307 = vmatpush1.msra.mxu0 0.0
    %308 = vmatprep.subr.mxu0 0.0
    %309 = vmatpush1.msra.mxu0 0.0
    %310 = vmatprep.subr.mxu0 0.0
    %311 = vmatpush1.msra.mxu0 0.0
    %312 = vmatprep.subr.mxu0 0.0
    %313 = vmatpush1.msra.mxu0 0.0
    %314 = vmatprep.subr.mxu0 0.0
    %315 = vmatpush1.msra.mxu0 0.0
    %316 = vmatprep.subr.mxu0 0.0
    %317 = vmatpush1.msra.mxu0 0.0
    %318 = vmatprep.subr.mxu0 0.0
    %319 = vmatpush1.msra.mxu0 0.0
    %320 = vmatprep.subr.mxu0 0.0
    %321 = vmatpush1.msra.mxu0 0.0
    %322 = vmatprep.subr.mxu0 0.0
    %323 = vmatpush1.msra.mxu0 0.0
    %324 = vmatprep.mubr.f32.mxu0 0.0
    %325 = vmatmul.mubr.f32.gmra.mrb[0].mxu0 %v83
    %v326 = vpop.f32.mrb[0].mxu0
    %v327 = vadd.f32 0.0, %v326
    %v328 = vpop.f32.mrb[0].mxu0
    %329 = vmatprep.mubr.f32.mxu0 0.0
    %330 = vmatmul.mubr.f32.gmra.mrb[0].mxu0 %v86
    %v331 = vpop.f32.mrb[0].mxu0
    %v332 = vadd.f32 0.0, %v331
    %v333 = vpop.f32.mrb[0].mxu0
    %334 = vmatprep.mubr.f32.mxu0 0.0
    %335 = vmatmul.mubr.f32.gmra.mrb[0].mxu0 %v89
    %v336 = vpop.f32.mrb[0].mxu0
    %v337 = vadd.f32 0.0, %v336
    %v338 = vpop.f32.mrb[0].mxu0
    %339 = vmatprep.mubr.f32.mxu0 0.0
    %340 = vmatmul.mubr.f32.gmra.mrb[0].mxu0 %v92
    %v341 = vpop.f32.mrb[0].mxu0
    %v342 = vadd.f32 0.0, %v341
    %v343 = vpop.f32.mrb[0].mxu0
    %344 = vmatprep.mubr.f32.mxu0 0.0
    %345 = vmatmul.mubr.f32.gmra.mrb[0].mxu0 %v95
    %v346 = vpop.f32.mrb[0].mxu0
    %v347 = vadd.f32 0.0, %v346
    %v348 = vpop.f32.mrb[0].mxu0
    %349 = vmatprep.mubr.f32.mxu0 0.0
    %350 = vmatmul.mubr.f32.gmra.mrb[0].mxu0 %v98
    %v351 = vpop.f32.mrb[0].mxu0
    %v352 = vadd.f32 0.0, %v351
    %v353 = vpop.f32.mrb[0].mxu0
    %354 = vmatprep.mubr.f32.mxu0 0.0
    %355 = vmatmul.mubr.f32.gmra.mrb[0].mxu0 %v101
    %v356 = vpop.f32.mrb[0].mxu0
    %v357 = vadd.f32 0.0, %v356
    %v358 = vpop.f32.mrb[0].mxu0
    %359 = vmatprep.mubr.f32.mxu0 0.0
    %360 = vmatmul.mubr.f32.gmra.mrb[0].mxu0 %v104
    %v361 = vpop.f32.mrb[0].mxu0
    %v362 = vadd.f32 0.0, %v361
    %v363 = vpop.f32.mrb[0].mxu0
    %364 = vdwg.mxu0
    %v365 = vsel %vm211, %v327, 0.0
    %366 = vadd.xlane.f32.xlu0 %v365
    %v367 = vpop.xlane.xlu0 %366
    %v368 = vsel %vm211, %v332, 0.0
    %369 = vadd.xlane.f32.xlu0 %v368
    %v370 = vpop.xlane.xlu0 %369
    %v371 = vsel %vm211, %v337, 0.0
    %372 = vadd.xlane.f32.xlu0 %v371
    %v373 = vpop.xlane.xlu0 %372
    %v374 = vsel %vm211, %v342, 0.0
    %375 = vadd.xlane.f32.xlu0 %v374
    %v376 = vpop.xlane.xlu0 %375
    %v377 = vsel %vm211, %v347, 0.0
    %378 = vadd.xlane.f32.xlu0 %v377
    %v379 = vpop.xlane.xlu0 %378
    %v380 = vsel %vm211, %v352, 0.0
    %381 = vadd.xlane.f32.xlu0 %v380
    %v382 = vpop.xlane.xlu0 %381
    %v383 = vsel %vm211, %v357, 0.0
    %384 = vadd.xlane.f32.xlu0 %v383
    %v385 = vpop.xlane.xlu0 %384
    %v386 = vsel %vm211, %v362, 0.0
    %387 = vadd.xlane.f32.xlu0 %v386
    %v388 = vpop.xlane.xlu0 %387
    %v389 = vmul.f32 %v367, 0.00390625
    %v390 = vmul.f32 %v370, 0.00390625
    %v391 = vmul.f32 %v373, 0.00390625
    %v392 = vmul.f32 %v376, 0.00390625
    %v393 = vmul.f32 %v379, 0.00390625
    %v394 = vmul.f32 %v382, 0.00390625
    %v395 = vmul.f32 %v385, 0.00390625
    %v396 = vmul.f32 %v388, 0.00390625
    %v397 = vadd.f32 %v389, 1e-05
    %v398 = vadd.f32 %v390, 1e-05
    %v399 = vadd.f32 %v391, 1e-05
    %v400 = vadd.f32 %v392, 1e-05
    %v401 = vadd.f32 %v393, 1e-05
    %v402 = vadd.f32 %v394, 1e-05
    %v403 = vadd.f32 %v395, 1e-05
    %v404 = vadd.f32 %v396, 1e-05
    %v405 = vrsqrt.pop %v397
    %v406 = vrsqrt.pop %v398
    %v407 = vrsqrt.pop %v399
    %v408 = vrsqrt.pop %v400
    %v409 = vrsqrt.pop %v401
    %v410 = vrsqrt.pop %v402
    %v411 = vrsqrt.pop %v403
    %v412 = vrsqrt.pop %v404
    %v413 = vmul.f32 %v244, %v405
    %v414 = vmul.f32 %v245, %v406
    %v415 = vmul.f32 %v246, %v407
    %v416 = vmul.f32 %v247, %v408
    %v417 = vmul.f32 %v248, %v409
    %v418 = vmul.f32 %v249, %v410
    %v419 = vmul.f32 %v250, %v411
    %v420 = vmul.f32 %v251, %v412
    %v421 = vld [vmem:[%s1] sm:$0xff]
    %v422 = vld [vmem:[%s1 + $0x8] sm:$0xff]
    %v423 = vld [vmem:[%s1 + $0x10] sm:$0xff]
    %v424 = vld [vmem:[%s1 + $0x18] sm:$0xff]
    %v425 = vld [vmem:[%s1 + $0x20] sm:$0xff]
    %v426 = vld [vmem:[%s1 + $0x28] sm:$0xff]
    %v427 = vld [vmem:[%s1 + $0x30] sm:$0xff]
    %v428 = vld [vmem:[%s1 + $0x38] sm:$0xff]
    %430 = vset.pattern.permute.xlu0 0
    %431 = vperm.xlu0 %430, %v421
    %v432 = vpop.permute.xlu0 %431
    %435 = vset.pattern.permute.xlu0 0
    %436 = vperm.xlu0 %435, %v422
    %v437 = vpop.permute.xlu0 %436
    %440 = vset.pattern.permute.xlu0 0
    %441 = vperm.xlu0 %440, %v423
    %v442 = vpop.permute.xlu0 %441
    %445 = vset.pattern.permute.xlu0 0
    %446 = vperm.xlu0 %445, %v424
    %v447 = vpop.permute.xlu0 %446
    %450 = vset.pattern.permute.xlu0 0
    %451 = vperm.xlu0 %450, %v425
    %v452 = vpop.permute.xlu0 %451
    %455 = vset.pattern.permute.xlu0 0
    %456 = vperm.xlu0 %455, %v426
    %v457 = vpop.permute.xlu0 %456
    %460 = vset.pattern.permute.xlu0 0
    %461 = vperm.xlu0 %460, %v427
    %v462 = vpop.permute.xlu0 %461
    %465 = vset.pattern.permute.xlu0 0
    %466 = vperm.xlu0 %465, %v428
    %v467 = vpop.permute.xlu0 %466
    %v469 = vmul.f32 %v413, %v432
    %v470 = vmul.f32 %v414, %v437
    %v471 = vmul.f32 %v415, %v442
    %v472 = vmul.f32 %v416, %v447
    %v473 = vmul.f32 %v417, %v452
    %v474 = vmul.f32 %v418, %v457
    %v475 = vmul.f32 %v419, %v462
    %v476 = vmul.f32 %v420, %v467
    %v477 = vld [vmem:[%s2] sm:$0xff]
    %v478 = vld [vmem:[%s2 + $0x8] sm:$0xff]
    %v479 = vld [vmem:[%s2 + $0x10] sm:$0xff]
    %v480 = vld [vmem:[%s2 + $0x18] sm:$0xff]
    %v481 = vld [vmem:[%s2 + $0x20] sm:$0xff]
    %v482 = vld [vmem:[%s2 + $0x28] sm:$0xff]
    %v483 = vld [vmem:[%s2 + $0x30] sm:$0xff]
    %v484 = vld [vmem:[%s2 + $0x38] sm:$0xff]
    %486 = vset.pattern.permute.xlu0 0
    %487 = vperm.xlu0 %486, %v477
    %v488 = vpop.permute.xlu0 %487
    %491 = vset.pattern.permute.xlu0 0
    %492 = vperm.xlu0 %491, %v478
    %v493 = vpop.permute.xlu0 %492
    %496 = vset.pattern.permute.xlu0 0
    %497 = vperm.xlu0 %496, %v479
    %v498 = vpop.permute.xlu0 %497
    %501 = vset.pattern.permute.xlu0 0
    %502 = vperm.xlu0 %501, %v480
    %v503 = vpop.permute.xlu0 %502
    %506 = vset.pattern.permute.xlu0 0
    %507 = vperm.xlu0 %506, %v481
    %v508 = vpop.permute.xlu0 %507
    %511 = vset.pattern.permute.xlu0 0
    %512 = vperm.xlu0 %511, %v482
    %v513 = vpop.permute.xlu0 %512
    %516 = vset.pattern.permute.xlu0 0
    %517 = vperm.xlu0 %516, %v483
    %v518 = vpop.permute.xlu0 %517
    %521 = vset.pattern.permute.xlu0 0
    %522 = vperm.xlu0 %521, %v484
    %v523 = vpop.permute.xlu0 %522
    %v525 = vadd.f32 %v469, %v488
    %v526 = vadd.f32 %v470, %v493
    %v527 = vadd.f32 %v471, %v498
    %v528 = vadd.f32 %v472, %v503
    %v529 = vadd.f32 %v473, %v508
    %v530 = vadd.f32 %v474, %v513
    %v531 = vadd.f32 %v475, %v518
    %v532 = vadd.f32 %v476, %v523
    %v533 = vld [vmem:[%s7] sm:$0xff]
    %v534 = vld [vmem:[%s7 + $0x8] sm:$0xff]
    %v535 = vld [vmem:[%s7 + $0x10] sm:$0xff]
    %v536 = vld [vmem:[%s7 + $0x18] sm:$0xff]
    %v537 = vld [vmem:[%s10] sm:$0x1]
    %v539 = vlaneseq
    %v540 = vshrl.u32 %v539, 7
    %v541 = vsub.s32 0, %v540
    %v542 = vrot.slane %v537, %v541
    %v545 = vsel %vm211, %v525, 0
    %v548 = vsel %vm211, %v526, 0
    %v551 = vsel %vm211, %v527, 0
    %v554 = vsel %vm211, %v528, 0
    %v557 = vsel %vm211, %v529, 0
    %v560 = vsel %vm211, %v530, 0
    %v563 = vsel %vm211, %v531, 0
    %v566 = vsel %vm211, %v532, 0
    %568 = vmatprep.subr.mxu0 0.0
    %569 = vmatpush1.msra.mxu0 %v533
    %570 = vmatprep.subr.mxu0 0.0
    %571 = vmatpush1.msra.mxu0 %v534
    %572 = vmatprep.subr.mxu0 0.0
    %573 = vmatpush1.msra.mxu0 %v535
    %574 = vmatprep.subr.mxu0 0.0
    %575 = vmatpush1.msra.mxu0 %v536
    %576 = vmatprep.subr.mxu0 0.0
    %577 = vmatpush1.msra.mxu0 0.0
    %578 = vmatprep.subr.mxu0 0.0
    %579 = vmatpush1.msra.mxu0 0.0
    %580 = vmatprep.subr.mxu0 0.0
    %581 = vmatpush1.msra.mxu0 0.0
    %582 = vmatprep.subr.mxu0 0.0
    %583 = vmatpush1.msra.mxu0 0.0
    %584 = vmatprep.subr.mxu0 0.0
    %585 = vmatpush1.msra.mxu0 0.0
    %586 = vmatprep.subr.mxu0 0.0
    %587 = vmatpush1.msra.mxu0 0.0
    %588 = vmatprep.subr.mxu0 0.0
    %589 = vmatpush1.msra.mxu0 0.0
    %590 = vmatprep.subr.mxu0 0.0
    %591 = vmatpush1.msra.mxu0 0.0
    %592 = vmatprep.subr.mxu0 0.0
    %593 = vmatpush1.msra.mxu0 0.0
    %594 = vmatprep.subr.mxu0 0.0
    %595 = vmatpush1.msra.mxu0 0.0
    %596 = vmatprep.subr.mxu0 0.0
    %597 = vmatpush1.msra.mxu0 0.0
    %598 = vmatprep.subr.mxu0 0.0
    %599 = vmatpush1.msra.mxu0 0.0
    %600 = vmatprep.subr.mxu0 0.0
    %601 = vmatpush1.msra.mxu0 0.0
    %602 = vmatprep.subr.mxu0 0.0
    %603 = vmatpush1.msra.mxu0 0.0
    %604 = vmatprep.subr.mxu0 0.0
    %605 = vmatpush1.msra.mxu0 0.0
    %606 = vmatprep.subr.mxu0 0.0
    %607 = vmatpush1.msra.mxu0 0.0
    %608 = vmatprep.subr.mxu0 0.0
    %609 = vmatpush1.msra.mxu0 0.0
    %610 = vmatprep.subr.mxu0 0.0
    %611 = vmatpush1.msra.mxu0 0.0
    %612 = vmatprep.subr.mxu0 0.0
    %613 = vmatpush1.msra.mxu0 0.0
    %614 = vmatprep.subr.mxu0 0.0
    %615 = vmatpush1.msra.mxu0 0.0
    %616 = vmatprep.subr.mxu0 0.0
    %617 = vmatpush1.msra.mxu0 0.0
    %618 = vmatprep.subr.mxu0 0.0
    %619 = vmatpush1.msra.mxu0 0.0
    %620 = vmatprep.subr.mxu0 0.0
    %621 = vmatpush1.msra.mxu0 0.0
    %622 = vmatprep.subr.mxu0 0.0
    %623 = vmatpush1.msra.mxu0 0.0
    %624 = vmatprep.subr.mxu0 0.0
    %625 = vmatpush1.msra.mxu0 0.0
    %626 = vmatprep.subr.mxu0 0.0
    %627 = vmatpush1.msra.mxu0 0.0
    %628 = vmatprep.subr.mxu0 0.0
    %629 = vmatpush1.msra.mxu0 0.0
    %630 = vmatprep.subr.mxu0 0.0
    %631 = vmatpush1.msra.mxu0 0.0
    %632 = vmatprep.mubr.f32.mxu0 0.0
    %633 = vmatmul.mubr.f32.gmra.mrb[0].mxu0 %v545
    %v634 = vpop.f32.mrb[0].mxu0
    %v635 = vadd.f32 %v542, %v634
    %v636 = vpop.f32.mrb[0].mxu0
    %637 = vmatprep.mubr.f32.mxu0 0.0
    %638 = vmatmul.mubr.f32.gmra.mrb[0].mxu0 %v548
    %v639 = vpop.f32.mrb[0].mxu0
    %v640 = vadd.f32 %v542, %v639
    %v641 = vpop.f32.mrb[0].mxu0
    %642 = vmatprep.mubr.f32.mxu0 0.0
    %643 = vmatmul.mubr.f32.gmra.mrb[0].mxu0 %v551
    %v644 = vpop.f32.mrb[0].mxu0
    %v645 = vadd.f32 %v542, %v644
    %v646 = vpop.f32.mrb[0].mxu0
    %647 = vmatprep.mubr.f32.mxu0 0.0
    %648 = vmatmul.mubr.f32.gmra.mrb[0].mxu0 %v554
    %v649 = vpop.f32.mrb[0].mxu0
    %v650 = vadd.f32 %v542, %v649
    %v651 = vpop.f32.mrb[0].mxu0
    %652 = vmatprep.mubr.f32.mxu0 0.0
    %653 = vmatmul.mubr.f32.gmra.mrb[0].mxu0 %v557
    %v654 = vpop.f32.mrb[0].mxu0
    %v655 = vadd.f32 %v542, %v654
    %v656 = vpop.f32.mrb[0].mxu0
    %657 = vmatprep.mubr.f32.mxu0 0.0
    %658 = vmatmul.mubr.f32.gmra.mrb[0].mxu0 %v560
    %v659 = vpop.f32.mrb[0].mxu0
    %v660 = vadd.f32 %v542, %v659
    %v661 = vpop.f32.mrb[0].mxu0
    %662 = vmatprep.mubr.f32.mxu0 0.0
    %663 = vmatmul.mubr.f32.gmra.mrb[0].mxu0 %v563
    %v664 = vpop.f32.mrb[0].mxu0
    %v665 = vadd.f32 %v542, %v664
    %v666 = vpop.f32.mrb[0].mxu0
    %667 = vmatprep.mubr.f32.mxu0 0.0
    %668 = vmatmul.mubr.f32.gmra.mrb[0].mxu0 %v566
    %v669 = vpop.f32.mrb[0].mxu0
    %v670 = vadd.f32 %v542, %v669
    %v671 = vpop.f32.mrb[0].mxu0
    %672 = vdwg.mxu0
    %v673 = vld [vmem:[%s8] sm:$0xff]
    %v674 = vld [vmem:[%s8 + $0x8] sm:$0xff]
    %v675 = vld [vmem:[%s8 + $0x10] sm:$0xff]
    %v676 = vld [vmem:[%s8 + $0x18] sm:$0xff]
    %v677 = vld [vmem:[%s11] sm:$0x1]
    %v679 = vlaneseq
    %v680 = vshrl.u32 %v679, 7
    %v681 = vsub.s32 0, %v680
    %v682 = vrot.slane %v677, %v681
    %684 = vmatprep.subr.mxu0 0.0
    %685 = vmatpush1.msra.mxu0 %v673
    %686 = vmatprep.subr.mxu0 0.0
    %687 = vmatpush1.msra.mxu0 %v674
    %688 = vmatprep.subr.mxu0 0.0
    %689 = vmatpush1.msra.mxu0 %v675
    %690 = vmatprep.subr.mxu0 0.0
    %691 = vmatpush1.msra.mxu0 %v676
    %692 = vmatprep.subr.mxu0 0.0
    %693 = vmatpush1.msra.mxu0 0.0
    %694 = vmatprep.subr.mxu0 0.0
    %695 = vmatpush1.msra.mxu0 0.0
    %696 = vmatprep.subr.mxu0 0.0
    %697 = vmatpush1.msra.mxu0 0.0
    %698 = vmatprep.subr.mxu0 0.0
    %699 = vmatpush1.msra.mxu0 0.0
    %700 = vmatprep.subr.mxu0 0.0
    %701 = vmatpush1.msra.mxu0 0.0
    %702 = vmatprep.subr.mxu0 0.0
    %703 = vmatpush1.msra.mxu0 0.0
    %704 = vmatprep.subr.mxu0 0.0
    %705 = vmatpush1.msra.mxu0 0.0
    %706 = vmatprep.subr.mxu0 0.0
    %707 = vmatpush1.msra.mxu0 0.0
    %708 = vmatprep.subr.mxu0 0.0
    %709 = vmatpush1.msra.mxu0 0.0
    %710 = vmatprep.subr.mxu0 0.0
    %711 = vmatpush1.msra.mxu0 0.0
    %712 = vmatprep.subr.mxu0 0.0
    %713 = vmatpush1.msra.mxu0 0.0
    %714 = vmatprep.subr.mxu0 0.0
    %715 = vmatpush1.msra.mxu0 0.0
    %716 = vmatprep.subr.mxu0 0.0
    %717 = vmatpush1.msra.mxu0 0.0
    %718 = vmatprep.subr.mxu0 0.0
    %719 = vmatpush1.msra.mxu0 0.0
    %720 = vmatprep.subr.mxu0 0.0
    %721 = vmatpush1.msra.mxu0 0.0
    %722 = vmatprep.subr.mxu0 0.0
    %723 = vmatpush1.msra.mxu0 0.0
    %724 = vmatprep.subr.mxu0 0.0
    %725 = vmatpush1.msra.mxu0 0.0
    %726 = vmatprep.subr.mxu0 0.0
    %727 = vmatpush1.msra.mxu0 0.0
    %728 = vmatprep.subr.mxu0 0.0
    %729 = vmatpush1.msra.mxu0 0.0
    %730 = vmatprep.subr.mxu0 0.0
    %731 = vmatpush1.msra.mxu0 0.0
    %732 = vmatprep.subr.mxu0 0.0
    %733 = vmatpush1.msra.mxu0 0.0
    %734 = vmatprep.subr.mxu0 0.0
    %735 = vmatpush1.msra.mxu0 0.0
    %736 = vmatprep.subr.mxu0 0.0
    %737 = vmatpush1.msra.mxu0 0.0
    %738 = vmatprep.subr.mxu0 0.0
    %739 = vmatpush1.msra.mxu0 0.0
    %740 = vmatprep.subr.mxu0 0.0
    %741 = vmatpush1.msra.mxu0 0.0
    %742 = vmatprep.subr.mxu0 0.0
    %743 = vmatpush1.msra.mxu0 0.0
    %744 = vmatprep.subr.mxu0 0.0
    %745 = vmatpush1.msra.mxu0 0.0
    %746 = vmatprep.subr.mxu0 0.0
    %747 = vmatpush1.msra.mxu0 0.0
    %748 = vmatprep.mubr.f32.mxu0 0.0
    %749 = vmatmul.mubr.f32.gmra.mrb[0].mxu0 %v545
    %v750 = vpop.f32.mrb[0].mxu0
    %v751 = vadd.f32 %v682, %v750
    %v752 = vpop.f32.mrb[0].mxu0
    %753 = vmatprep.mubr.f32.mxu0 0.0
    %754 = vmatmul.mubr.f32.gmra.mrb[0].mxu0 %v548
    %v755 = vpop.f32.mrb[0].mxu0
    %v756 = vadd.f32 %v682, %v755
    %v757 = vpop.f32.mrb[0].mxu0
    %758 = vmatprep.mubr.f32.mxu0 0.0
    %759 = vmatmul.mubr.f32.gmra.mrb[0].mxu0 %v551
    %v760 = vpop.f32.mrb[0].mxu0
    %v761 = vadd.f32 %v682, %v760
    %v762 = vpop.f32.mrb[0].mxu0
    %763 = vmatprep.mubr.f32.mxu0 0.0
    %764 = vmatmul.mubr.f32.gmra.mrb[0].mxu0 %v554
    %v765 = vpop.f32.mrb[0].mxu0
    %v766 = vadd.f32 %v682, %v765
    %v767 = vpop.f32.mrb[0].mxu0
    %768 = vmatprep.mubr.f32.mxu0 0.0
    %769 = vmatmul.mubr.f32.gmra.mrb[0].mxu0 %v557
    %v770 = vpop.f32.mrb[0].mxu0
    %v771 = vadd.f32 %v682, %v770
    %v772 = vpop.f32.mrb[0].mxu0
    %773 = vmatprep.mubr.f32.mxu0 0.0
    %774 = vmatmul.mubr.f32.gmra.mrb[0].mxu0 %v560
    %v775 = vpop.f32.mrb[0].mxu0
    %v776 = vadd.f32 %v682, %v775
    %v777 = vpop.f32.mrb[0].mxu0
    %778 = vmatprep.mubr.f32.mxu0 0.0
    %779 = vmatmul.mubr.f32.gmra.mrb[0].mxu0 %v563
    %v780 = vpop.f32.mrb[0].mxu0
    %v781 = vadd.f32 %v682, %v780
    %v782 = vpop.f32.mrb[0].mxu0
    %783 = vmatprep.mubr.f32.mxu0 0.0
    %784 = vmatmul.mubr.f32.gmra.mrb[0].mxu0 %v566
    %v785 = vpop.f32.mrb[0].mxu0
    %v786 = vadd.f32 %v682, %v785
    %v787 = vpop.f32.mrb[0].mxu0
    %788 = vdwg.mxu0
    %v789 = vld [vmem:[%s9] sm:$0xff]
    %v790 = vld [vmem:[%s9 + $0x8] sm:$0xff]
    %v791 = vld [vmem:[%s9 + $0x10] sm:$0xff]
    %v792 = vld [vmem:[%s9 + $0x18] sm:$0xff]
    %v793 = vld [vmem:[%s12] sm:$0x1]
    %v795 = vlaneseq
    %v796 = vshrl.u32 %v795, 7
    %v797 = vsub.s32 0, %v796
    %v798 = vrot.slane %v793, %v797
    %800 = vmatprep.subr.mxu0 0.0
    %801 = vmatpush1.msra.mxu0 %v789
    %802 = vmatprep.subr.mxu0 0.0
    %803 = vmatpush1.msra.mxu0 %v790
    %804 = vmatprep.subr.mxu0 0.0
    %805 = vmatpush1.msra.mxu0 %v791
    %806 = vmatprep.subr.mxu0 0.0
    %807 = vmatpush1.msra.mxu0 %v792
    %808 = vmatprep.subr.mxu0 0.0
    %809 = vmatpush1.msra.mxu0 0.0
    %810 = vmatprep.subr.mxu0 0.0
    %811 = vmatpush1.msra.mxu0 0.0
    %812 = vmatprep.subr.mxu0 0.0
    %813 = vmatpush1.msra.mxu0 0.0
    %814 = vmatprep.subr.mxu0 0.0
    %815 = vmatpush1.msra.mxu0 0.0
    %816 = vmatprep.subr.mxu0 0.0
    %817 = vmatpush1.msra.mxu0 0.0
    %818 = vmatprep.subr.mxu0 0.0
    %819 = vmatpush1.msra.mxu0 0.0
    %820 = vmatprep.subr.mxu0 0.0
    %821 = vmatpush1.msra.mxu0 0.0
    %822 = vmatprep.subr.mxu0 0.0
    %823 = vmatpush1.msra.mxu0 0.0
    %824 = vmatprep.subr.mxu0 0.0
    %825 = vmatpush1.msra.mxu0 0.0
    %826 = vmatprep.subr.mxu0 0.0
    %827 = vmatpush1.msra.mxu0 0.0
    %828 = vmatprep.subr.mxu0 0.0
    %829 = vmatpush1.msra.mxu0 0.0
    %830 = vmatprep.subr.mxu0 0.0
    %831 = vmatpush1.msra.mxu0 0.0
    %832 = vmatprep.subr.mxu0 0.0
    %833 = vmatpush1.msra.mxu0 0.0
    %834 = vmatprep.subr.mxu0 0.0
    %835 = vmatpush1.msra.mxu0 0.0
    %836 = vmatprep.subr.mxu0 0.0
    %837 = vmatpush1.msra.mxu0 0.0
    %838 = vmatprep.subr.mxu0 0.0
    %839 = vmatpush1.msra.mxu0 0.0
    %840 = vmatprep.subr.mxu0 0.0
    %841 = vmatpush1.msra.mxu0 0.0
    %842 = vmatprep.subr.mxu0 0.0
    %843 = vmatpush1.msra.mxu0 0.0
    %844 = vmatprep.subr.mxu0 0.0
    %845 = vmatpush1.msra.mxu0 0.0
    %846 = vmatprep.subr.mxu0 0.0
    %847 = vmatpush1.msra.mxu0 0.0
    %848 = vmatprep.subr.mxu0 0.0
    %849 = vmatpush1.msra.mxu0 0.0
    %850 = vmatprep.subr.mxu0 0.0
    %851 = vmatpush1.msra.mxu0 0.0
    %852 = vmatprep.subr.mxu0 0.0
    %853 = vmatpush1.msra.mxu0 0.0
    %854 = vmatprep.subr.mxu0 0.0
    %855 = vmatpush1.msra.mxu0 0.0
    %856 = vmatprep.subr.mxu0 0.0
    %857 = vmatpush1.msra.mxu0 0.0
    %858 = vmatprep.subr.mxu0 0.0
    %859 = vmatpush1.msra.mxu0 0.0
    %860 = vmatprep.subr.mxu0 0.0
    %861 = vmatpush1.msra.mxu0 0.0
    %862 = vmatprep.subr.mxu0 0.0
    %863 = vmatpush1.msra.mxu0 0.0
    %864 = vmatprep.mubr.f32.mxu0 0.0
    %865 = vmatmul.mubr.f32.gmra.mrb[0].mxu0 %v545
    %v866 = vpop.f32.mrb[0].mxu0
    %v867 = vadd.f32 %v798, %v866
    %v868 = vpop.f32.mrb[0].mxu0
    %869 = vmatprep.mubr.f32.mxu0 0.0
    %870 = vmatmul.mubr.f32.gmra.mrb[0].mxu0 %v548
    %v871 = vpop.f32.mrb[0].mxu0
    %v872 = vadd.f32 %v798, %v871
    %v873 = vpop.f32.mrb[0].mxu0
    %874 = vmatprep.mubr.f32.mxu0 0.0
    %875 = vmatmul.mubr.f32.gmra.mrb[0].mxu0 %v551
    %v876 = vpop.f32.mrb[0].mxu0
    %v877 = vadd.f32 %v798, %v876
    %v878 = vpop.f32.mrb[0].mxu0
    %879 = vmatprep.mubr.f32.mxu0 0.0
    %880 = vmatmul.mubr.f32.gmra.mrb[0].mxu0 %v554
    %v881 = vpop.f32.mrb[0].mxu0
    %v882 = vadd.f32 %v798, %v881
    %v883 = vpop.f32.mrb[0].mxu0
    %884 = vmatprep.mubr.f32.mxu0 0.0
    %885 = vmatmul.mubr.f32.gmra.mrb[0].mxu0 %v557
    %v886 = vpop.f32.mrb[0].mxu0
    %v887 = vadd.f32 %v798, %v886
    %v888 = vpop.f32.mrb[0].mxu0
    %889 = vmatprep.mubr.f32.mxu0 0.0
    %890 = vmatmul.mubr.f32.gmra.mrb[0].mxu0 %v560
    %v891 = vpop.f32.mrb[0].mxu0
    %v892 = vadd.f32 %v798, %v891
    %v893 = vpop.f32.mrb[0].mxu0
    %894 = vmatprep.mubr.f32.mxu0 0.0
    %895 = vmatmul.mubr.f32.gmra.mrb[0].mxu0 %v563
    %v896 = vpop.f32.mrb[0].mxu0
    %v897 = vadd.f32 %v798, %v896
    %v898 = vpop.f32.mrb[0].mxu0
    %899 = vmatprep.mubr.f32.mxu0 0.0
    %900 = vmatmul.mubr.f32.gmra.mrb[0].mxu0 %v566
    %v901 = vpop.f32.mrb[0].mxu0
    %v902 = vadd.f32 %v798, %v901
    %v903 = vpop.f32.mrb[0].mxu0
    %904 = vdwg.mxu0
    %v905 = vld [vmem:[%s6] sm:$0x1]
    %v907 = vlaneseq
    %v908 = vshrl.u32 %v907, 7
    %v909 = vsub.s32 0, %v908
    %v910 = vrot.slane %v905, %v909
    %v912 = vmul.f32 %v751, %v910
    %v913 = vmul.f32 %v756, %v910
    %v914 = vmul.f32 %v761, %v910
    %v915 = vmul.f32 %v766, %v910
    %v916 = vmul.f32 %v771, %v910
    %v917 = vmul.f32 %v776, %v910
    %v918 = vmul.f32 %v781, %v910
    %v919 = vmul.f32 %v786, %v910
    %v921 = vsel %vm211, %v635, 0
    %v924 = vsel %vm211, %v640, 0
    %v927 = vsel %vm211, %v645, 0
    %v930 = vsel %vm211, %v650, 0
    %v933 = vsel %vm211, %v655, 0
    %v936 = vsel %vm211, %v660, 0
    %v939 = vsel %vm211, %v665, 0
    %v942 = vsel %vm211, %v670, 0
    %v945 = vsel %vm211, %v912, 0
    %v948 = vsel %vm211, %v913, 0
    %v951 = vsel %vm211, %v914, 0
    %v954 = vsel %vm211, %v915, 0
    %v957 = vsel %vm211, %v916, 0
    %v960 = vsel %vm211, %v917, 0
    %v963 = vsel %vm211, %v918, 0
    %v966 = vsel %vm211, %v919, 0
    %968 = vmatprep.subr.mxu0 0.0
    %969 = vmatpush1.xpose.msra.mxu0 %v945
    %970 = vmatprep.subr.mxu0 0.0
    %971 = vmatpush1.xpose.msra.mxu0 %v948
    %972 = vmatprep.subr.mxu0 0.0
    %973 = vmatpush1.xpose.msra.mxu0 %v951
    %974 = vmatprep.subr.mxu0 0.0
    %975 = vmatpush1.xpose.msra.mxu0 %v954
    %976 = vmatprep.subr.mxu0 0.0
    %977 = vmatpush1.xpose.msra.mxu0 %v957
    %978 = vmatprep.subr.mxu0 0.0
    %979 = vmatpush1.xpose.msra.mxu0 %v960
    %980 = vmatprep.subr.mxu0 0.0
    %981 = vmatpush1.xpose.msra.mxu0 %v963
    %982 = vmatprep.subr.mxu0 0.0
    %983 = vmatpush1.xpose.msra.mxu0 %v966
    %984 = vmatprep.subr.mxu0 0.0
    %985 = vmatpush1.xpose.msra.mxu0 0.0
    %986 = vmatprep.subr.mxu0 0.0
    %987 = vmatpush1.xpose.msra.mxu0 0.0
    %988 = vmatprep.subr.mxu0 0.0
    %989 = vmatpush1.xpose.msra.mxu0 0.0
    %990 = vmatprep.subr.mxu0 0.0
    %991 = vmatpush1.xpose.msra.mxu0 0.0
    %992 = vmatprep.subr.mxu0 0.0
    %993 = vmatpush1.xpose.msra.mxu0 0.0
    %994 = vmatprep.subr.mxu0 0.0
    %995 = vmatpush1.xpose.msra.mxu0 0.0
    %996 = vmatprep.subr.mxu0 0.0
    %997 = vmatpush1.xpose.msra.mxu0 0.0
    %998 = vmatprep.subr.mxu0 0.0
    %999 = vmatpush1.xpose.msra.mxu0 0.0
    %1000 = vmatprep.subr.mxu0 0.0
    %1001 = vmatpush1.xpose.msra.mxu0 0.0
    %1002 = vmatprep.subr.mxu0 0.0
    %1003 = vmatpush1.xpose.msra.mxu0 0.0
    %1004 = vmatprep.subr.mxu0 0.0
    %1005 = vmatpush1.xpose.msra.mxu0 0.0
    %1006 = vmatprep.subr.mxu0 0.0
    %1007 = vmatpush1.xpose.msra.mxu0 0.0
    %1008 = vmatprep.subr.mxu0 0.0
    %1009 = vmatpush1.xpose.msra.mxu0 0.0
    %1010 = vmatprep.subr.mxu0 0.0
    %1011 = vmatpush1.xpose.msra.mxu0 0.0
    %1012 = vmatprep.subr.mxu0 0.0
    %1013 = vmatpush1.xpose.msra.mxu0 0.0
    %1014 = vmatprep.subr.mxu0 0.0
    %1015 = vmatpush1.xpose.msra.mxu0 0.0
    %1016 = vmatprep.subr.mxu0 0.0
    %1017 = vmatpush1.xpose.msra.mxu0 0.0
    %1018 = vmatprep.subr.mxu0 0.0
    %1019 = vmatpush1.xpose.msra.mxu0 0.0
    %1020 = vmatprep.subr.mxu0 0.0
    %1021 = vmatpush1.xpose.msra.mxu0 0.0
    %1022 = vmatprep.subr.mxu0 0.0
    %1023 = vmatpush1.xpose.msra.mxu0 0.0
    %1024 = vmatprep.subr.mxu0 0.0
    %1025 = vmatpush1.xpose.msra.mxu0 0.0
    %1026 = vmatprep.subr.mxu0 0.0
    %1027 = vmatpush1.xpose.msra.mxu0 0.0
    %1028 = vmatprep.subr.mxu0 0.0
    %1029 = vmatpush1.xpose.msra.mxu0 0.0
    %1030 = vmatprep.subr.mxu0 0.0
    %1031 = vmatpush1.xpose.msra.mxu0 0.0
    %1032 = vmatprep.mubr.f32.mxu0 0.0
    %1033 = vmatmul.mubr.f32.gmra.mrb[0].mxu0 %v921
    %v1034 = vpop.f32.mrb[0].mxu0
    %v1035 = vadd.f32 %v73, %v1034
    %v1036 = vpop.f32.mrb[0].mxu0
    %1037 = vmatprep.mubr.f32.mxu0 0.0
    %1038 = vmatmul.mubr.f32.gmra.mrb[0].mxu0 %v924
    %v1039 = vpop.f32.mrb[0].mxu0
    %v1040 = vadd.f32 %v74, %v1039
    %v1041 = vpop.f32.mrb[0].mxu0
    %1042 = vmatprep.mubr.f32.mxu0 0.0
    %1043 = vmatmul.mubr.f32.gmra.mrb[0].mxu0 %v927
    %v1044 = vpop.f32.mrb[0].mxu0
    %v1045 = vadd.f32 %v75, %v1044
    %v1046 = vpop.f32.mrb[0].mxu0
    %1047 = vmatprep.mubr.f32.mxu0 0.0
    %1048 = vmatmul.mubr.f32.gmra.mrb[0].mxu0 %v930
    %v1049 = vpop.f32.mrb[0].mxu0
    %v1050 = vadd.f32 %v76, %v1049
    %v1051 = vpop.f32.mrb[0].mxu0
    %1052 = vmatprep.mubr.f32.mxu0 0.0
    %1053 = vmatmul.mubr.f32.gmra.mrb[0].mxu0 %v933
    %v1054 = vpop.f32.mrb[0].mxu0
    %v1055 = vadd.f32 %v77, %v1054
    %v1056 = vpop.f32.mrb[0].mxu0
    %1057 = vmatprep.mubr.f32.mxu0 0.0
    %1058 = vmatmul.mubr.f32.gmra.mrb[0].mxu0 %v936
    %v1059 = vpop.f32.mrb[0].mxu0
    %v1060 = vadd.f32 %v78, %v1059
    %v1061 = vpop.f32.mrb[0].mxu0
    %1062 = vmatprep.mubr.f32.mxu0 0.0
    %1063 = vmatmul.mubr.f32.gmra.mrb[0].mxu0 %v939
    %v1064 = vpop.f32.mrb[0].mxu0
    %v1065 = vadd.f32 %v79, %v1064
    %v1066 = vpop.f32.mrb[0].mxu0
    %1067 = vmatprep.mubr.f32.mxu0 0.0
    %1068 = vmatmul.mubr.f32.gmra.mrb[0].mxu0 %v942
    %v1069 = vpop.f32.mrb[0].mxu0
    %v1070 = vadd.f32 %v80, %v1069
    %v1071 = vpop.f32.mrb[0].mxu0
    %1072 = vdwg.mxu0
    %v1073 = vsel %vm81, %v1035, -inf
    %1074 = vmax.xlane.f32.xlu0 %v1073
    %v1075 = vpop.xlane.xlu0 %1074
    %v1076 = vsel %vm81, %v1040, -inf
    %1077 = vmax.xlane.f32.xlu0 %v1076
    %v1078 = vpop.xlane.xlu0 %1077
    %v1079 = vsel %vm81, %v1045, -inf
    %1080 = vmax.xlane.f32.xlu0 %v1079
    %v1081 = vpop.xlane.xlu0 %1080
    %v1082 = vsel %vm81, %v1050, -inf
    %1083 = vmax.xlane.f32.xlu0 %v1082
    %v1084 = vpop.xlane.xlu0 %1083
    %v1085 = vsel %vm81, %v1055, -inf
    %1086 = vmax.xlane.f32.xlu0 %v1085
    %v1087 = vpop.xlane.xlu0 %1086
    %v1088 = vsel %vm81, %v1060, -inf
    %1089 = vmax.xlane.f32.xlu0 %v1088
    %v1090 = vpop.xlane.xlu0 %1089
    %v1091 = vsel %vm81, %v1065, -inf
    %1092 = vmax.xlane.f32.xlu0 %v1091
    %v1093 = vpop.xlane.xlu0 %1092
    %v1094 = vsel %vm81, %v1070, -inf
    %1095 = vmax.xlane.f32.xlu0 %v1094
    %v1096 = vpop.xlane.xlu0 %1095
    %v1097 = vsub.f32 %v1035, %v1075
    %v1098 = vsub.f32 %v1040, %v1078
    %v1099 = vsub.f32 %v1045, %v1081
    %v1100 = vsub.f32 %v1050, %v1084
    %v1101 = vsub.f32 %v1055, %v1087
    %v1102 = vsub.f32 %v1060, %v1090
    %v1103 = vsub.f32 %v1065, %v1093
    %v1104 = vsub.f32 %v1070, %v1096
    %v1105 = vmul.f32 %v1097, 1.442695
    %v1106 = vpow.pop %v1105
    %v1107 = vmul.f32 %v1098, 1.442695
    %v1108 = vpow.pop %v1107
    %v1109 = vmul.f32 %v1099, 1.442695
    %v1110 = vpow.pop %v1109
    %v1111 = vmul.f32 %v1100, 1.442695
    %v1112 = vpow.pop %v1111
    %v1113 = vmul.f32 %v1101, 1.442695
    %v1114 = vpow.pop %v1113
    %v1115 = vmul.f32 %v1102, 1.442695
    %v1116 = vpow.pop %v1115
    %v1117 = vmul.f32 %v1103, 1.442695
    %v1118 = vpow.pop %v1117
    %v1119 = vmul.f32 %v1104, 1.442695
    %v1120 = vpow.pop %v1119
    %v1121 = vsel %vm81, %v1106, 0.0
    %1122 = vadd.xlane.f32.xlu0 %v1121
    %v1123 = vpop.xlane.xlu0 %1122
    %v1124 = vsel %vm81, %v1108, 0.0
    %1125 = vadd.xlane.f32.xlu0 %v1124
    %v1126 = vpop.xlane.xlu0 %1125
    %v1127 = vsel %vm81, %v1110, 0.0
    %1128 = vadd.xlane.f32.xlu0 %v1127
    %v1129 = vpop.xlane.xlu0 %1128
    %v1130 = vsel %vm81, %v1112, 0.0
    %1131 = vadd.xlane.f32.xlu0 %v1130
    %v1132 = vpop.xlane.xlu0 %1131
    %v1133 = vsel %vm81, %v1114, 0.0
    %1134 = vadd.xlane.f32.xlu0 %v1133
    %v1135 = vpop.xlane.xlu0 %1134
    %v1136 = vsel %vm81, %v1116, 0.0
    %1137 = vadd.xlane.f32.xlu0 %v1136
    %v1138 = vpop.xlane.xlu0 %1137
    %v1139 = vsel %vm81, %v1118, 0.0
    %1140 = vadd.xlane.f32.xlu0 %v1139
    %v1141 = vpop.xlane.xlu0 %1140
    %v1142 = vsel %vm81, %v1120, 0.0
    %1143 = vadd.xlane.f32.xlu0 %v1142
    %v1144 = vpop.xlane.xlu0 %1143
    %v1145 = vrcp.pop %v1123
    %v1146 = vrcp.pop %v1126
    %v1147 = vrcp.pop %v1129
    %v1148 = vrcp.pop %v1132
    %v1149 = vrcp.pop %v1135
    %v1150 = vrcp.pop %v1138
    %v1151 = vrcp.pop %v1141
    %v1152 = vrcp.pop %v1144
    %v1153 = vmul.f32 %v1106, %v1145
    %v1154 = vmul.f32 %v1108, %v1146
    %v1155 = vmul.f32 %v1110, %v1147
    %v1156 = vmul.f32 %v1112, %v1148
    %v1157 = vmul.f32 %v1114, %v1149
    %v1158 = vmul.f32 %v1116, %v1150
    %v1159 = vmul.f32 %v1118, %v1151
    %v1160 = vmul.f32 %v1120, %v1152
    %v1161 = vmul.f32 %v867, %v910
    %v1162 = vmul.f32 %v872, %v910
    %v1163 = vmul.f32 %v877, %v910
    %v1164 = vmul.f32 %v882, %v910
    %v1165 = vmul.f32 %v887, %v910
    %v1166 = vmul.f32 %v892, %v910
    %v1167 = vmul.f32 %v897, %v910
    %v1168 = vmul.f32 %v902, %v910
    %s1169 = scalar_lea.vmem %s6, 1
    %v1170 = vld [vmem:[%s1169] sm:$0x1]
    %v1172 = vlaneseq
    %v1173 = vshrl.u32 %v1172, 7
    %v1174 = vsub.s32 0, %v1173
    %v1175 = vrot.slane %v1170, %v1174
    %v1177 = vmul.f32 %v751, %v1175
    %v1178 = vmul.f32 %v756, %v1175
    %v1179 = vmul.f32 %v761, %v1175
    %v1180 = vmul.f32 %v766, %v1175
    %v1181 = vmul.f32 %v771, %v1175
    %v1182 = vmul.f32 %v776, %v1175
    %v1183 = vmul.f32 %v781, %v1175
    %v1184 = vmul.f32 %v786, %v1175
    %v1186 = vsel %vm211, %v1177, 0
    %v1189 = vsel %vm211, %v1178, 0
    %v1192 = vsel %vm211, %v1179, 0
    %v1195 = vsel %vm211, %v1180, 0
    %v1198 = vsel %vm211, %v1181, 0
    %v1201 = vsel %vm211, %v1182, 0
    %v1204 = vsel %vm211, %v1183, 0
    %v1207 = vsel %vm211, %v1184, 0
    %1209 = vmatprep.subr.mxu0 0.0
    %1210 = vmatpush1.xpose.msra.mxu0 %v1186
    %1211 = vmatprep.subr.mxu0 0.0
    %1212 = vmatpush1.xpose.msra.mxu0 %v1189
    %1213 = vmatprep.subr.mxu0 0.0
    %1214 = vmatpush1.xpose.msra.mxu0 %v1192
    %1215 = vmatprep.subr.mxu0 0.0
    %1216 = vmatpush1.xpose.msra.mxu0 %v1195
    %1217 = vmatprep.subr.mxu0 0.0
    %1218 = vmatpush1.xpose.msra.mxu0 %v1198
    %1219 = vmatprep.subr.mxu0 0.0
    %1220 = vmatpush1.xpose.msra.mxu0 %v1201
    %1221 = vmatprep.subr.mxu0 0.0
    %1222 = vmatpush1.xpose.msra.mxu0 %v1204
    %1223 = vmatprep.subr.mxu0 0.0
    %1224 = vmatpush1.xpose.msra.mxu0 %v1207
    %1225 = vmatprep.subr.mxu0 0.0
    %1226 = vmatpush1.xpose.msra.mxu0 0.0
    %1227 = vmatprep.subr.mxu0 0.0
    %1228 = vmatpush1.xpose.msra.mxu0 0.0
    %1229 = vmatprep.subr.mxu0 0.0
    %1230 = vmatpush1.xpose.msra.mxu0 0.0
    %1231 = vmatprep.subr.mxu0 0.0
    %1232 = vmatpush1.xpose.msra.mxu0 0.0
    %1233 = vmatprep.subr.mxu0 0.0
    %1234 = vmatpush1.xpose.msra.mxu0 0.0
    %1235 = vmatprep.subr.mxu0 0.0
    %1236 = vmatpush1.xpose.msra.mxu0 0.0
    %1237 = vmatprep.subr.mxu0 0.0
    %1238 = vmatpush1.xpose.msra.mxu0 0.0
    %1239 = vmatprep.subr.mxu0 0.0
    %1240 = vmatpush1.xpose.msra.mxu0 0.0
    %1241 = vmatprep.subr.mxu0 0.0
    %1242 = vmatpush1.xpose.msra.mxu0 0.0
    %1243 = vmatprep.subr.mxu0 0.0
    %1244 = vmatpush1.xpose.msra.mxu0 0.0
    %1245 = vmatprep.subr.mxu0 0.0
    %1246 = vmatpush1.xpose.msra.mxu0 0.0
    %1247 = vmatprep.subr.mxu0 0.0
    %1248 = vmatpush1.xpose.msra.mxu0 0.0
    %1249 = vmatprep.subr.mxu0 0.0
    %1250 = vmatpush1.xpose.msra.mxu0 0.0
    %1251 = vmatprep.subr.mxu0 0.0
    %1252 = vmatpush1.xpose.msra.mxu0 0.0
    %1253 = vmatprep.subr.mxu0 0.0
    %1254 = vmatpush1.xpose.msra.mxu0 0.0
    %1255 = vmatprep.subr.mxu0 0.0
    %1256 = vmatpush1.xpose.msra.mxu0 0.0
    %1257 = vmatprep.subr.mxu0 0.0
    %1258 = vmatpush1.xpose.msra.mxu0 0.0
    %1259 = vmatprep.subr.mxu0 0.0
    %1260 = vmatpush1.xpose.msra.mxu0 0.0
    %1261 = vmatprep.subr.mxu0 0.0
    %1262 = vmatpush1.xpose.msra.mxu0 0.0
    %1263 = vmatprep.subr.mxu0 0.0
    %1264 = vmatpush1.xpose.msra.mxu0 0.0
    %1265 = vmatprep.subr.mxu0 0.0
    %1266 = vmatpush1.xpose.msra.mxu0 0.0
    %1267 = vmatprep.subr.mxu0 0.0
    %1268 = vmatpush1.xpose.msra.mxu0 0.0
    %1269 = vmatprep.subr.mxu0 0.0
    %1270 = vmatpush1.xpose.msra.mxu0 0.0
    %1271 = vmatprep.subr.mxu0 0.0
    %1272 = vmatpush1.xpose.msra.mxu0 0.0
    %1273 = vmatprep.mubr.f32.mxu0 0.0
    %1274 = vmatmul.mubr.f32.gmra.mrb[0].mxu0 %v921
    %v1275 = vpop.f32.mrb[0].mxu0
    %v1276 = vadd.f32 %v73, %v1275
    %v1277 = vpop.f32.mrb[0].mxu0
    %1278 = vmatprep.mubr.f32.mxu0 0.0
    %1279 = vmatmul.mubr.f32.gmra.mrb[0].mxu0 %v924
    %v1280 = vpop.f32.mrb[0].mxu0
    %v1281 = vadd.f32 %v74, %v1280
    %v1282 = vpop.f32.mrb[0].mxu0
    %1283 = vmatprep.mubr.f32.mxu0 0.0
    %1284 = vmatmul.mubr.f32.gmra.mrb[0].mxu0 %v927
    %v1285 = vpop.f32.mrb[0].mxu0
    %v1286 = vadd.f32 %v75, %v1285
    %v1287 = vpop.f32.mrb[0].mxu0
    %1288 = vmatprep.mubr.f32.mxu0 0.0
    %1289 = vmatmul.mubr.f32.gmra.mrb[0].mxu0 %v930
    %v1290 = vpop.f32.mrb[0].mxu0
    %v1291 = vadd.f32 %v76, %v1290
    %v1292 = vpop.f32.mrb[0].mxu0
    %1293 = vmatprep.mubr.f32.mxu0 0.0
    %1294 = vmatmul.mubr.f32.gmra.mrb[0].mxu0 %v933
    %v1295 = vpop.f32.mrb[0].mxu0
    %v1296 = vadd.f32 %v77, %v1295
    %v1297 = vpop.f32.mrb[0].mxu0
    %1298 = vmatprep.mubr.f32.mxu0 0.0
    %1299 = vmatmul.mubr.f32.gmra.mrb[0].mxu0 %v936
    %v1300 = vpop.f32.mrb[0].mxu0
    %v1301 = vadd.f32 %v78, %v1300
    %v1302 = vpop.f32.mrb[0].mxu0
    %1303 = vmatprep.mubr.f32.mxu0 0.0
    %1304 = vmatmul.mubr.f32.gmra.mrb[0].mxu0 %v939
    %v1305 = vpop.f32.mrb[0].mxu0
    %v1306 = vadd.f32 %v79, %v1305
    %v1307 = vpop.f32.mrb[0].mxu0
    %1308 = vmatprep.mubr.f32.mxu0 0.0
    %1309 = vmatmul.mubr.f32.gmra.mrb[0].mxu0 %v942
    %v1310 = vpop.f32.mrb[0].mxu0
    %v1311 = vadd.f32 %v80, %v1310
    %v1312 = vpop.f32.mrb[0].mxu0
    %1313 = vdwg.mxu0
    %v1314 = vsel %vm81, %v1276, -inf
    %1315 = vmax.xlane.f32.xlu0 %v1314
    %v1316 = vpop.xlane.xlu0 %1315
    %v1317 = vsel %vm81, %v1281, -inf
    %1318 = vmax.xlane.f32.xlu0 %v1317
    %v1319 = vpop.xlane.xlu0 %1318
    %v1320 = vsel %vm81, %v1286, -inf
    %1321 = vmax.xlane.f32.xlu0 %v1320
    %v1322 = vpop.xlane.xlu0 %1321
    %v1323 = vsel %vm81, %v1291, -inf
    %1324 = vmax.xlane.f32.xlu0 %v1323
    %v1325 = vpop.xlane.xlu0 %1324
    %v1326 = vsel %vm81, %v1296, -inf
    %1327 = vmax.xlane.f32.xlu0 %v1326
    %v1328 = vpop.xlane.xlu0 %1327
    %v1329 = vsel %vm81, %v1301, -inf
    %1330 = vmax.xlane.f32.xlu0 %v1329
    %v1331 = vpop.xlane.xlu0 %1330
    %v1332 = vsel %vm81, %v1306, -inf
    %1333 = vmax.xlane.f32.xlu0 %v1332
    %v1334 = vpop.xlane.xlu0 %1333
    %v1335 = vsel %vm81, %v1311, -inf
    %1336 = vmax.xlane.f32.xlu0 %v1335
    %v1337 = vpop.xlane.xlu0 %1336
    %v1338 = vsub.f32 %v1276, %v1316
    %v1339 = vsub.f32 %v1281, %v1319
    %v1340 = vsub.f32 %v1286, %v1322
    %v1341 = vsub.f32 %v1291, %v1325
    %v1342 = vsub.f32 %v1296, %v1328
    %v1343 = vsub.f32 %v1301, %v1331
    %v1344 = vsub.f32 %v1306, %v1334
    %v1345 = vsub.f32 %v1311, %v1337
    %v1346 = vmul.f32 %v1338, 1.442695
    %v1347 = vpow.pop %v1346
    %v1348 = vmul.f32 %v1339, 1.442695
    %v1349 = vpow.pop %v1348
    %v1350 = vmul.f32 %v1340, 1.442695
    %v1351 = vpow.pop %v1350
    %v1352 = vmul.f32 %v1341, 1.442695
    %v1353 = vpow.pop %v1352
    %v1354 = vmul.f32 %v1342, 1.442695
    %v1355 = vpow.pop %v1354
    %v1356 = vmul.f32 %v1343, 1.442695
    %v1357 = vpow.pop %v1356
    %v1358 = vmul.f32 %v1344, 1.442695
    %v1359 = vpow.pop %v1358
    %v1360 = vmul.f32 %v1345, 1.442695
    %v1361 = vpow.pop %v1360
    %v1362 = vsel %vm81, %v1347, 0.0
    %1363 = vadd.xlane.f32.xlu0 %v1362
    %v1364 = vpop.xlane.xlu0 %1363
    %v1365 = vsel %vm81, %v1349, 0.0
    %1366 = vadd.xlane.f32.xlu0 %v1365
    %v1367 = vpop.xlane.xlu0 %1366
    %v1368 = vsel %vm81, %v1351, 0.0
    %1369 = vadd.xlane.f32.xlu0 %v1368
    %v1370 = vpop.xlane.xlu0 %1369
    %v1371 = vsel %vm81, %v1353, 0.0
    %1372 = vadd.xlane.f32.xlu0 %v1371
    %v1373 = vpop.xlane.xlu0 %1372
    %v1374 = vsel %vm81, %v1355, 0.0
    %1375 = vadd.xlane.f32.xlu0 %v1374
    %v1376 = vpop.xlane.xlu0 %1375
    %v1377 = vsel %vm81, %v1357, 0.0
    %1378 = vadd.xlane.f32.xlu0 %v1377
    %v1379 = vpop.xlane.xlu0 %1378
    %v1380 = vsel %vm81, %v1359, 0.0
    %1381 = vadd.xlane.f32.xlu0 %v1380
    %v1382 = vpop.xlane.xlu0 %1381
    %v1383 = vsel %vm81, %v1361, 0.0
    %1384 = vadd.xlane.f32.xlu0 %v1383
    %v1385 = vpop.xlane.xlu0 %1384
    %v1386 = vrcp.pop %v1364
    %v1387 = vrcp.pop %v1367
    %v1388 = vrcp.pop %v1370
    %v1389 = vrcp.pop %v1373
    %v1390 = vrcp.pop %v1376
    %v1391 = vrcp.pop %v1379
    %v1392 = vrcp.pop %v1382
    %v1393 = vrcp.pop %v1385
    %v1394 = vmul.f32 %v1347, %v1386
    %v1395 = vmul.f32 %v1349, %v1387
    %v1396 = vmul.f32 %v1351, %v1388
    %v1397 = vmul.f32 %v1353, %v1389
    %v1398 = vmul.f32 %v1355, %v1390
    %v1399 = vmul.f32 %v1357, %v1391
    %v1400 = vmul.f32 %v1359, %v1392
    %v1401 = vmul.f32 %v1361, %v1393
    %v1402 = vmul.f32 %v867, %v1175
    %v1403 = vmul.f32 %v872, %v1175
    %v1404 = vmul.f32 %v877, %v1175
    %v1405 = vmul.f32 %v882, %v1175
    %v1406 = vmul.f32 %v887, %v1175
    %v1407 = vmul.f32 %v892, %v1175
    %v1408 = vmul.f32 %v897, %v1175
    %v1409 = vmul.f32 %v902, %v1175
    %v1411 = vsel %vm81, %v1394, 0
    %v1414 = vsel %vm81, %v1395, 0
    %v1417 = vsel %vm81, %v1396, 0
    %v1420 = vsel %vm81, %v1397, 0
    %v1423 = vsel %vm81, %v1398, 0
    %v1426 = vsel %vm81, %v1399, 0
    %v1429 = vsel %vm81, %v1400, 0
    %v1432 = vsel %vm81, %v1401, 0
    %1434 = vmatprep.subr.mxu0 0.0
    %1435 = vmatpush1.msra.mxu0 %v1402
    %1436 = vmatprep.subr.mxu0 0.0
    %1437 = vmatpush1.msra.mxu0 %v1403
    %1438 = vmatprep.subr.mxu0 0.0
    %1439 = vmatpush1.msra.mxu0 %v1404
    %1440 = vmatprep.subr.mxu0 0.0
    %1441 = vmatpush1.msra.mxu0 %v1405
    %1442 = vmatprep.subr.mxu0 0.0
    %1443 = vmatpush1.msra.mxu0 %v1406
    %1444 = vmatprep.subr.mxu0 0.0
    %1445 = vmatpush1.msra.mxu0 %v1407
    %1446 = vmatprep.subr.mxu0 0.0
    %1447 = vmatpush1.msra.mxu0 %v1408
    %1448 = vmatprep.subr.mxu0 0.0
    %1449 = vmatpush1.msra.mxu0 %v1409
    %1450 = vmatprep.subr.mxu0 0.0
    %1451 = vmatpush1.msra.mxu0 0.0
    %1452 = vmatprep.subr.mxu0 0.0
    %1453 = vmatpush1.msra.mxu0 0.0
    %1454 = vmatprep.subr.mxu0 0.0
    %1455 = vmatpush1.msra.mxu0 0.0
    %1456 = vmatprep.subr.mxu0 0.0
    %1457 = vmatpush1.msra.mxu0 0.0
    %1458 = vmatprep.subr.mxu0 0.0
    %1459 = vmatpush1.msra.mxu0 0.0
    %1460 = vmatprep.subr.mxu0 0.0
    %1461 = vmatpush1.msra.mxu0 0.0
    %1462 = vmatprep.subr.mxu0 0.0
    %1463 = vmatpush1.msra.mxu0 0.0
    %1464 = vmatprep.subr.mxu0 0.0
    %1465 = vmatpush1.msra.mxu0 0.0
    %1466 = vmatprep.subr.mxu0 0.0
    %1467 = vmatpush1.msra.mxu0 0.0
    %1468 = vmatprep.subr.mxu0 0.0
    %1469 = vmatpush1.msra.mxu0 0.0
    %1470 = vmatprep.subr.mxu0 0.0
    %1471 = vmatpush1.msra.mxu0 0.0
    %1472 = vmatprep.subr.mxu0 0.0
    %1473 = vmatpush1.msra.mxu0 0.0
    %1474 = vmatprep.subr.mxu0 0.0
    %1475 = vmatpush1.msra.mxu0 0.0
    %1476 = vmatprep.subr.mxu0 0.0
    %1477 = vmatpush1.msra.mxu0 0.0
    %1478 = vmatprep.subr.mxu0 0.0
    %1479 = vmatpush1.msra.mxu0 0.0
    %1480 = vmatprep.subr.mxu0 0.0
    %1481 = vmatpush1.msra.mxu0 0.0
    %1482 = vmatprep.subr.mxu0 0.0
    %1483 = vmatpush1.msra.mxu0 0.0
    %1484 = vmatprep.subr.mxu0 0.0
    %1485 = vmatpush1.msra.mxu0 0.0
    %1486 = vmatprep.subr.mxu0 0.0
    %1487 = vmatpush1.msra.mxu0 0.0
    %1488 = vmatprep.subr.mxu0 0.0
    %1489 = vmatpush1.msra.mxu0 0.0
    %1490 = vmatprep.subr.mxu0 0.0
    %1491 = vmatpush1.msra.mxu0 0.0
    %1492 = vmatprep.subr.mxu0 0.0
    %1493 = vmatpush1.msra.mxu0 0.0
    %1494 = vmatprep.subr.mxu0 0.0
    %1495 = vmatpush1.msra.mxu0 0.0
    %1496 = vmatprep.subr.mxu0 0.0
    %1497 = vmatpush1.msra.mxu0 0.0
    %1498 = vmatprep.mubr.f32.mxu0 0.0
    %1499 = vmatmul.mubr.f32.gmra.mrb[0].mxu0 %v1411
    %v1500 = vpop.f32.mrb[0].mxu0
    %v1501 = vadd.f32 0.0, %v1500
    %v1502 = vpop.f32.mrb[0].mxu0
    %1503 = vmatprep.mubr.f32.mxu0 0.0
    %1504 = vmatmul.mubr.f32.gmra.mrb[0].mxu0 %v1414
    %v1505 = vpop.f32.mrb[0].mxu0
    %v1506 = vadd.f32 0.0, %v1505
    %v1507 = vpop.f32.mrb[0].mxu0
    %1508 = vmatprep.mubr.f32.mxu0 0.0
    %1509 = vmatmul.mubr.f32.gmra.mrb[0].mxu0 %v1417
    %v1510 = vpop.f32.mrb[0].mxu0
    %v1511 = vadd.f32 0.0, %v1510
    %v1512 = vpop.f32.mrb[0].mxu0
    %1513 = vmatprep.mubr.f32.mxu0 0.0
    %1514 = vmatmul.mubr.f32.gmra.mrb[0].mxu0 %v1420
    %v1515 = vpop.f32.mrb[0].mxu0
    %v1516 = vadd.f32 0.0, %v1515
    %v1517 = vpop.f32.mrb[0].mxu0
    %1518 = vmatprep.mubr.f32.mxu0 0.0
    %1519 = vmatmul.mubr.f32.gmra.mrb[0].mxu0 %v1423
    %v1520 = vpop.f32.mrb[0].mxu0
    %v1521 = vadd.f32 0.0, %v1520
    %v1522 = vpop.f32.mrb[0].mxu0
    %1523 = vmatprep.mubr.f32.mxu0 0.0
    %1524 = vmatmul.mubr.f32.gmra.mrb[0].mxu0 %v1426
    %v1525 = vpop.f32.mrb[0].mxu0
    %v1526 = vadd.f32 0.0, %v1525
    %v1527 = vpop.f32.mrb[0].mxu0
    %1528 = vmatprep.mubr.f32.mxu0 0.0
    %1529 = vmatmul.mubr.f32.gmra.mrb[0].mxu0 %v1429
    %v1530 = vpop.f32.mrb[0].mxu0
    %v1531 = vadd.f32 0.0, %v1530
    %v1532 = vpop.f32.mrb[0].mxu0
    %1533 = vmatprep.mubr.f32.mxu0 0.0
    %1534 = vmatmul.mubr.f32.gmra.mrb[0].mxu0 %v1432
    %v1535 = vpop.f32.mrb[0].mxu0
    %v1536 = vadd.f32 0.0, %v1535
    %v1537 = vpop.f32.mrb[0].mxu0
    %1538 = vdwg.mxu0
    %v1540 = vsel %vm81, %v1153, 0
    %v1543 = vsel %vm81, %v1154, 0
    %v1546 = vsel %vm81, %v1155, 0
    %v1549 = vsel %vm81, %v1156, 0
    %v1552 = vsel %vm81, %v1157, 0
    %v1555 = vsel %vm81, %v1158, 0
    %v1558 = vsel %vm81, %v1159, 0
    %v1561 = vsel %vm81, %v1160, 0
    %1563 = vmatprep.subr.mxu0 0.0
    %1564 = vmatpush1.msra.mxu0 %v1161
    %1565 = vmatprep.subr.mxu0 0.0
    %1566 = vmatpush1.msra.mxu0 %v1162
    %1567 = vmatprep.subr.mxu0 0.0
    %1568 = vmatpush1.msra.mxu0 %v1163
    %1569 = vmatprep.subr.mxu0 0.0
    %1570 = vmatpush1.msra.mxu0 %v1164
    %1571 = vmatprep.subr.mxu0 0.0
    %1572 = vmatpush1.msra.mxu0 %v1165
    %1573 = vmatprep.subr.mxu0 0.0
    %1574 = vmatpush1.msra.mxu0 %v1166
    %1575 = vmatprep.subr.mxu0 0.0
    %1576 = vmatpush1.msra.mxu0 %v1167
    %1577 = vmatprep.subr.mxu0 0.0
    %1578 = vmatpush1.msra.mxu0 %v1168
    %1579 = vmatprep.subr.mxu0 0.0
    %1580 = vmatpush1.msra.mxu0 0.0
    %1581 = vmatprep.subr.mxu0 0.0
    %1582 = vmatpush1.msra.mxu0 0.0
    %1583 = vmatprep.subr.mxu0 0.0
    %1584 = vmatpush1.msra.mxu0 0.0
    %1585 = vmatprep.subr.mxu0 0.0
    %1586 = vmatpush1.msra.mxu0 0.0
    %1587 = vmatprep.subr.mxu0 0.0
    %1588 = vmatpush1.msra.mxu0 0.0
    %1589 = vmatprep.subr.mxu0 0.0
    %1590 = vmatpush1.msra.mxu0 0.0
    %1591 = vmatprep.subr.mxu0 0.0
    %1592 = vmatpush1.msra.mxu0 0.0
    %1593 = vmatprep.subr.mxu0 0.0
    %1594 = vmatpush1.msra.mxu0 0.0
    %1595 = vmatprep.subr.mxu0 0.0
    %1596 = vmatpush1.msra.mxu0 0.0
    %1597 = vmatprep.subr.mxu0 0.0
    %1598 = vmatpush1.msra.mxu0 0.0
    %1599 = vmatprep.subr.mxu0 0.0
    %1600 = vmatpush1.msra.mxu0 0.0
    %1601 = vmatprep.subr.mxu0 0.0
    %1602 = vmatpush1.msra.mxu0 0.0
    %1603 = vmatprep.subr.mxu0 0.0
    %1604 = vmatpush1.msra.mxu0 0.0
    %1605 = vmatprep.subr.mxu0 0.0
    %1606 = vmatpush1.msra.mxu0 0.0
    %1607 = vmatprep.subr.mxu0 0.0
    %1608 = vmatpush1.msra.mxu0 0.0
    %1609 = vmatprep.subr.mxu0 0.0
    %1610 = vmatpush1.msra.mxu0 0.0
    %1611 = vmatprep.subr.mxu0 0.0
    %1612 = vmatpush1.msra.mxu0 0.0
    %1613 = vmatprep.subr.mxu0 0.0
    %1614 = vmatpush1.msra.mxu0 0.0
    %1615 = vmatprep.subr.mxu0 0.0
    %1616 = vmatpush1.msra.mxu0 0.0
    %1617 = vmatprep.subr.mxu0 0.0
    %1618 = vmatpush1.msra.mxu0 0.0
    %1619 = vmatprep.subr.mxu0 0.0
    %1620 = vmatpush1.msra.mxu0 0.0
    %1621 = vmatprep.subr.mxu0 0.0
    %1622 = vmatpush1.msra.mxu0 0.0
    %1623 = vmatprep.subr.mxu0 0.0
    %1624 = vmatpush1.msra.mxu0 0.0
    %1625 = vmatprep.subr.mxu0 0.0
    %1626 = vmatpush1.msra.mxu0 0.0
    %1627 = vmatprep.mubr.f32.mxu0 0.0
    %1628 = vmatmul.mubr.f32.gmra.mrb[0].mxu0 %v1540
    %v1629 = vpop.f32.mrb[0].mxu0
    %v1630 = vadd.f32 %v1501, %v1629
    %v1631 = vpop.f32.mrb[0].mxu0
    %1632 = vmatprep.mubr.f32.mxu0 0.0
    %1633 = vmatmul.mubr.f32.gmra.mrb[0].mxu0 %v1543
    %v1634 = vpop.f32.mrb[0].mxu0
    %v1635 = vadd.f32 %v1506, %v1634
    %v1636 = vpop.f32.mrb[0].mxu0
    %1637 = vmatprep.mubr.f32.mxu0 0.0
    %1638 = vmatmul.mubr.f32.gmra.mrb[0].mxu0 %v1546
    %v1639 = vpop.f32.mrb[0].mxu0
    %v1640 = vadd.f32 %v1511, %v1639
    %v1641 = vpop.f32.mrb[0].mxu0
    %1642 = vmatprep.mubr.f32.mxu0 0.0
    %1643 = vmatmul.mubr.f32.gmra.mrb[0].mxu0 %v1549
    %v1644 = vpop.f32.mrb[0].mxu0
    %v1645 = vadd.f32 %v1516, %v1644
    %v1646 = vpop.f32.mrb[0].mxu0
    %1647 = vmatprep.mubr.f32.mxu0 0.0
    %1648 = vmatmul.mubr.f32.gmra.mrb[0].mxu0 %v1552
    %v1649 = vpop.f32.mrb[0].mxu0
    %v1650 = vadd.f32 %v1521, %v1649
    %v1651 = vpop.f32.mrb[0].mxu0
    %1652 = vmatprep.mubr.f32.mxu0 0.0
    %1653 = vmatmul.mubr.f32.gmra.mrb[0].mxu0 %v1555
    %v1654 = vpop.f32.mrb[0].mxu0
    %v1655 = vadd.f32 %v1526, %v1654
    %v1656 = vpop.f32.mrb[0].mxu0
    %1657 = vmatprep.mubr.f32.mxu0 0.0
    %1658 = vmatmul.mubr.f32.gmra.mrb[0].mxu0 %v1558
    %v1659 = vpop.f32.mrb[0].mxu0
    %v1660 = vadd.f32 %v1531, %v1659
    %v1661 = vpop.f32.mrb[0].mxu0
    %1662 = vmatprep.mubr.f32.mxu0 0.0
    %1663 = vmatmul.mubr.f32.gmra.mrb[0].mxu0 %v1561
    %v1664 = vpop.f32.mrb[0].mxu0
    %v1665 = vadd.f32 %v1536, %v1664
    %v1666 = vpop.f32.mrb[0].mxu0
    %1667 = vdwg.mxu0
    %s1668 = scalar_lea.vmem %s6, 2
    %v1669 = vld [vmem:[%s1668] sm:$0x1]
    %v1671 = vlaneseq
    %v1672 = vshrl.u32 %v1671, 7
    %v1673 = vsub.s32 0, %v1672
    %v1674 = vrot.slane %v1669, %v1673
    %v1676 = vmul.f32 %v751, %v1674
    %v1677 = vmul.f32 %v756, %v1674
    %v1678 = vmul.f32 %v761, %v1674
    %v1679 = vmul.f32 %v766, %v1674
    %v1680 = vmul.f32 %v771, %v1674
    %v1681 = vmul.f32 %v776, %v1674
    %v1682 = vmul.f32 %v781, %v1674
    %v1683 = vmul.f32 %v786, %v1674
    %v1685 = vsel %vm211, %v1676, 0
    %v1688 = vsel %vm211, %v1677, 0
    %v1691 = vsel %vm211, %v1678, 0
    %v1694 = vsel %vm211, %v1679, 0
    %v1697 = vsel %vm211, %v1680, 0
    %v1700 = vsel %vm211, %v1681, 0
    %v1703 = vsel %vm211, %v1682, 0
    %v1706 = vsel %vm211, %v1683, 0
    %1708 = vmatprep.subr.mxu0 0.0
    %1709 = vmatpush1.xpose.msra.mxu0 %v1685
    %1710 = vmatprep.subr.mxu0 0.0
    %1711 = vmatpush1.xpose.msra.mxu0 %v1688
    %1712 = vmatprep.subr.mxu0 0.0
    %1713 = vmatpush1.xpose.msra.mxu0 %v1691
    %1714 = vmatprep.subr.mxu0 0.0
    %1715 = vmatpush1.xpose.msra.mxu0 %v1694
    %1716 = vmatprep.subr.mxu0 0.0
    %1717 = vmatpush1.xpose.msra.mxu0 %v1697
    %1718 = vmatprep.subr.mxu0 0.0
    %1719 = vmatpush1.xpose.msra.mxu0 %v1700
    %1720 = vmatprep.subr.mxu0 0.0
    %1721 = vmatpush1.xpose.msra.mxu0 %v1703
    %1722 = vmatprep.subr.mxu0 0.0
    %1723 = vmatpush1.xpose.msra.mxu0 %v1706
    %1724 = vmatprep.subr.mxu0 0.0
    %1725 = vmatpush1.xpose.msra.mxu0 0.0
    %1726 = vmatprep.subr.mxu0 0.0
    %1727 = vmatpush1.xpose.msra.mxu0 0.0
    %1728 = vmatprep.subr.mxu0 0.0
    %1729 = vmatpush1.xpose.msra.mxu0 0.0
    %1730 = vmatprep.subr.mxu0 0.0
    %1731 = vmatpush1.xpose.msra.mxu0 0.0
    %1732 = vmatprep.subr.mxu0 0.0
    %1733 = vmatpush1.xpose.msra.mxu0 0.0
    %1734 = vmatprep.subr.mxu0 0.0
    %1735 = vmatpush1.xpose.msra.mxu0 0.0
    %1736 = vmatprep.subr.mxu0 0.0
    %1737 = vmatpush1.xpose.msra.mxu0 0.0
    %1738 = vmatprep.subr.mxu0 0.0
    %1739 = vmatpush1.xpose.msra.mxu0 0.0
    %1740 = vmatprep.subr.mxu0 0.0
    %1741 = vmatpush1.xpose.msra.mxu0 0.0
    %1742 = vmatprep.subr.mxu0 0.0
    %1743 = vmatpush1.xpose.msra.mxu0 0.0
    %1744 = vmatprep.subr.mxu0 0.0
    %1745 = vmatpush1.xpose.msra.mxu0 0.0
    %1746 = vmatprep.subr.mxu0 0.0
    %1747 = vmatpush1.xpose.msra.mxu0 0.0
    %1748 = vmatprep.subr.mxu0 0.0
    %1749 = vmatpush1.xpose.msra.mxu0 0.0
    %1750 = vmatprep.subr.mxu0 0.0
    %1751 = vmatpush1.xpose.msra.mxu0 0.0
    %1752 = vmatprep.subr.mxu0 0.0
    %1753 = vmatpush1.xpose.msra.mxu0 0.0
    %1754 = vmatprep.subr.mxu0 0.0
    %1755 = vmatpush1.xpose.msra.mxu0 0.0
    %1756 = vmatprep.subr.mxu0 0.0
    %1757 = vmatpush1.xpose.msra.mxu0 0.0
    %1758 = vmatprep.subr.mxu0 0.0
    %1759 = vmatpush1.xpose.msra.mxu0 0.0
    %1760 = vmatprep.subr.mxu0 0.0
    %1761 = vmatpush1.xpose.msra.mxu0 0.0
    %1762 = vmatprep.subr.mxu0 0.0
    %1763 = vmatpush1.xpose.msra.mxu0 0.0
    %1764 = vmatprep.subr.mxu0 0.0
    %1765 = vmatpush1.xpose.msra.mxu0 0.0
    %1766 = vmatprep.subr.mxu0 0.0
    %1767 = vmatpush1.xpose.msra.mxu0 0.0
    %1768 = vmatprep.subr.mxu0 0.0
    %1769 = vmatpush1.xpose.msra.mxu0 0.0
    %1770 = vmatprep.subr.mxu0 0.0
    %1771 = vmatpush1.xpose.msra.mxu0 0.0
    %1772 = vmatprep.mubr.f32.mxu0 0.0
    %1773 = vmatmul.mubr.f32.gmra.mrb[0].mxu0 %v921
    %v1774 = vpop.f32.mrb[0].mxu0
    %v1775 = vadd.f32 %v73, %v1774
    %v1776 = vpop.f32.mrb[0].mxu0
    %1777 = vmatprep.mubr.f32.mxu0 0.0
    %1778 = vmatmul.mubr.f32.gmra.mrb[0].mxu0 %v924
    %v1779 = vpop.f32.mrb[0].mxu0
    %v1780 = vadd.f32 %v74, %v1779
    %v1781 = vpop.f32.mrb[0].mxu0
    %1782 = vmatprep.mubr.f32.mxu0 0.0
    %1783 = vmatmul.mubr.f32.gmra.mrb[0].mxu0 %v927
    %v1784 = vpop.f32.mrb[0].mxu0
    %v1785 = vadd.f32 %v75, %v1784
    %v1786 = vpop.f32.mrb[0].mxu0
    %1787 = vmatprep.mubr.f32.mxu0 0.0
    %1788 = vmatmul.mubr.f32.gmra.mrb[0].mxu0 %v930
    %v1789 = vpop.f32.mrb[0].mxu0
    %v1790 = vadd.f32 %v76, %v1789
    %v1791 = vpop.f32.mrb[0].mxu0
    %1792 = vmatprep.mubr.f32.mxu0 0.0
    %1793 = vmatmul.mubr.f32.gmra.mrb[0].mxu0 %v933
    %v1794 = vpop.f32.mrb[0].mxu0
    %v1795 = vadd.f32 %v77, %v1794
    %v1796 = vpop.f32.mrb[0].mxu0
    %1797 = vmatprep.mubr.f32.mxu0 0.0
    %1798 = vmatmul.mubr.f32.gmra.mrb[0].mxu0 %v936
    %v1799 = vpop.f32.mrb[0].mxu0
    %v1800 = vadd.f32 %v78, %v1799
    %v1801 = vpop.f32.mrb[0].mxu0
    %1802 = vmatprep.mubr.f32.mxu0 0.0
    %1803 = vmatmul.mubr.f32.gmra.mrb[0].mxu0 %v939
    %v1804 = vpop.f32.mrb[0].mxu0
    %v1805 = vadd.f32 %v79, %v1804
    %v1806 = vpop.f32.mrb[0].mxu0
    %1807 = vmatprep.mubr.f32.mxu0 0.0
    %1808 = vmatmul.mubr.f32.gmra.mrb[0].mxu0 %v942
    %v1809 = vpop.f32.mrb[0].mxu0
    %v1810 = vadd.f32 %v80, %v1809
    %v1811 = vpop.f32.mrb[0].mxu0
    %1812 = vdwg.mxu0
    %v1813 = vsel %vm81, %v1775, -inf
    %1814 = vmax.xlane.f32.xlu0 %v1813
    %v1815 = vpop.xlane.xlu0 %1814
    %v1816 = vsel %vm81, %v1780, -inf
    %1817 = vmax.xlane.f32.xlu0 %v1816
    %v1818 = vpop.xlane.xlu0 %1817
    %v1819 = vsel %vm81, %v1785, -inf
    %1820 = vmax.xlane.f32.xlu0 %v1819
    %v1821 = vpop.xlane.xlu0 %1820
    %v1822 = vsel %vm81, %v1790, -inf
    %1823 = vmax.xlane.f32.xlu0 %v1822
    %v1824 = vpop.xlane.xlu0 %1823
    %v1825 = vsel %vm81, %v1795, -inf
    %1826 = vmax.xlane.f32.xlu0 %v1825
    %v1827 = vpop.xlane.xlu0 %1826
    %v1828 = vsel %vm81, %v1800, -inf
    %1829 = vmax.xlane.f32.xlu0 %v1828
    %v1830 = vpop.xlane.xlu0 %1829
    %v1831 = vsel %vm81, %v1805, -inf
    %1832 = vmax.xlane.f32.xlu0 %v1831
    %v1833 = vpop.xlane.xlu0 %1832
    %v1834 = vsel %vm81, %v1810, -inf
    %1835 = vmax.xlane.f32.xlu0 %v1834
    %v1836 = vpop.xlane.xlu0 %1835
    %v1837 = vsub.f32 %v1775, %v1815
    %v1838 = vsub.f32 %v1780, %v1818
    %v1839 = vsub.f32 %v1785, %v1821
    %v1840 = vsub.f32 %v1790, %v1824
    %v1841 = vsub.f32 %v1795, %v1827
    %v1842 = vsub.f32 %v1800, %v1830
    %v1843 = vsub.f32 %v1805, %v1833
    %v1844 = vsub.f32 %v1810, %v1836
    %v1845 = vmul.f32 %v1837, 1.442695
    %v1846 = vpow.pop %v1845
    %v1847 = vmul.f32 %v1838, 1.442695
    %v1848 = vpow.pop %v1847
    %v1849 = vmul.f32 %v1839, 1.442695
    %v1850 = vpow.pop %v1849
    %v1851 = vmul.f32 %v1840, 1.442695
    %v1852 = vpow.pop %v1851
    %v1853 = vmul.f32 %v1841, 1.442695
    %v1854 = vpow.pop %v1853
    %v1855 = vmul.f32 %v1842, 1.442695
    %v1856 = vpow.pop %v1855
    %v1857 = vmul.f32 %v1843, 1.442695
    %v1858 = vpow.pop %v1857
    %v1859 = vmul.f32 %v1844, 1.442695
    %v1860 = vpow.pop %v1859
    %v1861 = vsel %vm81, %v1846, 0.0
    %1862 = vadd.xlane.f32.xlu0 %v1861
    %v1863 = vpop.xlane.xlu0 %1862
    %v1864 = vsel %vm81, %v1848, 0.0
    %1865 = vadd.xlane.f32.xlu0 %v1864
    %v1866 = vpop.xlane.xlu0 %1865
    %v1867 = vsel %vm81, %v1850, 0.0
    %1868 = vadd.xlane.f32.xlu0 %v1867
    %v1869 = vpop.xlane.xlu0 %1868
    %v1870 = vsel %vm81, %v1852, 0.0
    %1871 = vadd.xlane.f32.xlu0 %v1870
    %v1872 = vpop.xlane.xlu0 %1871
    %v1873 = vsel %vm81, %v1854, 0.0
    %1874 = vadd.xlane.f32.xlu0 %v1873
    %v1875 = vpop.xlane.xlu0 %1874
    %v1876 = vsel %vm81, %v1856, 0.0
    %1877 = vadd.xlane.f32.xlu0 %v1876
    %v1878 = vpop.xlane.xlu0 %1877
    %v1879 = vsel %vm81, %v1858, 0.0
    %1880 = vadd.xlane.f32.xlu0 %v1879
    %v1881 = vpop.xlane.xlu0 %1880
    %v1882 = vsel %vm81, %v1860, 0.0
    %1883 = vadd.xlane.f32.xlu0 %v1882
    %v1884 = vpop.xlane.xlu0 %1883
    %v1885 = vrcp.pop %v1863
    %v1886 = vrcp.pop %v1866
    %v1887 = vrcp.pop %v1869
    %v1888 = vrcp.pop %v1872
    %v1889 = vrcp.pop %v1875
    %v1890 = vrcp.pop %v1878
    %v1891 = vrcp.pop %v1881
    %v1892 = vrcp.pop %v1884
    %v1893 = vmul.f32 %v1846, %v1885
    %v1894 = vmul.f32 %v1848, %v1886
    %v1895 = vmul.f32 %v1850, %v1887
    %v1896 = vmul.f32 %v1852, %v1888
    %v1897 = vmul.f32 %v1854, %v1889
    %v1898 = vmul.f32 %v1856, %v1890
    %v1899 = vmul.f32 %v1858, %v1891
    %v1900 = vmul.f32 %v1860, %v1892
    %v1901 = vmul.f32 %v867, %v1674
    %v1902 = vmul.f32 %v872, %v1674
    %v1903 = vmul.f32 %v877, %v1674
    %v1904 = vmul.f32 %v882, %v1674
    %v1905 = vmul.f32 %v887, %v1674
    %v1906 = vmul.f32 %v892, %v1674
    %v1907 = vmul.f32 %v897, %v1674
    %v1908 = vmul.f32 %v902, %v1674
    %v1910 = vsel %vm81, %v1893, 0
    %v1913 = vsel %vm81, %v1894, 0
    %v1916 = vsel %vm81, %v1895, 0
    %v1919 = vsel %vm81, %v1896, 0
    %v1922 = vsel %vm81, %v1897, 0
    %v1925 = vsel %vm81, %v1898, 0
    %v1928 = vsel %vm81, %v1899, 0
    %v1931 = vsel %vm81, %v1900, 0
    %1933 = vmatprep.subr.mxu0 0.0
    %1934 = vmatpush1.msra.mxu0 %v1901
    %1935 = vmatprep.subr.mxu0 0.0
    %1936 = vmatpush1.msra.mxu0 %v1902
    %1937 = vmatprep.subr.mxu0 0.0
    %1938 = vmatpush1.msra.mxu0 %v1903
    %1939 = vmatprep.subr.mxu0 0.0
    %1940 = vmatpush1.msra.mxu0 %v1904
    %1941 = vmatprep.subr.mxu0 0.0
    %1942 = vmatpush1.msra.mxu0 %v1905
    %1943 = vmatprep.subr.mxu0 0.0
    %1944 = vmatpush1.msra.mxu0 %v1906
    %1945 = vmatprep.subr.mxu0 0.0
    %1946 = vmatpush1.msra.mxu0 %v1907
    %1947 = vmatprep.subr.mxu0 0.0
    %1948 = vmatpush1.msra.mxu0 %v1908
    %1949 = vmatprep.subr.mxu0 0.0
    %1950 = vmatpush1.msra.mxu0 0.0
    %1951 = vmatprep.subr.mxu0 0.0
    %1952 = vmatpush1.msra.mxu0 0.0
    %1953 = vmatprep.subr.mxu0 0.0
    %1954 = vmatpush1.msra.mxu0 0.0
    %1955 = vmatprep.subr.mxu0 0.0
    %1956 = vmatpush1.msra.mxu0 0.0
    %1957 = vmatprep.subr.mxu0 0.0
    %1958 = vmatpush1.msra.mxu0 0.0
    %1959 = vmatprep.subr.mxu0 0.0
    %1960 = vmatpush1.msra.mxu0 0.0
    %1961 = vmatprep.subr.mxu0 0.0
    %1962 = vmatpush1.msra.mxu0 0.0
    %1963 = vmatprep.subr.mxu0 0.0
    %1964 = vmatpush1.msra.mxu0 0.0
    %1965 = vmatprep.subr.mxu0 0.0
    %1966 = vmatpush1.msra.mxu0 0.0
    %1967 = vmatprep.subr.mxu0 0.0
    %1968 = vmatpush1.msra.mxu0 0.0
    %1969 = vmatprep.subr.mxu0 0.0
    %1970 = vmatpush1.msra.mxu0 0.0
    %1971 = vmatprep.subr.mxu0 0.0
    %1972 = vmatpush1.msra.mxu0 0.0
    %1973 = vmatprep.subr.mxu0 0.0
    %1974 = vmatpush1.msra.mxu0 0.0
    %1975 = vmatprep.subr.mxu0 0.0
    %1976 = vmatpush1.msra.mxu0 0.0
    %1977 = vmatprep.subr.mxu0 0.0
    %1978 = vmatpush1.msra.mxu0 0.0
    %1979 = vmatprep.subr.mxu0 0.0
    %1980 = vmatpush1.msra.mxu0 0.0
    %1981 = vmatprep.subr.mxu0 0.0
    %1982 = vmatpush1.msra.mxu0 0.0
    %1983 = vmatprep.subr.mxu0 0.0
    %1984 = vmatpush1.msra.mxu0 0.0
    %1985 = vmatprep.subr.mxu0 0.0
    %1986 = vmatpush1.msra.mxu0 0.0
    %1987 = vmatprep.subr.mxu0 0.0
    %1988 = vmatpush1.msra.mxu0 0.0
    %1989 = vmatprep.subr.mxu0 0.0
    %1990 = vmatpush1.msra.mxu0 0.0
    %1991 = vmatprep.subr.mxu0 0.0
    %1992 = vmatpush1.msra.mxu0 0.0
    %1993 = vmatprep.subr.mxu0 0.0
    %1994 = vmatpush1.msra.mxu0 0.0
    %1995 = vmatprep.subr.mxu0 0.0
    %1996 = vmatpush1.msra.mxu0 0.0
    %1997 = vmatprep.mubr.f32.mxu0 0.0
    %1998 = vmatmul.mubr.f32.gmra.mrb[0].mxu0 %v1910
    %v1999 = vpop.f32.mrb[0].mxu0
    %v2000 = vadd.f32 0.0, %v1999
    %v2001 = vpop.f32.mrb[0].mxu0
    %2002 = vmatprep.mubr.f32.mxu0 0.0
    %2003 = vmatmul.mubr.f32.gmra.mrb[0].mxu0 %v1913
    %v2004 = vpop.f32.mrb[0].mxu0
    %v2005 = vadd.f32 0.0, %v2004
    %v2006 = vpop.f32.mrb[0].mxu0
    %2007 = vmatprep.mubr.f32.mxu0 0.0
    %2008 = vmatmul.mubr.f32.gmra.mrb[0].mxu0 %v1916
    %v2009 = vpop.f32.mrb[0].mxu0
    %v2010 = vadd.f32 0.0, %v2009
    %v2011 = vpop.f32.mrb[0].mxu0
    %2012 = vmatprep.mubr.f32.mxu0 0.0
    %2013 = vmatmul.mubr.f32.gmra.mrb[0].mxu0 %v1919
    %v2014 = vpop.f32.mrb[0].mxu0
    %v2015 = vadd.f32 0.0, %v2014
    %v2016 = vpop.f32.mrb[0].mxu0
    %2017 = vmatprep.mubr.f32.mxu0 0.0
    %2018 = vmatmul.mubr.f32.gmra.mrb[0].mxu0 %v1922
    %v2019 = vpop.f32.mrb[0].mxu0
    %v2020 = vadd.f32 0.0, %v2019
    %v2021 = vpop.f32.mrb[0].mxu0
    %2022 = vmatprep.mubr.f32.mxu0 0.0
    %2023 = vmatmul.mubr.f32.gmra.mrb[0].mxu0 %v1925
    %v2024 = vpop.f32.mrb[0].mxu0
    %v2025 = vadd.f32 0.0, %v2024
    %v2026 = vpop.f32.mrb[0].mxu0
    %2027 = vmatprep.mubr.f32.mxu0 0.0
    %2028 = vmatmul.mubr.f32.gmra.mrb[0].mxu0 %v1928
    %v2029 = vpop.f32.mrb[0].mxu0
    %v2030 = vadd.f32 0.0, %v2029
    %v2031 = vpop.f32.mrb[0].mxu0
    %2032 = vmatprep.mubr.f32.mxu0 0.0
    %2033 = vmatmul.mubr.f32.gmra.mrb[0].mxu0 %v1931
    %v2034 = vpop.f32.mrb[0].mxu0
    %v2035 = vadd.f32 0.0, %v2034
    %v2036 = vpop.f32.mrb[0].mxu0
    %2037 = vdwg.mxu0
    %v2038 = vadd.f32 %v1630, %v2000
    %v2039 = vadd.f32 %v1635, %v2005
    %v2040 = vadd.f32 %v1640, %v2010
    %v2041 = vadd.f32 %v1645, %v2015
    %v2042 = vadd.f32 %v1650, %v2020
    %v2043 = vadd.f32 %v1655, %v2025
    %v2044 = vadd.f32 %v1660, %v2030
    %v2045 = vadd.f32 %v1665, %v2035
    %s2046 = scalar_lea.vmem %s6, 3
    %v2047 = vld [vmem:[%s2046] sm:$0x1]
    %v2049 = vlaneseq
    %v2050 = vshrl.u32 %v2049, 7
    %v2051 = vsub.s32 0, %v2050
    %v2052 = vrot.slane %v2047, %v2051
    %v2054 = vmul.f32 %v751, %v2052
    %v2055 = vmul.f32 %v756, %v2052
    %v2056 = vmul.f32 %v761, %v2052
    %v2057 = vmul.f32 %v766, %v2052
    %v2058 = vmul.f32 %v771, %v2052
    %v2059 = vmul.f32 %v776, %v2052
    %v2060 = vmul.f32 %v781, %v2052
    %v2061 = vmul.f32 %v786, %v2052
    %v2063 = vsel %vm211, %v2054, 0
    %v2066 = vsel %vm211, %v2055, 0
    %v2069 = vsel %vm211, %v2056, 0
    %v2072 = vsel %vm211, %v2057, 0
    %v2075 = vsel %vm211, %v2058, 0
    %v2078 = vsel %vm211, %v2059, 0
    %v2081 = vsel %vm211, %v2060, 0
    %v2084 = vsel %vm211, %v2061, 0
    %2086 = vmatprep.subr.mxu0 0.0
    %2087 = vmatpush1.xpose.msra.mxu0 %v2063
    %2088 = vmatprep.subr.mxu0 0.0
    %2089 = vmatpush1.xpose.msra.mxu0 %v2066
    %2090 = vmatprep.subr.mxu0 0.0
    %2091 = vmatpush1.xpose.msra.mxu0 %v2069
    %2092 = vmatprep.subr.mxu0 0.0
    %2093 = vmatpush1.xpose.msra.mxu0 %v2072
    %2094 = vmatprep.subr.mxu0 0.0
    %2095 = vmatpush1.xpose.msra.mxu0 %v2075
    %2096 = vmatprep.subr.mxu0 0.0
    %2097 = vmatpush1.xpose.msra.mxu0 %v2078
    %2098 = vmatprep.subr.mxu0 0.0
    %2099 = vmatpush1.xpose.msra.mxu0 %v2081
    %2100 = vmatprep.subr.mxu0 0.0
    %2101 = vmatpush1.xpose.msra.mxu0 %v2084
    %2102 = vmatprep.subr.mxu0 0.0
    %2103 = vmatpush1.xpose.msra.mxu0 0.0
    %2104 = vmatprep.subr.mxu0 0.0
    %2105 = vmatpush1.xpose.msra.mxu0 0.0
    %2106 = vmatprep.subr.mxu0 0.0
    %2107 = vmatpush1.xpose.msra.mxu0 0.0
    %2108 = vmatprep.subr.mxu0 0.0
    %2109 = vmatpush1.xpose.msra.mxu0 0.0
    %2110 = vmatprep.subr.mxu0 0.0
    %2111 = vmatpush1.xpose.msra.mxu0 0.0
    %2112 = vmatprep.subr.mxu0 0.0
    %2113 = vmatpush1.xpose.msra.mxu0 0.0
    %2114 = vmatprep.subr.mxu0 0.0
    %2115 = vmatpush1.xpose.msra.mxu0 0.0
    %2116 = vmatprep.subr.mxu0 0.0
    %2117 = vmatpush1.xpose.msra.mxu0 0.0
    %2118 = vmatprep.subr.mxu0 0.0
    %2119 = vmatpush1.xpose.msra.mxu0 0.0
    %2120 = vmatprep.subr.mxu0 0.0
    %2121 = vmatpush1.xpose.msra.mxu0 0.0
    %2122 = vmatprep.subr.mxu0 0.0
    %2123 = vmatpush1.xpose.msra.mxu0 0.0
    %2124 = vmatprep.subr.mxu0 0.0
    %2125 = vmatpush1.xpose.msra.mxu0 0.0
    %2126 = vmatprep.subr.mxu0 0.0
    %2127 = vmatpush1.xpose.msra.mxu0 0.0
    %2128 = vmatprep.subr.mxu0 0.0
    %2129 = vmatpush1.xpose.msra.mxu0 0.0
    %2130 = vmatprep.subr.mxu0 0.0
    %2131 = vmatpush1.xpose.msra.mxu0 0.0
    %2132 = vmatprep.subr.mxu0 0.0
    %2133 = vmatpush1.xpose.msra.mxu0 0.0
    %2134 = vmatprep.subr.mxu0 0.0
    %2135 = vmatpush1.xpose.msra.mxu0 0.0
    %2136 = vmatprep.subr.mxu0 0.0
    %2137 = vmatpush1.xpose.msra.mxu0 0.0
    %2138 = vmatprep.subr.mxu0 0.0
    %2139 = vmatpush1.xpose.msra.mxu0 0.0
    %2140 = vmatprep.subr.mxu0 0.0
    %2141 = vmatpush1.xpose.msra.mxu0 0.0
    %2142 = vmatprep.subr.mxu0 0.0
    %2143 = vmatpush1.xpose.msra.mxu0 0.0
    %2144 = vmatprep.subr.mxu0 0.0
    %2145 = vmatpush1.xpose.msra.mxu0 0.0
    %2146 = vmatprep.subr.mxu0 0.0
    %2147 = vmatpush1.xpose.msra.mxu0 0.0
    %2148 = vmatprep.subr.mxu0 0.0
    %2149 = vmatpush1.xpose.msra.mxu0 0.0
    %2150 = vmatprep.mubr.f32.mxu0 0.0
    %2151 = vmatmul.mubr.f32.gmra.mrb[0].mxu0 %v921
    %v2152 = vpop.f32.mrb[0].mxu0
    %v2153 = vadd.f32 %v73, %v2152
    %v2154 = vpop.f32.mrb[0].mxu0
    %2155 = vmatprep.mubr.f32.mxu0 0.0
    %2156 = vmatmul.mubr.f32.gmra.mrb[0].mxu0 %v924
    %v2157 = vpop.f32.mrb[0].mxu0
    %v2158 = vadd.f32 %v74, %v2157
    %v2159 = vpop.f32.mrb[0].mxu0
    %2160 = vmatprep.mubr.f32.mxu0 0.0
    %2161 = vmatmul.mubr.f32.gmra.mrb[0].mxu0 %v927
    %v2162 = vpop.f32.mrb[0].mxu0
    %v2163 = vadd.f32 %v75, %v2162
    %v2164 = vpop.f32.mrb[0].mxu0
    %2165 = vmatprep.mubr.f32.mxu0 0.0
    %2166 = vmatmul.mubr.f32.gmra.mrb[0].mxu0 %v930
    %v2167 = vpop.f32.mrb[0].mxu0
    %v2168 = vadd.f32 %v76, %v2167
    %v2169 = vpop.f32.mrb[0].mxu0
    %2170 = vmatprep.mubr.f32.mxu0 0.0
    %2171 = vmatmul.mubr.f32.gmra.mrb[0].mxu0 %v933
    %v2172 = vpop.f32.mrb[0].mxu0
    %v2173 = vadd.f32 %v77, %v2172
    %v2174 = vpop.f32.mrb[0].mxu0
    %2175 = vmatprep.mubr.f32.mxu0 0.0
    %2176 = vmatmul.mubr.f32.gmra.mrb[0].mxu0 %v936
    %v2177 = vpop.f32.mrb[0].mxu0
    %v2178 = vadd.f32 %v78, %v2177
    %v2179 = vpop.f32.mrb[0].mxu0
    %2180 = vmatprep.mubr.f32.mxu0 0.0
    %2181 = vmatmul.mubr.f32.gmra.mrb[0].mxu0 %v939
    %v2182 = vpop.f32.mrb[0].mxu0
    %v2183 = vadd.f32 %v79, %v2182
    %v2184 = vpop.f32.mrb[0].mxu0
    %2185 = vmatprep.mubr.f32.mxu0 0.0
    %2186 = vmatmul.mubr.f32.gmra.mrb[0].mxu0 %v942
    %v2187 = vpop.f32.mrb[0].mxu0
    %v2188 = vadd.f32 %v80, %v2187
    %v2189 = vpop.f32.mrb[0].mxu0
    %2190 = vdwg.mxu0
    %v2191 = vsel %vm81, %v2153, -inf
    %2192 = vmax.xlane.f32.xlu0 %v2191
    %v2193 = vpop.xlane.xlu0 %2192
    %v2194 = vsel %vm81, %v2158, -inf
    %2195 = vmax.xlane.f32.xlu0 %v2194
    %v2196 = vpop.xlane.xlu0 %2195
    %v2197 = vsel %vm81, %v2163, -inf
    %2198 = vmax.xlane.f32.xlu0 %v2197
    %v2199 = vpop.xlane.xlu0 %2198
    %v2200 = vsel %vm81, %v2168, -inf
    %2201 = vmax.xlane.f32.xlu0 %v2200
    %v2202 = vpop.xlane.xlu0 %2201
    %v2203 = vsel %vm81, %v2173, -inf
    %2204 = vmax.xlane.f32.xlu0 %v2203
    %v2205 = vpop.xlane.xlu0 %2204
    %v2206 = vsel %vm81, %v2178, -inf
    %2207 = vmax.xlane.f32.xlu0 %v2206
    %v2208 = vpop.xlane.xlu0 %2207
    %v2209 = vsel %vm81, %v2183, -inf
    %2210 = vmax.xlane.f32.xlu0 %v2209
    %v2211 = vpop.xlane.xlu0 %2210
    %v2212 = vsel %vm81, %v2188, -inf
    %2213 = vmax.xlane.f32.xlu0 %v2212
    %v2214 = vpop.xlane.xlu0 %2213
    %v2215 = vsub.f32 %v2153, %v2193
    %v2216 = vsub.f32 %v2158, %v2196
    %v2217 = vsub.f32 %v2163, %v2199
    %v2218 = vsub.f32 %v2168, %v2202
    %v2219 = vsub.f32 %v2173, %v2205
    %v2220 = vsub.f32 %v2178, %v2208
    %v2221 = vsub.f32 %v2183, %v2211
    %v2222 = vsub.f32 %v2188, %v2214
    %v2223 = vmul.f32 %v2215, 1.442695
    %v2224 = vpow.pop %v2223
    %v2225 = vmul.f32 %v2216, 1.442695
    %v2226 = vpow.pop %v2225
    %v2227 = vmul.f32 %v2217, 1.442695
    %v2228 = vpow.pop %v2227
    %v2229 = vmul.f32 %v2218, 1.442695
    %v2230 = vpow.pop %v2229
    %v2231 = vmul.f32 %v2219, 1.442695
    %v2232 = vpow.pop %v2231
    %v2233 = vmul.f32 %v2220, 1.442695
    %v2234 = vpow.pop %v2233
    %v2235 = vmul.f32 %v2221, 1.442695
    %v2236 = vpow.pop %v2235
    %v2237 = vmul.f32 %v2222, 1.442695
    %v2238 = vpow.pop %v2237
    %v2239 = vsel %vm81, %v2224, 0.0
    %2240 = vadd.xlane.f32.xlu0 %v2239
    %v2241 = vpop.xlane.xlu0 %2240
    %v2242 = vsel %vm81, %v2226, 0.0
    %2243 = vadd.xlane.f32.xlu0 %v2242
    %v2244 = vpop.xlane.xlu0 %2243
    %v2245 = vsel %vm81, %v2228, 0.0
    %2246 = vadd.xlane.f32.xlu0 %v2245
    %v2247 = vpop.xlane.xlu0 %2246
    %v2248 = vsel %vm81, %v2230, 0.0
    %2249 = vadd.xlane.f32.xlu0 %v2248
    %v2250 = vpop.xlane.xlu0 %2249
    %v2251 = vsel %vm81, %v2232, 0.0
    %2252 = vadd.xlane.f32.xlu0 %v2251
    %v2253 = vpop.xlane.xlu0 %2252
    %v2254 = vsel %vm81, %v2234, 0.0
    %2255 = vadd.xlane.f32.xlu0 %v2254
    %v2256 = vpop.xlane.xlu0 %2255
    %v2257 = vsel %vm81, %v2236, 0.0
    %2258 = vadd.xlane.f32.xlu0 %v2257
    %v2259 = vpop.xlane.xlu0 %2258
    %v2260 = vsel %vm81, %v2238, 0.0
    %2261 = vadd.xlane.f32.xlu0 %v2260
    %v2262 = vpop.xlane.xlu0 %2261
    %v2263 = vrcp.pop %v2241
    %v2264 = vrcp.pop %v2244
    %v2265 = vrcp.pop %v2247
    %v2266 = vrcp.pop %v2250
    %v2267 = vrcp.pop %v2253
    %v2268 = vrcp.pop %v2256
    %v2269 = vrcp.pop %v2259
    %v2270 = vrcp.pop %v2262
    %v2271 = vmul.f32 %v2224, %v2263
    %v2272 = vmul.f32 %v2226, %v2264
    %v2273 = vmul.f32 %v2228, %v2265
    %v2274 = vmul.f32 %v2230, %v2266
    %v2275 = vmul.f32 %v2232, %v2267
    %v2276 = vmul.f32 %v2234, %v2268
    %v2277 = vmul.f32 %v2236, %v2269
    %v2278 = vmul.f32 %v2238, %v2270
    %v2279 = vmul.f32 %v867, %v2052
    %v2280 = vmul.f32 %v872, %v2052
    %v2281 = vmul.f32 %v877, %v2052
    %v2282 = vmul.f32 %v882, %v2052
    %v2283 = vmul.f32 %v887, %v2052
    %v2284 = vmul.f32 %v892, %v2052
    %v2285 = vmul.f32 %v897, %v2052
    %v2286 = vmul.f32 %v902, %v2052
    %v2288 = vsel %vm81, %v2271, 0
    %v2291 = vsel %vm81, %v2272, 0
    %v2294 = vsel %vm81, %v2273, 0
    %v2297 = vsel %vm81, %v2274, 0
    %v2300 = vsel %vm81, %v2275, 0
    %v2303 = vsel %vm81, %v2276, 0
    %v2306 = vsel %vm81, %v2277, 0
    %v2309 = vsel %vm81, %v2278, 0
    %2311 = vmatprep.subr.mxu0 0.0
    %2312 = vmatpush1.msra.mxu0 %v2279
    %2313 = vmatprep.subr.mxu0 0.0
    %2314 = vmatpush1.msra.mxu0 %v2280
    %2315 = vmatprep.subr.mxu0 0.0
    %2316 = vmatpush1.msra.mxu0 %v2281
    %2317 = vmatprep.subr.mxu0 0.0
    %2318 = vmatpush1.msra.mxu0 %v2282
    %2319 = vmatprep.subr.mxu0 0.0
    %2320 = vmatpush1.msra.mxu0 %v2283
    %2321 = vmatprep.subr.mxu0 0.0
    %2322 = vmatpush1.msra.mxu0 %v2284
    %2323 = vmatprep.subr.mxu0 0.0
    %2324 = vmatpush1.msra.mxu0 %v2285
    %2325 = vmatprep.subr.mxu0 0.0
    %2326 = vmatpush1.msra.mxu0 %v2286
    %2327 = vmatprep.subr.mxu0 0.0
    %2328 = vmatpush1.msra.mxu0 0.0
    %2329 = vmatprep.subr.mxu0 0.0
    %2330 = vmatpush1.msra.mxu0 0.0
    %2331 = vmatprep.subr.mxu0 0.0
    %2332 = vmatpush1.msra.mxu0 0.0
    %2333 = vmatprep.subr.mxu0 0.0
    %2334 = vmatpush1.msra.mxu0 0.0
    %2335 = vmatprep.subr.mxu0 0.0
    %2336 = vmatpush1.msra.mxu0 0.0
    %2337 = vmatprep.subr.mxu0 0.0
    %2338 = vmatpush1.msra.mxu0 0.0
    %2339 = vmatprep.subr.mxu0 0.0
    %2340 = vmatpush1.msra.mxu0 0.0
    %2341 = vmatprep.subr.mxu0 0.0
    %2342 = vmatpush1.msra.mxu0 0.0
    %2343 = vmatprep.subr.mxu0 0.0
    %2344 = vmatpush1.msra.mxu0 0.0
    %2345 = vmatprep.subr.mxu0 0.0
    %2346 = vmatpush1.msra.mxu0 0.0
    %2347 = vmatprep.subr.mxu0 0.0
    %2348 = vmatpush1.msra.mxu0 0.0
    %2349 = vmatprep.subr.mxu0 0.0
    %2350 = vmatpush1.msra.mxu0 0.0
    %2351 = vmatprep.subr.mxu0 0.0
    %2352 = vmatpush1.msra.mxu0 0.0
    %2353 = vmatprep.subr.mxu0 0.0
    %2354 = vmatpush1.msra.mxu0 0.0
    %2355 = vmatprep.subr.mxu0 0.0
    %2356 = vmatpush1.msra.mxu0 0.0
    %2357 = vmatprep.subr.mxu0 0.0
    %2358 = vmatpush1.msra.mxu0 0.0
    %2359 = vmatprep.subr.mxu0 0.0
    %2360 = vmatpush1.msra.mxu0 0.0
    %2361 = vmatprep.subr.mxu0 0.0
    %2362 = vmatpush1.msra.mxu0 0.0
    %2363 = vmatprep.subr.mxu0 0.0
    %2364 = vmatpush1.msra.mxu0 0.0
    %2365 = vmatprep.subr.mxu0 0.0
    %2366 = vmatpush1.msra.mxu0 0.0
    %2367 = vmatprep.subr.mxu0 0.0
    %2368 = vmatpush1.msra.mxu0 0.0
    %2369 = vmatprep.subr.mxu0 0.0
    %2370 = vmatpush1.msra.mxu0 0.0
    %2371 = vmatprep.subr.mxu0 0.0
    %2372 = vmatpush1.msra.mxu0 0.0
    %2373 = vmatprep.subr.mxu0 0.0
    %2374 = vmatpush1.msra.mxu0 0.0
    %2375 = vmatprep.mubr.f32.mxu0 0.0
    %2376 = vmatmul.mubr.f32.gmra.mrb[0].mxu0 %v2288
    %v2377 = vpop.f32.mrb[0].mxu0
    %v2378 = vadd.f32 0.0, %v2377
    %v2379 = vpop.f32.mrb[0].mxu0
    %2380 = vmatprep.mubr.f32.mxu0 0.0
    %2381 = vmatmul.mubr.f32.gmra.mrb[0].mxu0 %v2291
    %v2382 = vpop.f32.mrb[0].mxu0
    %v2383 = vadd.f32 0.0, %v2382
    %v2384 = vpop.f32.mrb[0].mxu0
    %2385 = vmatprep.mubr.f32.mxu0 0.0
    %2386 = vmatmul.mubr.f32.gmra.mrb[0].mxu0 %v2294
    %v2387 = vpop.f32.mrb[0].mxu0
    %v2388 = vadd.f32 0.0, %v2387
    %v2389 = vpop.f32.mrb[0].mxu0
    %2390 = vmatprep.mubr.f32.mxu0 0.0
    %2391 = vmatmul.mubr.f32.gmra.mrb[0].mxu0 %v2297
    %v2392 = vpop.f32.mrb[0].mxu0
    %v2393 = vadd.f32 0.0, %v2392
    %v2394 = vpop.f32.mrb[0].mxu0
    %2395 = vmatprep.mubr.f32.mxu0 0.0
    %2396 = vmatmul.mubr.f32.gmra.mrb[0].mxu0 %v2300
    %v2397 = vpop.f32.mrb[0].mxu0
    %v2398 = vadd.f32 0.0, %v2397
    %v2399 = vpop.f32.mrb[0].mxu0
    %2400 = vmatprep.mubr.f32.mxu0 0.0
    %2401 = vmatmul.mubr.f32.gmra.mrb[0].mxu0 %v2303
    %v2402 = vpop.f32.mrb[0].mxu0
    %v2403 = vadd.f32 0.0, %v2402
    %v2404 = vpop.f32.mrb[0].mxu0
    %2405 = vmatprep.mubr.f32.mxu0 0.0
    %2406 = vmatmul.mubr.f32.gmra.mrb[0].mxu0 %v2306
    %v2407 = vpop.f32.mrb[0].mxu0
    %v2408 = vadd.f32 0.0, %v2407
    %v2409 = vpop.f32.mrb[0].mxu0
    %2410 = vmatprep.mubr.f32.mxu0 0.0
    %2411 = vmatmul.mubr.f32.gmra.mrb[0].mxu0 %v2309
    %v2412 = vpop.f32.mrb[0].mxu0
    %v2413 = vadd.f32 0.0, %v2412
    %v2414 = vpop.f32.mrb[0].mxu0
    %2415 = vdwg.mxu0
    %v2416 = vadd.f32 %v2038, %v2378
    %v2417 = vadd.f32 %v2039, %v2383
    %v2418 = vadd.f32 %v2040, %v2388
    %v2419 = vadd.f32 %v2041, %v2393
    %v2420 = vadd.f32 %v2042, %v2398
    %v2421 = vadd.f32 %v2043, %v2403
    %v2422 = vadd.f32 %v2044, %v2408
    %v2423 = vadd.f32 %v2045, %v2413
    %v2424 = vld [vmem:[%s13] sm:$0xff]
    %v2425 = vld [vmem:[%s13 + $0x8] sm:$0xff]
    %v2426 = vld [vmem:[%s13 + $0x10] sm:$0xff]
    %v2427 = vld [vmem:[%s13 + $0x18] sm:$0xff]
    %v2428 = vld [vmem:[%s14] sm:$0x1]
    %v2430 = vlaneseq
    %v2431 = vshrl.u32 %v2430, 7
    %v2432 = vsub.s32 0, %v2431
    %v2433 = vrot.slane %v2428, %v2432
    %v2436 = vsel %vm211, %v2416, 0
    %v2439 = vsel %vm211, %v2417, 0
    %v2442 = vsel %vm211, %v2418, 0
    %v2445 = vsel %vm211, %v2419, 0
    %v2448 = vsel %vm211, %v2420, 0
    %v2451 = vsel %vm211, %v2421, 0
    %v2454 = vsel %vm211, %v2422, 0
    %v2457 = vsel %vm211, %v2423, 0
    %2459 = vmatprep.subr.mxu0 0.0
    %2460 = vmatpush1.msra.mxu0 %v2424
    %2461 = vmatprep.subr.mxu0 0.0
    %2462 = vmatpush1.msra.mxu0 %v2425
    %2463 = vmatprep.subr.mxu0 0.0
    %2464 = vmatpush1.msra.mxu0 %v2426
    %2465 = vmatprep.subr.mxu0 0.0
    %2466 = vmatpush1.msra.mxu0 %v2427
    %2467 = vmatprep.subr.mxu0 0.0
    %2468 = vmatpush1.msra.mxu0 0.0
    %2469 = vmatprep.subr.mxu0 0.0
    %2470 = vmatpush1.msra.mxu0 0.0
    %2471 = vmatprep.subr.mxu0 0.0
    %2472 = vmatpush1.msra.mxu0 0.0
    %2473 = vmatprep.subr.mxu0 0.0
    %2474 = vmatpush1.msra.mxu0 0.0
    %2475 = vmatprep.subr.mxu0 0.0
    %2476 = vmatpush1.msra.mxu0 0.0
    %2477 = vmatprep.subr.mxu0 0.0
    %2478 = vmatpush1.msra.mxu0 0.0
    %2479 = vmatprep.subr.mxu0 0.0
    %2480 = vmatpush1.msra.mxu0 0.0
    %2481 = vmatprep.subr.mxu0 0.0
    %2482 = vmatpush1.msra.mxu0 0.0
    %2483 = vmatprep.subr.mxu0 0.0
    %2484 = vmatpush1.msra.mxu0 0.0
    %2485 = vmatprep.subr.mxu0 0.0
    %2486 = vmatpush1.msra.mxu0 0.0
    %2487 = vmatprep.subr.mxu0 0.0
    %2488 = vmatpush1.msra.mxu0 0.0
    %2489 = vmatprep.subr.mxu0 0.0
    %2490 = vmatpush1.msra.mxu0 0.0
    %2491 = vmatprep.subr.mxu0 0.0
    %2492 = vmatpush1.msra.mxu0 0.0
    %2493 = vmatprep.subr.mxu0 0.0
    %2494 = vmatpush1.msra.mxu0 0.0
    %2495 = vmatprep.subr.mxu0 0.0
    %2496 = vmatpush1.msra.mxu0 0.0
    %2497 = vmatprep.subr.mxu0 0.0
    %2498 = vmatpush1.msra.mxu0 0.0
    %2499 = vmatprep.subr.mxu0 0.0
    %2500 = vmatpush1.msra.mxu0 0.0
    %2501 = vmatprep.subr.mxu0 0.0
    %2502 = vmatpush1.msra.mxu0 0.0
    %2503 = vmatprep.subr.mxu0 0.0
    %2504 = vmatpush1.msra.mxu0 0.0
    %2505 = vmatprep.subr.mxu0 0.0
    %2506 = vmatpush1.msra.mxu0 0.0
    %2507 = vmatprep.subr.mxu0 0.0
    %2508 = vmatpush1.msra.mxu0 0.0
    %2509 = vmatprep.subr.mxu0 0.0
    %2510 = vmatpush1.msra.mxu0 0.0
    %2511 = vmatprep.subr.mxu0 0.0
    %2512 = vmatpush1.msra.mxu0 0.0
    %2513 = vmatprep.subr.mxu0 0.0
    %2514 = vmatpush1.msra.mxu0 0.0
    %2515 = vmatprep.subr.mxu0 0.0
    %2516 = vmatpush1.msra.mxu0 0.0
    %2517 = vmatprep.subr.mxu0 0.0
    %2518 = vmatpush1.msra.mxu0 0.0
    %2519 = vmatprep.subr.mxu0 0.0
    %2520 = vmatpush1.msra.mxu0 0.0
    %2521 = vmatprep.subr.mxu0 0.0
    %2522 = vmatpush1.msra.mxu0 0.0
    %2523 = vmatprep.mubr.f32.mxu0 0.0
    %2524 = vmatmul.mubr.f32.gmra.mrb[0].mxu0 %v2436
    %v2525 = vpop.f32.mrb[0].mxu0
    %v2526 = vadd.f32 %v2433, %v2525
    %v2527 = vpop.f32.mrb[0].mxu0
    %2528 = vmatprep.mubr.f32.mxu0 0.0
    %2529 = vmatmul.mubr.f32.gmra.mrb[0].mxu0 %v2439
    %v2530 = vpop.f32.mrb[0].mxu0
    %v2531 = vadd.f32 %v2433, %v2530
    %v2532 = vpop.f32.mrb[0].mxu0
    %2533 = vmatprep.mubr.f32.mxu0 0.0
    %2534 = vmatmul.mubr.f32.gmra.mrb[0].mxu0 %v2442
    %v2535 = vpop.f32.mrb[0].mxu0
    %v2536 = vadd.f32 %v2433, %v2535
    %v2537 = vpop.f32.mrb[0].mxu0
    %2538 = vmatprep.mubr.f32.mxu0 0.0
    %2539 = vmatmul.mubr.f32.gmra.mrb[0].mxu0 %v2445
    %v2540 = vpop.f32.mrb[0].mxu0
    %v2541 = vadd.f32 %v2433, %v2540
    %v2542 = vpop.f32.mrb[0].mxu0
    %2543 = vmatprep.mubr.f32.mxu0 0.0
    %2544 = vmatmul.mubr.f32.gmra.mrb[0].mxu0 %v2448
    %v2545 = vpop.f32.mrb[0].mxu0
    %v2546 = vadd.f32 %v2433, %v2545
    %v2547 = vpop.f32.mrb[0].mxu0
    %2548 = vmatprep.mubr.f32.mxu0 0.0
    %2549 = vmatmul.mubr.f32.gmra.mrb[0].mxu0 %v2451
    %v2550 = vpop.f32.mrb[0].mxu0
    %v2551 = vadd.f32 %v2433, %v2550
    %v2552 = vpop.f32.mrb[0].mxu0
    %2553 = vmatprep.mubr.f32.mxu0 0.0
    %2554 = vmatmul.mubr.f32.gmra.mrb[0].mxu0 %v2454
    %v2555 = vpop.f32.mrb[0].mxu0
    %v2556 = vadd.f32 %v2433, %v2555
    %v2557 = vpop.f32.mrb[0].mxu0
    %2558 = vmatprep.mubr.f32.mxu0 0.0
    %2559 = vmatmul.mubr.f32.gmra.mrb[0].mxu0 %v2457
    %v2560 = vpop.f32.mrb[0].mxu0
    %v2561 = vadd.f32 %v2433, %v2560
    %v2562 = vpop.f32.mrb[0].mxu0
    %2563 = vdwg.mxu0
    %v2564 = vld [vmem:[%s5] sm:$0xff]
    %v2565 = vld [vmem:[%s5 + $0x8] sm:$0xff]
    %v2566 = vld [vmem:[%s5 + $0x10] sm:$0xff]
    %v2567 = vld [vmem:[%s5 + $0x18] sm:$0xff]
    %v2568 = vld [vmem:[%s5 + $0x20] sm:$0xff]
    %v2569 = vld [vmem:[%s5 + $0x28] sm:$0xff]
    %v2570 = vld [vmem:[%s5 + $0x30] sm:$0xff]
    %v2571 = vld [vmem:[%s5 + $0x38] sm:$0xff]
    %v2573 = vsel %vm81, %v2564, 0
    %v2576 = vsel %vm81, %v2565, 0
    %v2579 = vsel %vm81, %v2566, 0
    %v2582 = vsel %vm81, %v2567, 0
    %v2585 = vsel %vm81, %v2568, 0
    %v2588 = vsel %vm81, %v2569, 0
    %v2591 = vsel %vm81, %v2570, 0
    %v2594 = vsel %vm81, %v2571, 0
    %2596 = vmatprep.subr.mxu0 0.0
    %2597 = vmatpush1.msra.mxu0 %v2526
    %2598 = vmatprep.subr.mxu0 0.0
    %2599 = vmatpush1.msra.mxu0 %v2531
    %2600 = vmatprep.subr.mxu0 0.0
    %2601 = vmatpush1.msra.mxu0 %v2536
    %2602 = vmatprep.subr.mxu0 0.0
    %2603 = vmatpush1.msra.mxu0 %v2541
    %2604 = vmatprep.subr.mxu0 0.0
    %2605 = vmatpush1.msra.mxu0 %v2546
    %2606 = vmatprep.subr.mxu0 0.0
    %2607 = vmatpush1.msra.mxu0 %v2551
    %2608 = vmatprep.subr.mxu0 0.0
    %2609 = vmatpush1.msra.mxu0 %v2556
    %2610 = vmatprep.subr.mxu0 0.0
    %2611 = vmatpush1.msra.mxu0 %v2561
    %2612 = vmatprep.subr.mxu0 0.0
    %2613 = vmatpush1.msra.mxu0 0.0
    %2614 = vmatprep.subr.mxu0 0.0
    %2615 = vmatpush1.msra.mxu0 0.0
    %2616 = vmatprep.subr.mxu0 0.0
    %2617 = vmatpush1.msra.mxu0 0.0
    %2618 = vmatprep.subr.mxu0 0.0
    %2619 = vmatpush1.msra.mxu0 0.0
    %2620 = vmatprep.subr.mxu0 0.0
    %2621 = vmatpush1.msra.mxu0 0.0
    %2622 = vmatprep.subr.mxu0 0.0
    %2623 = vmatpush1.msra.mxu0 0.0
    %2624 = vmatprep.subr.mxu0 0.0
    %2625 = vmatpush1.msra.mxu0 0.0
    %2626 = vmatprep.subr.mxu0 0.0
    %2627 = vmatpush1.msra.mxu0 0.0
    %2628 = vmatprep.subr.mxu0 0.0
    %2629 = vmatpush1.msra.mxu0 0.0
    %2630 = vmatprep.subr.mxu0 0.0
    %2631 = vmatpush1.msra.mxu0 0.0
    %2632 = vmatprep.subr.mxu0 0.0
    %2633 = vmatpush1.msra.mxu0 0.0
    %2634 = vmatprep.subr.mxu0 0.0
    %2635 = vmatpush1.msra.mxu0 0.0
    %2636 = vmatprep.subr.mxu0 0.0
    %2637 = vmatpush1.msra.mxu0 0.0
    %2638 = vmatprep.subr.mxu0 0.0
    %2639 = vmatpush1.msra.mxu0 0.0
    %2640 = vmatprep.subr.mxu0 0.0
    %2641 = vmatpush1.msra.mxu0 0.0
    %2642 = vmatprep.subr.mxu0 0.0
    %2643 = vmatpush1.msra.mxu0 0.0
    %2644 = vmatprep.subr.mxu0 0.0
    %2645 = vmatpush1.msra.mxu0 0.0
    %2646 = vmatprep.subr.mxu0 0.0
    %2647 = vmatpush1.msra.mxu0 0.0
    %2648 = vmatprep.subr.mxu0 0.0
    %2649 = vmatpush1.msra.mxu0 0.0
    %2650 = vmatprep.subr.mxu0 0.0
    %2651 = vmatpush1.msra.mxu0 0.0
    %2652 = vmatprep.subr.mxu0 0.0
    %2653 = vmatpush1.msra.mxu0 0.0
    %2654 = vmatprep.subr.mxu0 0.0
    %2655 = vmatpush1.msra.mxu0 0.0
    %2656 = vmatprep.subr.mxu0 0.0
    %2657 = vmatpush1.msra.mxu0 0.0
    %2658 = vmatprep.subr.mxu0 0.0
    %2659 = vmatpush1.msra.mxu0 0.0
    %2660 = vmatprep.mubr.f32.mxu0 0.0
    %2661 = vmatmul.mubr.f32.gmra.mrb[0].mxu0 %v2573
    %v2662 = vpop.f32.mrb[0].mxu0
    %v2663 = vadd.f32 0.0, %v2662
    %v2664 = vpop.f32.mrb[0].mxu0
    %2665 = vmatprep.mubr.f32.mxu0 0.0
    %2666 = vmatmul.mubr.f32.gmra.mrb[0].mxu0 %v2576
    %v2667 = vpop.f32.mrb[0].mxu0
    %v2668 = vadd.f32 0.0, %v2667
    %v2669 = vpop.f32.mrb[0].mxu0
    %2670 = vmatprep.mubr.f32.mxu0 0.0
    %2671 = vmatmul.mubr.f32.gmra.mrb[0].mxu0 %v2579
    %v2672 = vpop.f32.mrb[0].mxu0
    %v2673 = vadd.f32 0.0, %v2672
    %v2674 = vpop.f32.mrb[0].mxu0
    %2675 = vmatprep.mubr.f32.mxu0 0.0
    %2676 = vmatmul.mubr.f32.gmra.mrb[0].mxu0 %v2582
    %v2677 = vpop.f32.mrb[0].mxu0
    %v2678 = vadd.f32 0.0, %v2677
    %v2679 = vpop.f32.mrb[0].mxu0
    %2680 = vmatprep.mubr.f32.mxu0 0.0
    %2681 = vmatmul.mubr.f32.gmra.mrb[0].mxu0 %v2585
    %v2682 = vpop.f32.mrb[0].mxu0
    %v2683 = vadd.f32 0.0, %v2682
    %v2684 = vpop.f32.mrb[0].mxu0
    %2685 = vmatprep.mubr.f32.mxu0 0.0
    %2686 = vmatmul.mubr.f32.gmra.mrb[0].mxu0 %v2588
    %v2687 = vpop.f32.mrb[0].mxu0
    %v2688 = vadd.f32 0.0, %v2687
    %v2689 = vpop.f32.mrb[0].mxu0
    %2690 = vmatprep.mubr.f32.mxu0 0.0
    %2691 = vmatmul.mubr.f32.gmra.mrb[0].mxu0 %v2591
    %v2692 = vpop.f32.mrb[0].mxu0
    %v2693 = vadd.f32 0.0, %v2692
    %v2694 = vpop.f32.mrb[0].mxu0
    %2695 = vmatprep.mubr.f32.mxu0 0.0
    %2696 = vmatmul.mubr.f32.gmra.mrb[0].mxu0 %v2594
    %v2697 = vpop.f32.mrb[0].mxu0
    %v2698 = vadd.f32 0.0, %v2697
    %v2699 = vpop.f32.mrb[0].mxu0
    %2700 = vdwg.mxu0
    %2701 = vmatprep.subr.mxu0 0.0
    %2702 = vmatpush1.msra.mxu0 %v2663
    %2703 = vmatprep.subr.mxu0 0.0
    %2704 = vmatpush1.msra.mxu0 %v2668
    %2705 = vmatprep.subr.mxu0 0.0
    %2706 = vmatpush1.msra.mxu0 %v2673
    %2707 = vmatprep.subr.mxu0 0.0
    %2708 = vmatpush1.msra.mxu0 %v2678
    %2709 = vmatprep.subr.mxu0 0.0
    %2710 = vmatpush1.msra.mxu0 %v2683
    %2711 = vmatprep.subr.mxu0 0.0
    %2712 = vmatpush1.msra.mxu0 %v2688
    %2713 = vmatprep.subr.mxu0 0.0
    %2714 = vmatpush1.msra.mxu0 %v2693
    %2715 = vmatprep.subr.mxu0 0.0
    %2716 = vmatpush1.msra.mxu0 %v2698
    %2717 = vmatprep.subr.mxu0 0.0
    %2718 = vmatpush1.msra.mxu0 0.0
    %2719 = vmatprep.subr.mxu0 0.0
    %2720 = vmatpush1.msra.mxu0 0.0
    %2721 = vmatprep.subr.mxu0 0.0
    %2722 = vmatpush1.msra.mxu0 0.0
    %2723 = vmatprep.subr.mxu0 0.0
    %2724 = vmatpush1.msra.mxu0 0.0
    %2725 = vmatprep.subr.mxu0 0.0
    %2726 = vmatpush1.msra.mxu0 0.0
    %2727 = vmatprep.subr.mxu0 0.0
    %2728 = vmatpush1.msra.mxu0 0.0
    %2729 = vmatprep.subr.mxu0 0.0
    %2730 = vmatpush1.msra.mxu0 0.0
    %2731 = vmatprep.subr.mxu0 0.0
    %2732 = vmatpush1.msra.mxu0 0.0
    %2733 = vmatprep.subr.mxu0 0.0
    %2734 = vmatpush1.msra.mxu0 0.0
    %2735 = vmatprep.subr.mxu0 0.0
    %2736 = vmatpush1.msra.mxu0 0.0
    %2737 = vmatprep.subr.mxu0 0.0
    %2738 = vmatpush1.msra.mxu0 0.0
    %2739 = vmatprep.subr.mxu0 0.0
    %2740 = vmatpush1.msra.mxu0 0.0
    %2741 = vmatprep.subr.mxu0 0.0
    %2742 = vmatpush1.msra.mxu0 0.0
    %2743 = vmatprep.subr.mxu0 0.0
    %2744 = vmatpush1.msra.mxu0 0.0
    %2745 = vmatprep.subr.mxu0 0.0
    %2746 = vmatpush1.msra.mxu0 0.0
    %2747 = vmatprep.subr.mxu0 0.0
    %2748 = vmatpush1.msra.mxu0 0.0
    %2749 = vmatprep.subr.mxu0 0.0
    %2750 = vmatpush1.msra.mxu0 0.0
    %2751 = vmatprep.subr.mxu0 0.0
    %2752 = vmatpush1.msra.mxu0 0.0
    %2753 = vmatprep.subr.mxu0 0.0
    %2754 = vmatpush1.msra.mxu0 0.0
    %2755 = vmatprep.subr.mxu0 0.0
    %2756 = vmatpush1.msra.mxu0 0.0
    %2757 = vmatprep.subr.mxu0 0.0
    %2758 = vmatpush1.msra.mxu0 0.0
    %2759 = vmatprep.subr.mxu0 0.0
    %2760 = vmatpush1.msra.mxu0 0.0
    %2761 = vmatprep.subr.mxu0 0.0
    %2762 = vmatpush1.msra.mxu0 0.0
    %2763 = vmatprep.subr.mxu0 0.0
    %2764 = vmatpush1.msra.mxu0 0.0
    %2765 = vmatprep.mubr.f32.mxu0 0.0
    %2766 = vmatmul.mubr.f32.gmra.mrb[0].mxu0 %v83
    %v2767 = vpop.f32.mrb[0].mxu0
    %v2768 = vadd.f32 0.0, %v2767
    %v2769 = vpop.f32.mrb[0].mxu0
    %2770 = vmatprep.mubr.f32.mxu0 0.0
    %2771 = vmatmul.mubr.f32.gmra.mrb[0].mxu0 %v86
    %v2772 = vpop.f32.mrb[0].mxu0
    %v2773 = vadd.f32 0.0, %v2772
    %v2774 = vpop.f32.mrb[0].mxu0
    %2775 = vmatprep.mubr.f32.mxu0 0.0
    %2776 = vmatmul.mubr.f32.gmra.mrb[0].mxu0 %v89
    %v2777 = vpop.f32.mrb[0].mxu0
    %v2778 = vadd.f32 0.0, %v2777
    %v2779 = vpop.f32.mrb[0].mxu0
    %2780 = vmatprep.mubr.f32.mxu0 0.0
    %2781 = vmatmul.mubr.f32.gmra.mrb[0].mxu0 %v92
    %v2782 = vpop.f32.mrb[0].mxu0
    %v2783 = vadd.f32 0.0, %v2782
    %v2784 = vpop.f32.mrb[0].mxu0
    %2785 = vmatprep.mubr.f32.mxu0 0.0
    %2786 = vmatmul.mubr.f32.gmra.mrb[0].mxu0 %v95
    %v2787 = vpop.f32.mrb[0].mxu0
    %v2788 = vadd.f32 0.0, %v2787
    %v2789 = vpop.f32.mrb[0].mxu0
    %2790 = vmatprep.mubr.f32.mxu0 0.0
    %2791 = vmatmul.mubr.f32.gmra.mrb[0].mxu0 %v98
    %v2792 = vpop.f32.mrb[0].mxu0
    %v2793 = vadd.f32 0.0, %v2792
    %v2794 = vpop.f32.mrb[0].mxu0
    %2795 = vmatprep.mubr.f32.mxu0 0.0
    %2796 = vmatmul.mubr.f32.gmra.mrb[0].mxu0 %v101
    %v2797 = vpop.f32.mrb[0].mxu0
    %v2798 = vadd.f32 0.0, %v2797
    %v2799 = vpop.f32.mrb[0].mxu0
    %2800 = vmatprep.mubr.f32.mxu0 0.0
    %2801 = vmatmul.mubr.f32.gmra.mrb[0].mxu0 %v104
    %v2802 = vpop.f32.mrb[0].mxu0
    %v2803 = vadd.f32 0.0, %v2802
    %v2804 = vpop.f32.mrb[0].mxu0
    %2805 = vdwg.mxu0
    %v2806 = vsel %vm211, %v2768, 0.0
    %2807 = vadd.xlane.f32.xlu0 %v2806
    %v2808 = vpop.xlane.xlu0 %2807
    %v2809 = vsel %vm211, %v2773, 0.0
    %2810 = vadd.xlane.f32.xlu0 %v2809
    %v2811 = vpop.xlane.xlu0 %2810
    %v2812 = vsel %vm211, %v2778, 0.0
    %2813 = vadd.xlane.f32.xlu0 %v2812
    %v2814 = vpop.xlane.xlu0 %2813
    %v2815 = vsel %vm211, %v2783, 0.0
    %2816 = vadd.xlane.f32.xlu0 %v2815
    %v2817 = vpop.xlane.xlu0 %2816
    %v2818 = vsel %vm211, %v2788, 0.0
    %2819 = vadd.xlane.f32.xlu0 %v2818
    %v2820 = vpop.xlane.xlu0 %2819
    %v2821 = vsel %vm211, %v2793, 0.0
    %2822 = vadd.xlane.f32.xlu0 %v2821
    %v2823 = vpop.xlane.xlu0 %2822
    %v2824 = vsel %vm211, %v2798, 0.0
    %2825 = vadd.xlane.f32.xlu0 %v2824
    %v2826 = vpop.xlane.xlu0 %2825
    %v2827 = vsel %vm211, %v2803, 0.0
    %2828 = vadd.xlane.f32.xlu0 %v2827
    %v2829 = vpop.xlane.xlu0 %2828
    %v2830 = vmul.f32 %v2808, 0.00390625
    %v2831 = vmul.f32 %v2811, 0.00390625
    %v2832 = vmul.f32 %v2814, 0.00390625
    %v2833 = vmul.f32 %v2817, 0.00390625
    %v2834 = vmul.f32 %v2820, 0.00390625
    %v2835 = vmul.f32 %v2823, 0.00390625
    %v2836 = vmul.f32 %v2826, 0.00390625
    %v2837 = vmul.f32 %v2829, 0.00390625
    %v2838 = vsub.f32 %v2663, %v2830
    %v2839 = vsub.f32 %v2668, %v2831
    %v2840 = vsub.f32 %v2673, %v2832
    %v2841 = vsub.f32 %v2678, %v2833
    %v2842 = vsub.f32 %v2683, %v2834
    %v2843 = vsub.f32 %v2688, %v2835
    %v2844 = vsub.f32 %v2693, %v2836
    %v2845 = vsub.f32 %v2698, %v2837
    %v2846 = vmul.f32 %v2838, %v2838
    %v2847 = vmul.f32 %v2839, %v2839
    %v2848 = vmul.f32 %v2840, %v2840
    %v2849 = vmul.f32 %v2841, %v2841
    %v2850 = vmul.f32 %v2842, %v2842
    %v2851 = vmul.f32 %v2843, %v2843
    %v2852 = vmul.f32 %v2844, %v2844
    %v2853 = vmul.f32 %v2845, %v2845
    %2854 = vmatprep.subr.mxu0 0.0
    %2855 = vmatpush1.msra.mxu0 %v2846
    %2856 = vmatprep.subr.mxu0 0.0
    %2857 = vmatpush1.msra.mxu0 %v2847
    %2858 = vmatprep.subr.mxu0 0.0
    %2859 = vmatpush1.msra.mxu0 %v2848
    %2860 = vmatprep.subr.mxu0 0.0
    %2861 = vmatpush1.msra.mxu0 %v2849
    %2862 = vmatprep.subr.mxu0 0.0
    %2863 = vmatpush1.msra.mxu0 %v2850
    %2864 = vmatprep.subr.mxu0 0.0
    %2865 = vmatpush1.msra.mxu0 %v2851
    %2866 = vmatprep.subr.mxu0 0.0
    %2867 = vmatpush1.msra.mxu0 %v2852
    %2868 = vmatprep.subr.mxu0 0.0
    %2869 = vmatpush1.msra.mxu0 %v2853
    %2870 = vmatprep.subr.mxu0 0.0
    %2871 = vmatpush1.msra.mxu0 0.0
    %2872 = vmatprep.subr.mxu0 0.0
    %2873 = vmatpush1.msra.mxu0 0.0
    %2874 = vmatprep.subr.mxu0 0.0
    %2875 = vmatpush1.msra.mxu0 0.0
    %2876 = vmatprep.subr.mxu0 0.0
    %2877 = vmatpush1.msra.mxu0 0.0
    %2878 = vmatprep.subr.mxu0 0.0
    %2879 = vmatpush1.msra.mxu0 0.0
    %2880 = vmatprep.subr.mxu0 0.0
    %2881 = vmatpush1.msra.mxu0 0.0
    %2882 = vmatprep.subr.mxu0 0.0
    %2883 = vmatpush1.msra.mxu0 0.0
    %2884 = vmatprep.subr.mxu0 0.0
    %2885 = vmatpush1.msra.mxu0 0.0
    %2886 = vmatprep.subr.mxu0 0.0
    %2887 = vmatpush1.msra.mxu0 0.0
    %2888 = vmatprep.subr.mxu0 0.0
    %2889 = vmatpush1.msra.mxu0 0.0
    %2890 = vmatprep.subr.mxu0 0.0
    %2891 = vmatpush1.msra.mxu0 0.0
    %2892 = vmatprep.subr.mxu0 0.0
    %2893 = vmatpush1.msra.mxu0 0.0
    %2894 = vmatprep.subr.mxu0 0.0
    %2895 = vmatpush1.msra.mxu0 0.0
    %2896 = vmatprep.subr.mxu0 0.0
    %2897 = vmatpush1.msra.mxu0 0.0
    %2898 = vmatprep.subr.mxu0 0.0
    %2899 = vmatpush1.msra.mxu0 0.0
    %2900 = vmatprep.subr.mxu0 0.0
    %2901 = vmatpush1.msra.mxu0 0.0
    %2902 = vmatprep.subr.mxu0 0.0
    %2903 = vmatpush1.msra.mxu0 0.0
    %2904 = vmatprep.subr.mxu0 0.0
    %2905 = vmatpush1.msra.mxu0 0.0
    %2906 = vmatprep.subr.mxu0 0.0
    %2907 = vmatpush1.msra.mxu0 0.0
    %2908 = vmatprep.subr.mxu0 0.0
    %2909 = vmatpush1.msra.mxu0 0.0
    %2910 = vmatprep.subr.mxu0 0.0
    %2911 = vmatpush1.msra.mxu0 0.0
    %2912 = vmatprep.subr.mxu0 0.0
    %2913 = vmatpush1.msra.mxu0 0.0
    %2914 = vmatprep.subr.mxu0 0.0
    %2915 = vmatpush1.msra.mxu0 0.0
    %2916 = vmatprep.subr.mxu0 0.0
    %2917 = vmatpush1.msra.mxu0 0.0
    %2918 = vmatprep.mubr.f32.mxu0 0.0
    %2919 = vmatmul.mubr.f32.gmra.mrb[0].mxu0 %v83
    %v2920 = vpop.f32.mrb[0].mxu0
    %v2921 = vadd.f32 0.0, %v2920
    %v2922 = vpop.f32.mrb[0].mxu0
    %2923 = vmatprep.mubr.f32.mxu0 0.0
    %2924 = vmatmul.mubr.f32.gmra.mrb[0].mxu0 %v86
    %v2925 = vpop.f32.mrb[0].mxu0
    %v2926 = vadd.f32 0.0, %v2925
    %v2927 = vpop.f32.mrb[0].mxu0
    %2928 = vmatprep.mubr.f32.mxu0 0.0
    %2929 = vmatmul.mubr.f32.gmra.mrb[0].mxu0 %v89
    %v2930 = vpop.f32.mrb[0].mxu0
    %v2931 = vadd.f32 0.0, %v2930
    %v2932 = vpop.f32.mrb[0].mxu0
    %2933 = vmatprep.mubr.f32.mxu0 0.0
    %2934 = vmatmul.mubr.f32.gmra.mrb[0].mxu0 %v92
    %v2935 = vpop.f32.mrb[0].mxu0
    %v2936 = vadd.f32 0.0, %v2935
    %v2937 = vpop.f32.mrb[0].mxu0
    %2938 = vmatprep.mubr.f32.mxu0 0.0
    %2939 = vmatmul.mubr.f32.gmra.mrb[0].mxu0 %v95
    %v2940 = vpop.f32.mrb[0].mxu0
    %v2941 = vadd.f32 0.0, %v2940
    %v2942 = vpop.f32.mrb[0].mxu0
    %2943 = vmatprep.mubr.f32.mxu0 0.0
    %2944 = vmatmul.mubr.f32.gmra.mrb[0].mxu0 %v98
    %v2945 = vpop.f32.mrb[0].mxu0
    %v2946 = vadd.f32 0.0, %v2945
    %v2947 = vpop.f32.mrb[0].mxu0
    %2948 = vmatprep.mubr.f32.mxu0 0.0
    %2949 = vmatmul.mubr.f32.gmra.mrb[0].mxu0 %v101
    %v2950 = vpop.f32.mrb[0].mxu0
    %v2951 = vadd.f32 0.0, %v2950
    %v2952 = vpop.f32.mrb[0].mxu0
    %2953 = vmatprep.mubr.f32.mxu0 0.0
    %2954 = vmatmul.mubr.f32.gmra.mrb[0].mxu0 %v104
    %v2955 = vpop.f32.mrb[0].mxu0
    %v2956 = vadd.f32 0.0, %v2955
    %v2957 = vpop.f32.mrb[0].mxu0
    %2958 = vdwg.mxu0
    %v2959 = vsel %vm211, %v2921, 0.0
    %2960 = vadd.xlane.f32.xlu0 %v2959
    %v2961 = vpop.xlane.xlu0 %2960
    %v2962 = vsel %vm211, %v2926, 0.0
    %2963 = vadd.xlane.f32.xlu0 %v2962
    %v2964 = vpop.xlane.xlu0 %2963
    %v2965 = vsel %vm211, %v2931, 0.0
    %2966 = vadd.xlane.f32.xlu0 %v2965
    %v2967 = vpop.xlane.xlu0 %2966
    %v2968 = vsel %vm211, %v2936, 0.0
    %2969 = vadd.xlane.f32.xlu0 %v2968
    %v2970 = vpop.xlane.xlu0 %2969
    %v2971 = vsel %vm211, %v2941, 0.0
    %2972 = vadd.xlane.f32.xlu0 %v2971
    %v2973 = vpop.xlane.xlu0 %2972
    %v2974 = vsel %vm211, %v2946, 0.0
    %2975 = vadd.xlane.f32.xlu0 %v2974
    %v2976 = vpop.xlane.xlu0 %2975
    %v2977 = vsel %vm211, %v2951, 0.0
    %2978 = vadd.xlane.f32.xlu0 %v2977
    %v2979 = vpop.xlane.xlu0 %2978
    %v2980 = vsel %vm211, %v2956, 0.0
    %2981 = vadd.xlane.f32.xlu0 %v2980
    %v2982 = vpop.xlane.xlu0 %2981
    %v2983 = vmul.f32 %v2961, 0.00390625
    %v2984 = vmul.f32 %v2964, 0.00390625
    %v2985 = vmul.f32 %v2967, 0.00390625
    %v2986 = vmul.f32 %v2970, 0.00390625
    %v2987 = vmul.f32 %v2973, 0.00390625
    %v2988 = vmul.f32 %v2976, 0.00390625
    %v2989 = vmul.f32 %v2979, 0.00390625
    %v2990 = vmul.f32 %v2982, 0.00390625
    %v2991 = vadd.f32 %v2983, 1e-05
    %v2992 = vadd.f32 %v2984, 1e-05
    %v2993 = vadd.f32 %v2985, 1e-05
    %v2994 = vadd.f32 %v2986, 1e-05
    %v2995 = vadd.f32 %v2987, 1e-05
    %v2996 = vadd.f32 %v2988, 1e-05
    %v2997 = vadd.f32 %v2989, 1e-05
    %v2998 = vadd.f32 %v2990, 1e-05
    %v2999 = vrsqrt.pop %v2991
    %v3000 = vrsqrt.pop %v2992
    %v3001 = vrsqrt.pop %v2993
    %v3002 = vrsqrt.pop %v2994
    %v3003 = vrsqrt.pop %v2995
    %v3004 = vrsqrt.pop %v2996
    %v3005 = vrsqrt.pop %v2997
    %v3006 = vrsqrt.pop %v2998
    %v3007 = vmul.f32 %v2838, %v2999
    %v3008 = vmul.f32 %v2839, %v3000
    %v3009 = vmul.f32 %v2840, %v3001
    %v3010 = vmul.f32 %v2841, %v3002
    %v3011 = vmul.f32 %v2842, %v3003
    %v3012 = vmul.f32 %v2843, %v3004
    %v3013 = vmul.f32 %v2844, %v3005
    %v3014 = vmul.f32 %v2845, %v3006
    %s3015 = scalar_lea.vmem %s1, 64
    %v3016 = vld [vmem:[%s3015] sm:$0xff]
    %v3017 = vld [vmem:[%s3015 + $0x8] sm:$0xff]
    %v3018 = vld [vmem:[%s3015 + $0x10] sm:$0xff]
    %v3019 = vld [vmem:[%s3015 + $0x18] sm:$0xff]
    %v3020 = vld [vmem:[%s3015 + $0x20] sm:$0xff]
    %v3021 = vld [vmem:[%s3015 + $0x28] sm:$0xff]
    %v3022 = vld [vmem:[%s3015 + $0x30] sm:$0xff]
    %v3023 = vld [vmem:[%s3015 + $0x38] sm:$0xff]
    %3025 = vset.pattern.permute.xlu0 0
    %3026 = vperm.xlu0 %3025, %v3016
    %v3027 = vpop.permute.xlu0 %3026
    %3030 = vset.pattern.permute.xlu0 0
    %3031 = vperm.xlu0 %3030, %v3017
    %v3032 = vpop.permute.xlu0 %3031
    %3035 = vset.pattern.permute.xlu0 0
    %3036 = vperm.xlu0 %3035, %v3018
    %v3037 = vpop.permute.xlu0 %3036
    %3040 = vset.pattern.permute.xlu0 0
    %3041 = vperm.xlu0 %3040, %v3019
    %v3042 = vpop.permute.xlu0 %3041
    %3045 = vset.pattern.permute.xlu0 0
    %3046 = vperm.xlu0 %3045, %v3020
    %v3047 = vpop.permute.xlu0 %3046
    %3050 = vset.pattern.permute.xlu0 0
    %3051 = vperm.xlu0 %3050, %v3021
    %v3052 = vpop.permute.xlu0 %3051
    %3055 = vset.pattern.permute.xlu0 0
    %3056 = vperm.xlu0 %3055, %v3022
    %v3057 = vpop.permute.xlu0 %3056
    %3060 = vset.pattern.permute.xlu0 0
    %3061 = vperm.xlu0 %3060, %v3023
    %v3062 = vpop.permute.xlu0 %3061
    %v3064 = vmul.f32 %v3007, %v3027
    %v3065 = vmul.f32 %v3008, %v3032
    %v3066 = vmul.f32 %v3009, %v3037
    %v3067 = vmul.f32 %v3010, %v3042
    %v3068 = vmul.f32 %v3011, %v3047
    %v3069 = vmul.f32 %v3012, %v3052
    %v3070 = vmul.f32 %v3013, %v3057
    %v3071 = vmul.f32 %v3014, %v3062
    %s3072 = scalar_lea.vmem %s2, 64
    %v3073 = vld [vmem:[%s3072] sm:$0xff]
    %v3074 = vld [vmem:[%s3072 + $0x8] sm:$0xff]
    %v3075 = vld [vmem:[%s3072 + $0x10] sm:$0xff]
    %v3076 = vld [vmem:[%s3072 + $0x18] sm:$0xff]
    %v3077 = vld [vmem:[%s3072 + $0x20] sm:$0xff]
    %v3078 = vld [vmem:[%s3072 + $0x28] sm:$0xff]
    %v3079 = vld [vmem:[%s3072 + $0x30] sm:$0xff]
    %v3080 = vld [vmem:[%s3072 + $0x38] sm:$0xff]
    %3082 = vset.pattern.permute.xlu0 0
    %3083 = vperm.xlu0 %3082, %v3073
    %v3084 = vpop.permute.xlu0 %3083
    %3087 = vset.pattern.permute.xlu0 0
    %3088 = vperm.xlu0 %3087, %v3074
    %v3089 = vpop.permute.xlu0 %3088
    %3092 = vset.pattern.permute.xlu0 0
    %3093 = vperm.xlu0 %3092, %v3075
    %v3094 = vpop.permute.xlu0 %3093
    %3097 = vset.pattern.permute.xlu0 0
    %3098 = vperm.xlu0 %3097, %v3076
    %v3099 = vpop.permute.xlu0 %3098
    %3102 = vset.pattern.permute.xlu0 0
    %3103 = vperm.xlu0 %3102, %v3077
    %v3104 = vpop.permute.xlu0 %3103
    %3107 = vset.pattern.permute.xlu0 0
    %3108 = vperm.xlu0 %3107, %v3078
    %v3109 = vpop.permute.xlu0 %3108
    %3112 = vset.pattern.permute.xlu0 0
    %3113 = vperm.xlu0 %3112, %v3079
    %v3114 = vpop.permute.xlu0 %3113
    %3117 = vset.pattern.permute.xlu0 0
    %3118 = vperm.xlu0 %3117, %v3080
    %v3119 = vpop.permute.xlu0 %3118
    %v3121 = vadd.f32 %v3064, %v3084
    %v3122 = vadd.f32 %v3065, %v3089
    %v3123 = vadd.f32 %v3066, %v3094
    %v3124 = vadd.f32 %v3067, %v3099
    %v3125 = vadd.f32 %v3068, %v3104
    %v3126 = vadd.f32 %v3069, %v3109
    %v3127 = vadd.f32 %v3070, %v3114
    %v3128 = vadd.f32 %v3071, %v3119
    %s3129 = scalar_lea.vmem %s7, 32
    %v3130 = vld [vmem:[%s3129] sm:$0xff]
    %v3131 = vld [vmem:[%s3129 + $0x8] sm:$0xff]
    %v3132 = vld [vmem:[%s3129 + $0x10] sm:$0xff]
    %v3133 = vld [vmem:[%s3129 + $0x18] sm:$0xff]
    %s3134 = scalar_lea.vmem %s10, 1
    %v3135 = vld [vmem:[%s3134] sm:$0x1]
    %v3137 = vlaneseq
    %v3138 = vshrl.u32 %v3137, 7
    %v3139 = vsub.s32 0, %v3138
    %v3140 = vrot.slane %v3135, %v3139
    %v3143 = vsel %vm211, %v3121, 0
    %v3146 = vsel %vm211, %v3122, 0
    %v3149 = vsel %vm211, %v3123, 0
    %v3152 = vsel %vm211, %v3124, 0
    %v3155 = vsel %vm211, %v3125, 0
    %v3158 = vsel %vm211, %v3126, 0
    %v3161 = vsel %vm211, %v3127, 0
    %v3164 = vsel %vm211, %v3128, 0
    %3166 = vmatprep.subr.mxu0 0.0
    %3167 = vmatpush1.msra.mxu0 %v3130
    %3168 = vmatprep.subr.mxu0 0.0
    %3169 = vmatpush1.msra.mxu0 %v3131
    %3170 = vmatprep.subr.mxu0 0.0
    %3171 = vmatpush1.msra.mxu0 %v3132
    %3172 = vmatprep.subr.mxu0 0.0
    %3173 = vmatpush1.msra.mxu0 %v3133
    %3174 = vmatprep.subr.mxu0 0.0
    %3175 = vmatpush1.msra.mxu0 0.0
    %3176 = vmatprep.subr.mxu0 0.0
    %3177 = vmatpush1.msra.mxu0 0.0
    %3178 = vmatprep.subr.mxu0 0.0
    %3179 = vmatpush1.msra.mxu0 0.0
    %3180 = vmatprep.subr.mxu0 0.0
    %3181 = vmatpush1.msra.mxu0 0.0
    %3182 = vmatprep.subr.mxu0 0.0
    %3183 = vmatpush1.msra.mxu0 0.0
    %3184 = vmatprep.subr.mxu0 0.0
    %3185 = vmatpush1.msra.mxu0 0.0
    %3186 = vmatprep.subr.mxu0 0.0
    %3187 = vmatpush1.msra.mxu0 0.0
    %3188 = vmatprep.subr.mxu0 0.0
    %3189 = vmatpush1.msra.mxu0 0.0
    %3190 = vmatprep.subr.mxu0 0.0
    %3191 = vmatpush1.msra.mxu0 0.0
    %3192 = vmatprep.subr.mxu0 0.0
    %3193 = vmatpush1.msra.mxu0 0.0
    %3194 = vmatprep.subr.mxu0 0.0
    %3195 = vmatpush1.msra.mxu0 0.0
    %3196 = vmatprep.subr.mxu0 0.0
    %3197 = vmatpush1.msra.mxu0 0.0
    %3198 = vmatprep.subr.mxu0 0.0
    %3199 = vmatpush1.msra.mxu0 0.0
    %3200 = vmatprep.subr.mxu0 0.0
    %3201 = vmatpush1.msra.mxu0 0.0
    %3202 = vmatprep.subr.mxu0 0.0
    %3203 = vmatpush1.msra.mxu0 0.0
    %3204 = vmatprep.subr.mxu0 0.0
    %3205 = vmatpush1.msra.mxu0 0.0
    %3206 = vmatprep.subr.mxu0 0.0
    %3207 = vmatpush1.msra.mxu0 0.0
    %3208 = vmatprep.subr.mxu0 0.0
    %3209 = vmatpush1.msra.mxu0 0.0
    %3210 = vmatprep.subr.mxu0 0.0
    %3211 = vmatpush1.msra.mxu0 0.0
    %3212 = vmatprep.subr.mxu0 0.0
    %3213 = vmatpush1.msra.mxu0 0.0
    %3214 = vmatprep.subr.mxu0 0.0
    %3215 = vmatpush1.msra.mxu0 0.0
    %3216 = vmatprep.subr.mxu0 0.0
    %3217 = vmatpush1.msra.mxu0 0.0
    %3218 = vmatprep.subr.mxu0 0.0
    %3219 = vmatpush1.msra.mxu0 0.0
    %3220 = vmatprep.subr.mxu0 0.0
    %3221 = vmatpush1.msra.mxu0 0.0
    %3222 = vmatprep.subr.mxu0 0.0
    %3223 = vmatpush1.msra.mxu0 0.0
    %3224 = vmatprep.subr.mxu0 0.0
    %3225 = vmatpush1.msra.mxu0 0.0
    %3226 = vmatprep.subr.mxu0 0.0
    %3227 = vmatpush1.msra.mxu0 0.0
    %3228 = vmatprep.subr.mxu0 0.0
    %3229 = vmatpush1.msra.mxu0 0.0
    %3230 = vmatprep.mubr.f32.mxu0 0.0
    %3231 = vmatmul.mubr.f32.gmra.mrb[0].mxu0 %v3143
    %v3232 = vpop.f32.mrb[0].mxu0
    %v3233 = vadd.f32 %v3140, %v3232
    %v3234 = vpop.f32.mrb[0].mxu0
    %3235 = vmatprep.mubr.f32.mxu0 0.0
    %3236 = vmatmul.mubr.f32.gmra.mrb[0].mxu0 %v3146
    %v3237 = vpop.f32.mrb[0].mxu0
    %v3238 = vadd.f32 %v3140, %v3237
    %v3239 = vpop.f32.mrb[0].mxu0
    %3240 = vmatprep.mubr.f32.mxu0 0.0
    %3241 = vmatmul.mubr.f32.gmra.mrb[0].mxu0 %v3149
    %v3242 = vpop.f32.mrb[0].mxu0
    %v3243 = vadd.f32 %v3140, %v3242
    %v3244 = vpop.f32.mrb[0].mxu0
    %3245 = vmatprep.mubr.f32.mxu0 0.0
    %3246 = vmatmul.mubr.f32.gmra.mrb[0].mxu0 %v3152
    %v3247 = vpop.f32.mrb[0].mxu0
    %v3248 = vadd.f32 %v3140, %v3247
    %v3249 = vpop.f32.mrb[0].mxu0
    %3250 = vmatprep.mubr.f32.mxu0 0.0
    %3251 = vmatmul.mubr.f32.gmra.mrb[0].mxu0 %v3155
    %v3252 = vpop.f32.mrb[0].mxu0
    %v3253 = vadd.f32 %v3140, %v3252
    %v3254 = vpop.f32.mrb[0].mxu0
    %3255 = vmatprep.mubr.f32.mxu0 0.0
    %3256 = vmatmul.mubr.f32.gmra.mrb[0].mxu0 %v3158
    %v3257 = vpop.f32.mrb[0].mxu0
    %v3258 = vadd.f32 %v3140, %v3257
    %v3259 = vpop.f32.mrb[0].mxu0
    %3260 = vmatprep.mubr.f32.mxu0 0.0
    %3261 = vmatmul.mubr.f32.gmra.mrb[0].mxu0 %v3161
    %v3262 = vpop.f32.mrb[0].mxu0
    %v3263 = vadd.f32 %v3140, %v3262
    %v3264 = vpop.f32.mrb[0].mxu0
    %3265 = vmatprep.mubr.f32.mxu0 0.0
    %3266 = vmatmul.mubr.f32.gmra.mrb[0].mxu0 %v3164
    %v3267 = vpop.f32.mrb[0].mxu0
    %v3268 = vadd.f32 %v3140, %v3267
    %v3269 = vpop.f32.mrb[0].mxu0
    %3270 = vdwg.mxu0
    %s3271 = scalar_lea.vmem %s8, 32
    %v3272 = vld [vmem:[%s3271] sm:$0xff]
    %v3273 = vld [vmem:[%s3271 + $0x8] sm:$0xff]
    %v3274 = vld [vmem:[%s3271 + $0x10] sm:$0xff]
    %v3275 = vld [vmem:[%s3271 + $0x18] sm:$0xff]
    %s3276 = scalar_lea.vmem %s11, 1
    %v3277 = vld [vmem:[%s3276] sm:$0x1]
    %v3279 = vlaneseq
    %v3280 = vshrl.u32 %v3279, 7
    %v3281 = vsub.s32 0, %v3280
    %v3282 = vrot.slane %v3277, %v3281
    %3284 = vmatprep.subr.mxu0 0.0
    %3285 = vmatpush1.msra.mxu0 %v3272
    %3286 = vmatprep.subr.mxu0 0.0
    %3287 = vmatpush1.msra.mxu0 %v3273
    %3288 = vmatprep.subr.mxu0 0.0
    %3289 = vmatpush1.msra.mxu0 %v3274
    %3290 = vmatprep.subr.mxu0 0.0
    %3291 = vmatpush1.msra.mxu0 %v3275
    %3292 = vmatprep.subr.mxu0 0.0
    %3293 = vmatpush1.msra.mxu0 0.0
    %3294 = vmatprep.subr.mxu0 0.0
    %3295 = vmatpush1.msra.mxu0 0.0
    %3296 = vmatprep.subr.mxu0 0.0
    %3297 = vmatpush1.msra.mxu0 0.0
    %3298 = vmatprep.subr.mxu0 0.0
    %3299 = vmatpush1.msra.mxu0 0.0
    %3300 = vmatprep.subr.mxu0 0.0
    %3301 = vmatpush1.msra.mxu0 0.0
    %3302 = vmatprep.subr.mxu0 0.0
    %3303 = vmatpush1.msra.mxu0 0.0
    %3304 = vmatprep.subr.mxu0 0.0
    %3305 = vmatpush1.msra.mxu0 0.0
    %3306 = vmatprep.subr.mxu0 0.0
    %3307 = vmatpush1.msra.mxu0 0.0
    %3308 = vmatprep.subr.mxu0 0.0
    %3309 = vmatpush1.msra.mxu0 0.0
    %3310 = vmatprep.subr.mxu0 0.0
    %3311 = vmatpush1.msra.mxu0 0.0
    %3312 = vmatprep.subr.mxu0 0.0
    %3313 = vmatpush1.msra.mxu0 0.0
    %3314 = vmatprep.subr.mxu0 0.0
    %3315 = vmatpush1.msra.mxu0 0.0
    %3316 = vmatprep.subr.mxu0 0.0
    %3317 = vmatpush1.msra.mxu0 0.0
    %3318 = vmatprep.subr.mxu0 0.0
    %3319 = vmatpush1.msra.mxu0 0.0
    %3320 = vmatprep.subr.mxu0 0.0
    %3321 = vmatpush1.msra.mxu0 0.0
    %3322 = vmatprep.subr.mxu0 0.0
    %3323 = vmatpush1.msra.mxu0 0.0
    %3324 = vmatprep.subr.mxu0 0.0
    %3325 = vmatpush1.msra.mxu0 0.0
    %3326 = vmatprep.subr.mxu0 0.0
    %3327 = vmatpush1.msra.mxu0 0.0
    %3328 = vmatprep.subr.mxu0 0.0
    %3329 = vmatpush1.msra.mxu0 0.0
    %3330 = vmatprep.subr.mxu0 0.0
    %3331 = vmatpush1.msra.mxu0 0.0
    %3332 = vmatprep.subr.mxu0 0.0
    %3333 = vmatpush1.msra.mxu0 0.0
    %3334 = vmatprep.subr.mxu0 0.0
    %3335 = vmatpush1.msra.mxu0 0.0
    %3336 = vmatprep.subr.mxu0 0.0
    %3337 = vmatpush1.msra.mxu0 0.0
    %3338 = vmatprep.subr.mxu0 0.0
    %3339 = vmatpush1.msra.mxu0 0.0
    %3340 = vmatprep.subr.mxu0 0.0
    %3341 = vmatpush1.msra.mxu0 0.0
    %3342 = vmatprep.subr.mxu0 0.0
    %3343 = vmatpush1.msra.mxu0 0.0
    %3344 = vmatprep.subr.mxu0 0.0
    %3345 = vmatpush1.msra.mxu0 0.0
    %3346 = vmatprep.subr.mxu0 0.0
    %3347 = vmatpush1.msra.mxu0 0.0
    %3348 = vmatprep.mubr.f32.mxu0 0.0
    %3349 = vmatmul.mubr.f32.gmra.mrb[0].mxu0 %v3143
    %v3350 = vpop.f32.mrb[0].mxu0
    %v3351 = vadd.f32 %v3282, %v3350
    %v3352 = vpop.f32.mrb[0].mxu0
    %3353 = vmatprep.mubr.f32.mxu0 0.0
    %3354 = vmatmul.mubr.f32.gmra.mrb[0].mxu0 %v3146
    %v3355 = vpop.f32.mrb[0].mxu0
    %v3356 = vadd.f32 %v3282, %v3355
    %v3357 = vpop.f32.mrb[0].mxu0
    %3358 = vmatprep.mubr.f32.mxu0 0.0
    %3359 = vmatmul.mubr.f32.gmra.mrb[0].mxu0 %v3149
    %v3360 = vpop.f32.mrb[0].mxu0
    %v3361 = vadd.f32 %v3282, %v3360
    %v3362 = vpop.f32.mrb[0].mxu0
    %3363 = vmatprep.mubr.f32.mxu0 0.0
    %3364 = vmatmul.mubr.f32.gmra.mrb[0].mxu0 %v3152
    %v3365 = vpop.f32.mrb[0].mxu0
    %v3366 = vadd.f32 %v3282, %v3365
    %v3367 = vpop.f32.mrb[0].mxu0
    %3368 = vmatprep.mubr.f32.mxu0 0.0
    %3369 = vmatmul.mubr.f32.gmra.mrb[0].mxu0 %v3155
    %v3370 = vpop.f32.mrb[0].mxu0
    %v3371 = vadd.f32 %v3282, %v3370
    %v3372 = vpop.f32.mrb[0].mxu0
    %3373 = vmatprep.mubr.f32.mxu0 0.0
    %3374 = vmatmul.mubr.f32.gmra.mrb[0].mxu0 %v3158
    %v3375 = vpop.f32.mrb[0].mxu0
    %v3376 = vadd.f32 %v3282, %v3375
    %v3377 = vpop.f32.mrb[0].mxu0
    %3378 = vmatprep.mubr.f32.mxu0 0.0
    %3379 = vmatmul.mubr.f32.gmra.mrb[0].mxu0 %v3161
    %v3380 = vpop.f32.mrb[0].mxu0
    %v3381 = vadd.f32 %v3282, %v3380
    %v3382 = vpop.f32.mrb[0].mxu0
    %3383 = vmatprep.mubr.f32.mxu0 0.0
    %3384 = vmatmul.mubr.f32.gmra.mrb[0].mxu0 %v3164
    %v3385 = vpop.f32.mrb[0].mxu0
    %v3386 = vadd.f32 %v3282, %v3385
    %v3387 = vpop.f32.mrb[0].mxu0
    %3388 = vdwg.mxu0
    %s3389 = scalar_lea.vmem %s9, 32
    %v3390 = vld [vmem:[%s3389] sm:$0xff]
    %v3391 = vld [vmem:[%s3389 + $0x8] sm:$0xff]
    %v3392 = vld [vmem:[%s3389 + $0x10] sm:$0xff]
    %v3393 = vld [vmem:[%s3389 + $0x18] sm:$0xff]
    %s3394 = scalar_lea.vmem %s12, 1
    %v3395 = vld [vmem:[%s3394] sm:$0x1]
    %v3397 = vlaneseq
    %v3398 = vshrl.u32 %v3397, 7
    %v3399 = vsub.s32 0, %v3398
    %v3400 = vrot.slane %v3395, %v3399
    %3402 = vmatprep.subr.mxu0 0.0
    %3403 = vmatpush1.msra.mxu0 %v3390
    %3404 = vmatprep.subr.mxu0 0.0
    %3405 = vmatpush1.msra.mxu0 %v3391
    %3406 = vmatprep.subr.mxu0 0.0
    %3407 = vmatpush1.msra.mxu0 %v3392
    %3408 = vmatprep.subr.mxu0 0.0
    %3409 = vmatpush1.msra.mxu0 %v3393
    %3410 = vmatprep.subr.mxu0 0.0
    %3411 = vmatpush1.msra.mxu0 0.0
    %3412 = vmatprep.subr.mxu0 0.0
    %3413 = vmatpush1.msra.mxu0 0.0
    %3414 = vmatprep.subr.mxu0 0.0
    %3415 = vmatpush1.msra.mxu0 0.0
    %3416 = vmatprep.subr.mxu0 0.0
    %3417 = vmatpush1.msra.mxu0 0.0
    %3418 = vmatprep.subr.mxu0 0.0
    %3419 = vmatpush1.msra.mxu0 0.0
    %3420 = vmatprep.subr.mxu0 0.0
    %3421 = vmatpush1.msra.mxu0 0.0
    %3422 = vmatprep.subr.mxu0 0.0
    %3423 = vmatpush1.msra.mxu0 0.0
    %3424 = vmatprep.subr.mxu0 0.0
    %3425 = vmatpush1.msra.mxu0 0.0
    %3426 = vmatprep.subr.mxu0 0.0
    %3427 = vmatpush1.msra.mxu0 0.0
    %3428 = vmatprep.subr.mxu0 0.0
    %3429 = vmatpush1.msra.mxu0 0.0
    %3430 = vmatprep.subr.mxu0 0.0
    %3431 = vmatpush1.msra.mxu0 0.0
    %3432 = vmatprep.subr.mxu0 0.0
    %3433 = vmatpush1.msra.mxu0 0.0
    %3434 = vmatprep.subr.mxu0 0.0
    %3435 = vmatpush1.msra.mxu0 0.0
    %3436 = vmatprep.subr.mxu0 0.0
    %3437 = vmatpush1.msra.mxu0 0.0
    %3438 = vmatprep.subr.mxu0 0.0
    %3439 = vmatpush1.msra.mxu0 0.0
    %3440 = vmatprep.subr.mxu0 0.0
    %3441 = vmatpush1.msra.mxu0 0.0
    %3442 = vmatprep.subr.mxu0 0.0
    %3443 = vmatpush1.msra.mxu0 0.0
    %3444 = vmatprep.subr.mxu0 0.0
    %3445 = vmatpush1.msra.mxu0 0.0
    %3446 = vmatprep.subr.mxu0 0.0
    %3447 = vmatpush1.msra.mxu0 0.0
    %3448 = vmatprep.subr.mxu0 0.0
    %3449 = vmatpush1.msra.mxu0 0.0
    %3450 = vmatprep.subr.mxu0 0.0
    %3451 = vmatpush1.msra.mxu0 0.0
    %3452 = vmatprep.subr.mxu0 0.0
    %3453 = vmatpush1.msra.mxu0 0.0
    %3454 = vmatprep.subr.mxu0 0.0
    %3455 = vmatpush1.msra.mxu0 0.0
    %3456 = vmatprep.subr.mxu0 0.0
    %3457 = vmatpush1.msra.mxu0 0.0
    %3458 = vmatprep.subr.mxu0 0.0
    %3459 = vmatpush1.msra.mxu0 0.0
    %3460 = vmatprep.subr.mxu0 0.0
    %3461 = vmatpush1.msra.mxu0 0.0
    %3462 = vmatprep.subr.mxu0 0.0
    %3463 = vmatpush1.msra.mxu0 0.0
    %3464 = vmatprep.subr.mxu0 0.0
    %3465 = vmatpush1.msra.mxu0 0.0
    %3466 = vmatprep.mubr.f32.mxu0 0.0
    %3467 = vmatmul.mubr.f32.gmra.mrb[0].mxu0 %v3143
    %v3468 = vpop.f32.mrb[0].mxu0
    %v3469 = vadd.f32 %v3400, %v3468
    %v3470 = vpop.f32.mrb[0].mxu0
    %3471 = vmatprep.mubr.f32.mxu0 0.0
    %3472 = vmatmul.mubr.f32.gmra.mrb[0].mxu0 %v3146
    %v3473 = vpop.f32.mrb[0].mxu0
    %v3474 = vadd.f32 %v3400, %v3473
    %v3475 = vpop.f32.mrb[0].mxu0
    %3476 = vmatprep.mubr.f32.mxu0 0.0
    %3477 = vmatmul.mubr.f32.gmra.mrb[0].mxu0 %v3149
    %v3478 = vpop.f32.mrb[0].mxu0
    %v3479 = vadd.f32 %v3400, %v3478
    %v3480 = vpop.f32.mrb[0].mxu0
    %3481 = vmatprep.mubr.f32.mxu0 0.0
    %3482 = vmatmul.mubr.f32.gmra.mrb[0].mxu0 %v3152
    %v3483 = vpop.f32.mrb[0].mxu0
    %v3484 = vadd.f32 %v3400, %v3483
    %v3485 = vpop.f32.mrb[0].mxu0
    %3486 = vmatprep.mubr.f32.mxu0 0.0
    %3487 = vmatmul.mubr.f32.gmra.mrb[0].mxu0 %v3155
    %v3488 = vpop.f32.mrb[0].mxu0
    %v3489 = vadd.f32 %v3400, %v3488
    %v3490 = vpop.f32.mrb[0].mxu0
    %3491 = vmatprep.mubr.f32.mxu0 0.0
    %3492 = vmatmul.mubr.f32.gmra.mrb[0].mxu0 %v3158
    %v3493 = vpop.f32.mrb[0].mxu0
    %v3494 = vadd.f32 %v3400, %v3493
    %v3495 = vpop.f32.mrb[0].mxu0
    %3496 = vmatprep.mubr.f32.mxu0 0.0
    %3497 = vmatmul.mubr.f32.gmra.mrb[0].mxu0 %v3161
    %v3498 = vpop.f32.mrb[0].mxu0
    %v3499 = vadd.f32 %v3400, %v3498
    %v3500 = vpop.f32.mrb[0].mxu0
    %3501 = vmatprep.mubr.f32.mxu0 0.0
    %3502 = vmatmul.mubr.f32.gmra.mrb[0].mxu0 %v3164
    %v3503 = vpop.f32.mrb[0].mxu0
    %v3504 = vadd.f32 %v3400, %v3503
    %v3505 = vpop.f32.mrb[0].mxu0
    %3506 = vdwg.mxu0
    %v3507 = vmul.f32 %v3351, %v910
    %v3508 = vmul.f32 %v3356, %v910
    %v3509 = vmul.f32 %v3361, %v910
    %v3510 = vmul.f32 %v3366, %v910
    %v3511 = vmul.f32 %v3371, %v910
    %v3512 = vmul.f32 %v3376, %v910
    %v3513 = vmul.f32 %v3381, %v910
    %v3514 = vmul.f32 %v3386, %v910
    %v3516 = vsel %vm211, %v3233, 0
    %v3519 = vsel %vm211, %v3238, 0
    %v3522 = vsel %vm211, %v3243, 0
    %v3525 = vsel %vm211, %v3248, 0
    %v3528 = vsel %vm211, %v3253, 0
    %v3531 = vsel %vm211, %v3258, 0
    %v3534 = vsel %vm211, %v3263, 0
    %v3537 = vsel %vm211, %v3268, 0
    %v3540 = vsel %vm211, %v3507, 0
    %v3543 = vsel %vm211, %v3508, 0
    %v3546 = vsel %vm211, %v3509, 0
    %v3549 = vsel %vm211, %v3510, 0
    %v3552 = vsel %vm211, %v3511, 0
    %v3555 = vsel %vm211, %v3512, 0
    %v3558 = vsel %vm211, %v3513, 0
    %v3561 = vsel %vm211, %v3514, 0
    %3563 = vmatprep.subr.mxu0 0.0
    %3564 = vmatpush1.xpose.msra.mxu0 %v3540
    %3565 = vmatprep.subr.mxu0 0.0
    %3566 = vmatpush1.xpose.msra.mxu0 %v3543
    %3567 = vmatprep.subr.mxu0 0.0
    %3568 = vmatpush1.xpose.msra.mxu0 %v3546
    %3569 = vmatprep.subr.mxu0 0.0
    %3570 = vmatpush1.xpose.msra.mxu0 %v3549
    %3571 = vmatprep.subr.mxu0 0.0
    %3572 = vmatpush1.xpose.msra.mxu0 %v3552
    %3573 = vmatprep.subr.mxu0 0.0
    %3574 = vmatpush1.xpose.msra.mxu0 %v3555
    %3575 = vmatprep.subr.mxu0 0.0
    %3576 = vmatpush1.xpose.msra.mxu0 %v3558
    %3577 = vmatprep.subr.mxu0 0.0
    %3578 = vmatpush1.xpose.msra.mxu0 %v3561
    %3579 = vmatprep.subr.mxu0 0.0
    %3580 = vmatpush1.xpose.msra.mxu0 0.0
    %3581 = vmatprep.subr.mxu0 0.0
    %3582 = vmatpush1.xpose.msra.mxu0 0.0
    %3583 = vmatprep.subr.mxu0 0.0
    %3584 = vmatpush1.xpose.msra.mxu0 0.0
    %3585 = vmatprep.subr.mxu0 0.0
    %3586 = vmatpush1.xpose.msra.mxu0 0.0
    %3587 = vmatprep.subr.mxu0 0.0
    %3588 = vmatpush1.xpose.msra.mxu0 0.0
    %3589 = vmatprep.subr.mxu0 0.0
    %3590 = vmatpush1.xpose.msra.mxu0 0.0
    %3591 = vmatprep.subr.mxu0 0.0
    %3592 = vmatpush1.xpose.msra.mxu0 0.0
    %3593 = vmatprep.subr.mxu0 0.0
    %3594 = vmatpush1.xpose.msra.mxu0 0.0
    %3595 = vmatprep.subr.mxu0 0.0
    %3596 = vmatpush1.xpose.msra.mxu0 0.0
    %3597 = vmatprep.subr.mxu0 0.0
    %3598 = vmatpush1.xpose.msra.mxu0 0.0
    %3599 = vmatprep.subr.mxu0 0.0
    %3600 = vmatpush1.xpose.msra.mxu0 0.0
    %3601 = vmatprep.subr.mxu0 0.0
    %3602 = vmatpush1.xpose.msra.mxu0 0.0
    %3603 = vmatprep.subr.mxu0 0.0
    %3604 = vmatpush1.xpose.msra.mxu0 0.0
    %3605 = vmatprep.subr.mxu0 0.0
    %3606 = vmatpush1.xpose.msra.mxu0 0.0
    %3607 = vmatprep.subr.mxu0 0.0
    %3608 = vmatpush1.xpose.msra.mxu0 0.0
    %3609 = vmatprep.subr.mxu0 0.0
    %3610 = vmatpush1.xpose.msra.mxu0 0.0
    %3611 = vmatprep.subr.mxu0 0.0
    %3612 = vmatpush1.xpose.msra.mxu0 0.0
    %3613 = vmatprep.subr.mxu0 0.0
    %3614 = vmatpush1.xpose.msra.mxu0 0.0
    %3615 = vmatprep.subr.mxu0 0.0
    %3616 = vmatpush1.xpose.msra.mxu0 0.0
    %3617 = vmatprep.subr.mxu0 0.0
    %3618 = vmatpush1.xpose.msra.mxu0 0.0
    %3619 = vmatprep.subr.mxu0 0.0
    %3620 = vmatpush1.xpose.msra.mxu0 0.0
    %3621 = vmatprep.subr.mxu0 0.0
    %3622 = vmatpush1.xpose.msra.mxu0 0.0
    %3623 = vmatprep.subr.mxu0 0.0
    %3624 = vmatpush1.xpose.msra.mxu0 0.0
    %3625 = vmatprep.subr.mxu0 0.0
    %3626 = vmatpush1.xpose.msra.mxu0 0.0
    %3627 = vmatprep.mubr.f32.mxu0 0.0
    %3628 = vmatmul.mubr.f32.gmra.mrb[0].mxu0 %v3516
    %v3629 = vpop.f32.mrb[0].mxu0
    %v3630 = vadd.f32 %v73, %v3629
    %v3631 = vpop.f32.mrb[0].mxu0
    %3632 = vmatprep.mubr.f32.mxu0 0.0
    %3633 = vmatmul.mubr.f32.gmra.mrb[0].mxu0 %v3519
    %v3634 = vpop.f32.mrb[0].mxu0
    %v3635 = vadd.f32 %v74, %v3634
    %v3636 = vpop.f32.mrb[0].mxu0
    %3637 = vmatprep.mubr.f32.mxu0 0.0
    %3638 = vmatmul.mubr.f32.gmra.mrb[0].mxu0 %v3522
    %v3639 = vpop.f32.mrb[0].mxu0
    %v3640 = vadd.f32 %v75, %v3639
    %v3641 = vpop.f32.mrb[0].mxu0
    %3642 = vmatprep.mubr.f32.mxu0 0.0
    %3643 = vmatmul.mubr.f32.gmra.mrb[0].mxu0 %v3525
    %v3644 = vpop.f32.mrb[0].mxu0
    %v3645 = vadd.f32 %v76, %v3644
    %v3646 = vpop.f32.mrb[0].mxu0
    %3647 = vmatprep.mubr.f32.mxu0 0.0
    %3648 = vmatmul.mubr.f32.gmra.mrb[0].mxu0 %v3528
    %v3649 = vpop.f32.mrb[0].mxu0
    %v3650 = vadd.f32 %v77, %v3649
    %v3651 = vpop.f32.mrb[0].mxu0
    %3652 = vmatprep.mubr.f32.mxu0 0.0
    %3653 = vmatmul.mubr.f32.gmra.mrb[0].mxu0 %v3531
    %v3654 = vpop.f32.mrb[0].mxu0
    %v3655 = vadd.f32 %v78, %v3654
    %v3656 = vpop.f32.mrb[0].mxu0
    %3657 = vmatprep.mubr.f32.mxu0 0.0
    %3658 = vmatmul.mubr.f32.gmra.mrb[0].mxu0 %v3534
    %v3659 = vpop.f32.mrb[0].mxu0
    %v3660 = vadd.f32 %v79, %v3659
    %v3661 = vpop.f32.mrb[0].mxu0
    %3662 = vmatprep.mubr.f32.mxu0 0.0
    %3663 = vmatmul.mubr.f32.gmra.mrb[0].mxu0 %v3537
    %v3664 = vpop.f32.mrb[0].mxu0
    %v3665 = vadd.f32 %v80, %v3664
    %v3666 = vpop.f32.mrb[0].mxu0
    %3667 = vdwg.mxu0
    %v3668 = vsel %vm81, %v3630, -inf
    %3669 = vmax.xlane.f32.xlu0 %v3668
    %v3670 = vpop.xlane.xlu0 %3669
    %v3671 = vsel %vm81, %v3635, -inf
    %3672 = vmax.xlane.f32.xlu0 %v3671
    %v3673 = vpop.xlane.xlu0 %3672
    %v3674 = vsel %vm81, %v3640, -inf
    %3675 = vmax.xlane.f32.xlu0 %v3674
    %v3676 = vpop.xlane.xlu0 %3675
    %v3677 = vsel %vm81, %v3645, -inf
    %3678 = vmax.xlane.f32.xlu0 %v3677
    %v3679 = vpop.xlane.xlu0 %3678
    %v3680 = vsel %vm81, %v3650, -inf
    %3681 = vmax.xlane.f32.xlu0 %v3680
    %v3682 = vpop.xlane.xlu0 %3681
    %v3683 = vsel %vm81, %v3655, -inf
    %3684 = vmax.xlane.f32.xlu0 %v3683
    %v3685 = vpop.xlane.xlu0 %3684
    %v3686 = vsel %vm81, %v3660, -inf
    %3687 = vmax.xlane.f32.xlu0 %v3686
    %v3688 = vpop.xlane.xlu0 %3687
    %v3689 = vsel %vm81, %v3665, -inf
    %3690 = vmax.xlane.f32.xlu0 %v3689
    %v3691 = vpop.xlane.xlu0 %3690
    %v3692 = vsub.f32 %v3630, %v3670
    %v3693 = vsub.f32 %v3635, %v3673
    %v3694 = vsub.f32 %v3640, %v3676
    %v3695 = vsub.f32 %v3645, %v3679
    %v3696 = vsub.f32 %v3650, %v3682
    %v3697 = vsub.f32 %v3655, %v3685
    %v3698 = vsub.f32 %v3660, %v3688
    %v3699 = vsub.f32 %v3665, %v3691
    %v3700 = vmul.f32 %v3692, 1.442695
    %v3701 = vpow.pop %v3700
    %v3702 = vmul.f32 %v3693, 1.442695
    %v3703 = vpow.pop %v3702
    %v3704 = vmul.f32 %v3694, 1.442695
    %v3705 = vpow.pop %v3704
    %v3706 = vmul.f32 %v3695, 1.442695
    %v3707 = vpow.pop %v3706
    %v3708 = vmul.f32 %v3696, 1.442695
    %v3709 = vpow.pop %v3708
    %v3710 = vmul.f32 %v3697, 1.442695
    %v3711 = vpow.pop %v3710
    %v3712 = vmul.f32 %v3698, 1.442695
    %v3713 = vpow.pop %v3712
    %v3714 = vmul.f32 %v3699, 1.442695
    %v3715 = vpow.pop %v3714
    %v3716 = vsel %vm81, %v3701, 0.0
    %3717 = vadd.xlane.f32.xlu0 %v3716
    %v3718 = vpop.xlane.xlu0 %3717
    %v3719 = vsel %vm81, %v3703, 0.0
    %3720 = vadd.xlane.f32.xlu0 %v3719
    %v3721 = vpop.xlane.xlu0 %3720
    %v3722 = vsel %vm81, %v3705, 0.0
    %3723 = vadd.xlane.f32.xlu0 %v3722
    %v3724 = vpop.xlane.xlu0 %3723
    %v3725 = vsel %vm81, %v3707, 0.0
    %3726 = vadd.xlane.f32.xlu0 %v3725
    %v3727 = vpop.xlane.xlu0 %3726
    %v3728 = vsel %vm81, %v3709, 0.0
    %3729 = vadd.xlane.f32.xlu0 %v3728
    %v3730 = vpop.xlane.xlu0 %3729
    %v3731 = vsel %vm81, %v3711, 0.0
    %3732 = vadd.xlane.f32.xlu0 %v3731
    %v3733 = vpop.xlane.xlu0 %3732
    %v3734 = vsel %vm81, %v3713, 0.0
    %3735 = vadd.xlane.f32.xlu0 %v3734
    %v3736 = vpop.xlane.xlu0 %3735
    %v3737 = vsel %vm81, %v3715, 0.0
    %3738 = vadd.xlane.f32.xlu0 %v3737
    %v3739 = vpop.xlane.xlu0 %3738
    %v3740 = vrcp.pop %v3718
    %v3741 = vrcp.pop %v3721
    %v3742 = vrcp.pop %v3724
    %v3743 = vrcp.pop %v3727
    %v3744 = vrcp.pop %v3730
    %v3745 = vrcp.pop %v3733
    %v3746 = vrcp.pop %v3736
    %v3747 = vrcp.pop %v3739
    %v3748 = vmul.f32 %v3701, %v3740
    %v3749 = vmul.f32 %v3703, %v3741
    %v3750 = vmul.f32 %v3705, %v3742
    %v3751 = vmul.f32 %v3707, %v3743
    %v3752 = vmul.f32 %v3709, %v3744
    %v3753 = vmul.f32 %v3711, %v3745
    %v3754 = vmul.f32 %v3713, %v3746
    %v3755 = vmul.f32 %v3715, %v3747
    %v3756 = vmul.f32 %v3469, %v910
    %v3757 = vmul.f32 %v3474, %v910
    %v3758 = vmul.f32 %v3479, %v910
    %v3759 = vmul.f32 %v3484, %v910
    %v3760 = vmul.f32 %v3489, %v910
    %v3761 = vmul.f32 %v3494, %v910
    %v3762 = vmul.f32 %v3499, %v910
    %v3763 = vmul.f32 %v3504, %v910
    %v3764 = vmul.f32 %v3351, %v1175
    %v3765 = vmul.f32 %v3356, %v1175
    %v3766 = vmul.f32 %v3361, %v1175
    %v3767 = vmul.f32 %v3366, %v1175
    %v3768 = vmul.f32 %v3371, %v1175
    %v3769 = vmul.f32 %v3376, %v1175
    %v3770 = vmul.f32 %v3381, %v1175
    %v3771 = vmul.f32 %v3386, %v1175
    %v3773 = vsel %vm211, %v3764, 0
    %v3776 = vsel %vm211, %v3765, 0
    %v3779 = vsel %vm211, %v3766, 0
    %v3782 = vsel %vm211, %v3767, 0
    %v3785 = vsel %vm211, %v3768, 0
    %v3788 = vsel %vm211, %v3769, 0
    %v3791 = vsel %vm211, %v3770, 0
    %v3794 = vsel %vm211, %v3771, 0
    %3796 = vmatprep.subr.mxu0 0.0
    %3797 = vmatpush1.xpose.msra.mxu0 %v3773
    %3798 = vmatprep.subr.mxu0 0.0
    %3799 = vmatpush1.xpose.msra.mxu0 %v3776
    %3800 = vmatprep.subr.mxu0 0.0
    %3801 = vmatpush1.xpose.msra.mxu0 %v3779
    %3802 = vmatprep.subr.mxu0 0.0
    %3803 = vmatpush1.xpose.msra.mxu0 %v3782
    %3804 = vmatprep.subr.mxu0 0.0
    %3805 = vmatpush1.xpose.msra.mxu0 %v3785
    %3806 = vmatprep.subr.mxu0 0.0
    %3807 = vmatpush1.xpose.msra.mxu0 %v3788
    %3808 = vmatprep.subr.mxu0 0.0
    %3809 = vmatpush1.xpose.msra.mxu0 %v3791
    %3810 = vmatprep.subr.mxu0 0.0
    %3811 = vmatpush1.xpose.msra.mxu0 %v3794
    %3812 = vmatprep.subr.mxu0 0.0
    %3813 = vmatpush1.xpose.msra.mxu0 0.0
    %3814 = vmatprep.subr.mxu0 0.0
    %3815 = vmatpush1.xpose.msra.mxu0 0.0
    %3816 = vmatprep.subr.mxu0 0.0
    %3817 = vmatpush1.xpose.msra.mxu0 0.0
    %3818 = vmatprep.subr.mxu0 0.0
    %3819 = vmatpush1.xpose.msra.mxu0 0.0
    %3820 = vmatprep.subr.mxu0 0.0
    %3821 = vmatpush1.xpose.msra.mxu0 0.0
    %3822 = vmatprep.subr.mxu0 0.0
    %3823 = vmatpush1.xpose.msra.mxu0 0.0
    %3824 = vmatprep.subr.mxu0 0.0
    %3825 = vmatpush1.xpose.msra.mxu0 0.0
    %3826 = vmatprep.subr.mxu0 0.0
    %3827 = vmatpush1.xpose.msra.mxu0 0.0
    %3828 = vmatprep.subr.mxu0 0.0
    %3829 = vmatpush1.xpose.msra.mxu0 0.0
    %3830 = vmatprep.subr.mxu0 0.0
    %3831 = vmatpush1.xpose.msra.mxu0 0.0
    %3832 = vmatprep.subr.mxu0 0.0
    %3833 = vmatpush1.xpose.msra.mxu0 0.0
    %3834 = vmatprep.subr.mxu0 0.0
    %3835 = vmatpush1.xpose.msra.mxu0 0.0
    %3836 = vmatprep.subr.mxu0 0.0
    %3837 = vmatpush1.xpose.msra.mxu0 0.0
    %3838 = vmatprep.subr.mxu0 0.0
    %3839 = vmatpush1.xpose.msra.mxu0 0.0
    %3840 = vmatprep.subr.mxu0 0.0
    %3841 = vmatpush1.xpose.msra.mxu0 0.0
    %3842 = vmatprep.subr.mxu0 0.0
    %3843 = vmatpush1.xpose.msra.mxu0 0.0
    %3844 = vmatprep.subr.mxu0 0.0
    %3845 = vmatpush1.xpose.msra.mxu0 0.0
    %3846 = vmatprep.subr.mxu0 0.0
    %3847 = vmatpush1.xpose.msra.mxu0 0.0
    %3848 = vmatprep.subr.mxu0 0.0
    %3849 = vmatpush1.xpose.msra.mxu0 0.0
    %3850 = vmatprep.subr.mxu0 0.0
    %3851 = vmatpush1.xpose.msra.mxu0 0.0
    %3852 = vmatprep.subr.mxu0 0.0
    %3853 = vmatpush1.xpose.msra.mxu0 0.0
    %3854 = vmatprep.subr.mxu0 0.0
    %3855 = vmatpush1.xpose.msra.mxu0 0.0
    %3856 = vmatprep.subr.mxu0 0.0
    %3857 = vmatpush1.xpose.msra.mxu0 0.0
    %3858 = vmatprep.subr.mxu0 0.0
    %3859 = vmatpush1.xpose.msra.mxu0 0.0
    %3860 = vmatprep.mubr.f32.mxu0 0.0
    %3861 = vmatmul.mubr.f32.gmra.mrb[0].mxu0 %v3516
    %v3862 = vpop.f32.mrb[0].mxu0
    %v3863 = vadd.f32 %v73, %v3862
    %v3864 = vpop.f32.mrb[0].mxu0
    %3865 = vmatprep.mubr.f32.mxu0 0.0
    %3866 = vmatmul.mubr.f32.gmra.mrb[0].mxu0 %v3519
    %v3867 = vpop.f32.mrb[0].mxu0
    %v3868 = vadd.f32 %v74, %v3867
    %v3869 = vpop.f32.mrb[0].mxu0
    %3870 = vmatprep.mubr.f32.mxu0 0.0
    %3871 = vmatmul.mubr.f32.gmra.mrb[0].mxu0 %v3522
    %v3872 = vpop.f32.mrb[0].mxu0
    %v3873 = vadd.f32 %v75, %v3872
    %v3874 = vpop.f32.mrb[0].mxu0
    %3875 = vmatprep.mubr.f32.mxu0 0.0
    %3876 = vmatmul.mubr.f32.gmra.mrb[0].mxu0 %v3525
    %v3877 = vpop.f32.mrb[0].mxu0
    %v3878 = vadd.f32 %v76, %v3877
    %v3879 = vpop.f32.mrb[0].mxu0
    %3880 = vmatprep.mubr.f32.mxu0 0.0
    %3881 = vmatmul.mubr.f32.gmra.mrb[0].mxu0 %v3528
    %v3882 = vpop.f32.mrb[0].mxu0
    %v3883 = vadd.f32 %v77, %v3882
    %v3884 = vpop.f32.mrb[0].mxu0
    %3885 = vmatprep.mubr.f32.mxu0 0.0
    %3886 = vmatmul.mubr.f32.gmra.mrb[0].mxu0 %v3531
    %v3887 = vpop.f32.mrb[0].mxu0
    %v3888 = vadd.f32 %v78, %v3887
    %v3889 = vpop.f32.mrb[0].mxu0
    %3890 = vmatprep.mubr.f32.mxu0 0.0
    %3891 = vmatmul.mubr.f32.gmra.mrb[0].mxu0 %v3534
    %v3892 = vpop.f32.mrb[0].mxu0
    %v3893 = vadd.f32 %v79, %v3892
    %v3894 = vpop.f32.mrb[0].mxu0
    %3895 = vmatprep.mubr.f32.mxu0 0.0
    %3896 = vmatmul.mubr.f32.gmra.mrb[0].mxu0 %v3537
    %v3897 = vpop.f32.mrb[0].mxu0
    %v3898 = vadd.f32 %v80, %v3897
    %v3899 = vpop.f32.mrb[0].mxu0
    %3900 = vdwg.mxu0
    %v3901 = vsel %vm81, %v3863, -inf
    %3902 = vmax.xlane.f32.xlu0 %v3901
    %v3903 = vpop.xlane.xlu0 %3902
    %v3904 = vsel %vm81, %v3868, -inf
    %3905 = vmax.xlane.f32.xlu0 %v3904
    %v3906 = vpop.xlane.xlu0 %3905
    %v3907 = vsel %vm81, %v3873, -inf
    %3908 = vmax.xlane.f32.xlu0 %v3907
    %v3909 = vpop.xlane.xlu0 %3908
    %v3910 = vsel %vm81, %v3878, -inf
    %3911 = vmax.xlane.f32.xlu0 %v3910
    %v3912 = vpop.xlane.xlu0 %3911
    %v3913 = vsel %vm81, %v3883, -inf
    %3914 = vmax.xlane.f32.xlu0 %v3913
    %v3915 = vpop.xlane.xlu0 %3914
    %v3916 = vsel %vm81, %v3888, -inf
    %3917 = vmax.xlane.f32.xlu0 %v3916
    %v3918 = vpop.xlane.xlu0 %3917
    %v3919 = vsel %vm81, %v3893, -inf
    %3920 = vmax.xlane.f32.xlu0 %v3919
    %v3921 = vpop.xlane.xlu0 %3920
    %v3922 = vsel %vm81, %v3898, -inf
    %3923 = vmax.xlane.f32.xlu0 %v3922
    %v3924 = vpop.xlane.xlu0 %3923
    %v3925 = vsub.f32 %v3863, %v3903
    %v3926 = vsub.f32 %v3868, %v3906
    %v3927 = vsub.f32 %v3873, %v3909
    %v3928 = vsub.f32 %v3878, %v3912
    %v3929 = vsub.f32 %v3883, %v3915
    %v3930 = vsub.f32 %v3888, %v3918
    %v3931 = vsub.f32 %v3893, %v3921
    %v3932 = vsub.f32 %v3898, %v3924
    %v3933 = vmul.f32 %v3925, 1.442695
    %v3934 = vpow.pop %v3933
    %v3935 = vmul.f32 %v3926, 1.442695
    %v3936 = vpow.pop %v3935
    %v3937 = vmul.f32 %v3927, 1.442695
    %v3938 = vpow.pop %v3937
    %v3939 = vmul.f32 %v3928, 1.442695
    %v3940 = vpow.pop %v3939
    %v3941 = vmul.f32 %v3929, 1.442695
    %v3942 = vpow.pop %v3941
    %v3943 = vmul.f32 %v3930, 1.442695
    %v3944 = vpow.pop %v3943
    %v3945 = vmul.f32 %v3931, 1.442695
    %v3946 = vpow.pop %v3945
    %v3947 = vmul.f32 %v3932, 1.442695
    %v3948 = vpow.pop %v3947
    %v3949 = vsel %vm81, %v3934, 0.0
    %3950 = vadd.xlane.f32.xlu0 %v3949
    %v3951 = vpop.xlane.xlu0 %3950
    %v3952 = vsel %vm81, %v3936, 0.0
    %3953 = vadd.xlane.f32.xlu0 %v3952
    %v3954 = vpop.xlane.xlu0 %3953
    %v3955 = vsel %vm81, %v3938, 0.0
    %3956 = vadd.xlane.f32.xlu0 %v3955
    %v3957 = vpop.xlane.xlu0 %3956
    %v3958 = vsel %vm81, %v3940, 0.0
    %3959 = vadd.xlane.f32.xlu0 %v3958
    %v3960 = vpop.xlane.xlu0 %3959
    %v3961 = vsel %vm81, %v3942, 0.0
    %3962 = vadd.xlane.f32.xlu0 %v3961
    %v3963 = vpop.xlane.xlu0 %3962
    %v3964 = vsel %vm81, %v3944, 0.0
    %3965 = vadd.xlane.f32.xlu0 %v3964
    %v3966 = vpop.xlane.xlu0 %3965
    %v3967 = vsel %vm81, %v3946, 0.0
    %3968 = vadd.xlane.f32.xlu0 %v3967
    %v3969 = vpop.xlane.xlu0 %3968
    %v3970 = vsel %vm81, %v3948, 0.0
    %3971 = vadd.xlane.f32.xlu0 %v3970
    %v3972 = vpop.xlane.xlu0 %3971
    %v3973 = vrcp.pop %v3951
    %v3974 = vrcp.pop %v3954
    %v3975 = vrcp.pop %v3957
    %v3976 = vrcp.pop %v3960
    %v3977 = vrcp.pop %v3963
    %v3978 = vrcp.pop %v3966
    %v3979 = vrcp.pop %v3969
    %v3980 = vrcp.pop %v3972
    %v3981 = vmul.f32 %v3934, %v3973
    %v3982 = vmul.f32 %v3936, %v3974
    %v3983 = vmul.f32 %v3938, %v3975
    %v3984 = vmul.f32 %v3940, %v3976
    %v3985 = vmul.f32 %v3942, %v3977
    %v3986 = vmul.f32 %v3944, %v3978
    %v3987 = vmul.f32 %v3946, %v3979
    %v3988 = vmul.f32 %v3948, %v3980
    %v3989 = vmul.f32 %v3469, %v1175
    %v3990 = vmul.f32 %v3474, %v1175
    %v3991 = vmul.f32 %v3479, %v1175
    %v3992 = vmul.f32 %v3484, %v1175
    %v3993 = vmul.f32 %v3489, %v1175
    %v3994 = vmul.f32 %v3494, %v1175
    %v3995 = vmul.f32 %v3499, %v1175
    %v3996 = vmul.f32 %v3504, %v1175
    %v3998 = vsel %vm81, %v3981, 0
    %v4001 = vsel %vm81, %v3982, 0
    %v4004 = vsel %vm81, %v3983, 0
    %v4007 = vsel %vm81, %v3984, 0
    %v4010 = vsel %vm81, %v3985, 0
    %v4013 = vsel %vm81, %v3986, 0
    %v4016 = vsel %vm81, %v3987, 0
    %v4019 = vsel %vm81, %v3988, 0
    %4021 = vmatprep.subr.mxu0 0.0
    %4022 = vmatpush1.msra.mxu0 %v3989
    %4023 = vmatprep.subr.mxu0 0.0
    %4024 = vmatpush1.msra.mxu0 %v3990
    %4025 = vmatprep.subr.mxu0 0.0
    %4026 = vmatpush1.msra.mxu0 %v3991
    %4027 = vmatprep.subr.mxu0 0.0
    %4028 = vmatpush1.msra.mxu0 %v3992
    %4029 = vmatprep.subr.mxu0 0.0
    %4030 = vmatpush1.msra.mxu0 %v3993
    %4031 = vmatprep.subr.mxu0 0.0
    %4032 = vmatpush1.msra.mxu0 %v3994
    %4033 = vmatprep.subr.mxu0 0.0
    %4034 = vmatpush1.msra.mxu0 %v3995
    %4035 = vmatprep.subr.mxu0 0.0
    %4036 = vmatpush1.msra.mxu0 %v3996
    %4037 = vmatprep.subr.mxu0 0.0
    %4038 = vmatpush1.msra.mxu0 0.0
    %4039 = vmatprep.subr.mxu0 0.0
    %4040 = vmatpush1.msra.mxu0 0.0
    %4041 = vmatprep.subr.mxu0 0.0
    %4042 = vmatpush1.msra.mxu0 0.0
    %4043 = vmatprep.subr.mxu0 0.0
    %4044 = vmatpush1.msra.mxu0 0.0
    %4045 = vmatprep.subr.mxu0 0.0
    %4046 = vmatpush1.msra.mxu0 0.0
    %4047 = vmatprep.subr.mxu0 0.0
    %4048 = vmatpush1.msra.mxu0 0.0
    %4049 = vmatprep.subr.mxu0 0.0
    %4050 = vmatpush1.msra.mxu0 0.0
    %4051 = vmatprep.subr.mxu0 0.0
    %4052 = vmatpush1.msra.mxu0 0.0
    %4053 = vmatprep.subr.mxu0 0.0
    %4054 = vmatpush1.msra.mxu0 0.0
    %4055 = vmatprep.subr.mxu0 0.0
    %4056 = vmatpush1.msra.mxu0 0.0
    %4057 = vmatprep.subr.mxu0 0.0
    %4058 = vmatpush1.msra.mxu0 0.0
    %4059 = vmatprep.subr.mxu0 0.0
    %4060 = vmatpush1.msra.mxu0 0.0
    %4061 = vmatprep.subr.mxu0 0.0
    %4062 = vmatpush1.msra.mxu0 0.0
    %4063 = vmatprep.subr.mxu0 0.0
    %4064 = vmatpush1.msra.mxu0 0.0
    %4065 = vmatprep.subr.mxu0 0.0
    %4066 = vmatpush1.msra.mxu0 0.0
    %4067 = vmatprep.subr.mxu0 0.0
    %4068 = vmatpush1.msra.mxu0 0.0
    %4069 = vmatprep.subr.mxu0 0.0
    %4070 = vmatpush1.msra.mxu0 0.0
    %4071 = vmatprep.subr.mxu0 0.0
    %4072 = vmatpush1.msra.mxu0 0.0
    %4073 = vmatprep.subr.mxu0 0.0
    %4074 = vmatpush1.msra.mxu0 0.0
    %4075 = vmatprep.subr.mxu0 0.0
    %4076 = vmatpush1.msra.mxu0 0.0
    %4077 = vmatprep.subr.mxu0 0.0
    %4078 = vmatpush1.msra.mxu0 0.0
    %4079 = vmatprep.subr.mxu0 0.0
    %4080 = vmatpush1.msra.mxu0 0.0
    %4081 = vmatprep.subr.mxu0 0.0
    %4082 = vmatpush1.msra.mxu0 0.0
    %4083 = vmatprep.subr.mxu0 0.0
    %4084 = vmatpush1.msra.mxu0 0.0
    %4085 = vmatprep.mubr.f32.mxu0 0.0
    %4086 = vmatmul.mubr.f32.gmra.mrb[0].mxu0 %v3998
    %v4087 = vpop.f32.mrb[0].mxu0
    %v4088 = vadd.f32 0.0, %v4087
    %v4089 = vpop.f32.mrb[0].mxu0
    %4090 = vmatprep.mubr.f32.mxu0 0.0
    %4091 = vmatmul.mubr.f32.gmra.mrb[0].mxu0 %v4001
    %v4092 = vpop.f32.mrb[0].mxu0
    %v4093 = vadd.f32 0.0, %v4092
    %v4094 = vpop.f32.mrb[0].mxu0
    %4095 = vmatprep.mubr.f32.mxu0 0.0
    %4096 = vmatmul.mubr.f32.gmra.mrb[0].mxu0 %v4004
    %v4097 = vpop.f32.mrb[0].mxu0
    %v4098 = vadd.f32 0.0, %v4097
    %v4099 = vpop.f32.mrb[0].mxu0
    %4100 = vmatprep.mubr.f32.mxu0 0.0
    %4101 = vmatmul.mubr.f32.gmra.mrb[0].mxu0 %v4007
    %v4102 = vpop.f32.mrb[0].mxu0
    %v4103 = vadd.f32 0.0, %v4102
    %v4104 = vpop.f32.mrb[0].mxu0
    %4105 = vmatprep.mubr.f32.mxu0 0.0
    %4106 = vmatmul.mubr.f32.gmra.mrb[0].mxu0 %v4010
    %v4107 = vpop.f32.mrb[0].mxu0
    %v4108 = vadd.f32 0.0, %v4107
    %v4109 = vpop.f32.mrb[0].mxu0
    %4110 = vmatprep.mubr.f32.mxu0 0.0
    %4111 = vmatmul.mubr.f32.gmra.mrb[0].mxu0 %v4013
    %v4112 = vpop.f32.mrb[0].mxu0
    %v4113 = vadd.f32 0.0, %v4112
    %v4114 = vpop.f32.mrb[0].mxu0
    %4115 = vmatprep.mubr.f32.mxu0 0.0
    %4116 = vmatmul.mubr.f32.gmra.mrb[0].mxu0 %v4016
    %v4117 = vpop.f32.mrb[0].mxu0
    %v4118 = vadd.f32 0.0, %v4117
    %v4119 = vpop.f32.mrb[0].mxu0
    %4120 = vmatprep.mubr.f32.mxu0 0.0
    %4121 = vmatmul.mubr.f32.gmra.mrb[0].mxu0 %v4019
    %v4122 = vpop.f32.mrb[0].mxu0
    %v4123 = vadd.f32 0.0, %v4122
    %v4124 = vpop.f32.mrb[0].mxu0
    %4125 = vdwg.mxu0
    %v4127 = vsel %vm81, %v3748, 0
    %v4130 = vsel %vm81, %v3749, 0
    %v4133 = vsel %vm81, %v3750, 0
    %v4136 = vsel %vm81, %v3751, 0
    %v4139 = vsel %vm81, %v3752, 0
    %v4142 = vsel %vm81, %v3753, 0
    %v4145 = vsel %vm81, %v3754, 0
    %v4148 = vsel %vm81, %v3755, 0
    %4150 = vmatprep.subr.mxu0 0.0
    %4151 = vmatpush1.msra.mxu0 %v3756
    %4152 = vmatprep.subr.mxu0 0.0
    %4153 = vmatpush1.msra.mxu0 %v3757
    %4154 = vmatprep.subr.mxu0 0.0
    %4155 = vmatpush1.msra.mxu0 %v3758
    %4156 = vmatprep.subr.mxu0 0.0
    %4157 = vmatpush1.msra.mxu0 %v3759
    %4158 = vmatprep.subr.mxu0 0.0
    %4159 = vmatpush1.msra.mxu0 %v3760
    %4160 = vmatprep.subr.mxu0 0.0
    %4161 = vmatpush1.msra.mxu0 %v3761
    %4162 = vmatprep.subr.mxu0 0.0
    %4163 = vmatpush1.msra.mxu0 %v3762
    %4164 = vmatprep.subr.mxu0 0.0
    %4165 = vmatpush1.msra.mxu0 %v3763
    %4166 = vmatprep.subr.mxu0 0.0
    %4167 = vmatpush1.msra.mxu0 0.0
    %4168 = vmatprep.subr.mxu0 0.0
    %4169 = vmatpush1.msra.mxu0 0.0
    %4170 = vmatprep.subr.mxu0 0.0
    %4171 = vmatpush1.msra.mxu0 0.0
    %4172 = vmatprep.subr.mxu0 0.0
    %4173 = vmatpush1.msra.mxu0 0.0
    %4174 = vmatprep.subr.mxu0 0.0
    %4175 = vmatpush1.msra.mxu0 0.0
    %4176 = vmatprep.subr.mxu0 0.0
    %4177 = vmatpush1.msra.mxu0 0.0
    %4178 = vmatprep.subr.mxu0 0.0
    %4179 = vmatpush1.msra.mxu0 0.0
    %4180 = vmatprep.subr.mxu0 0.0
    %4181 = vmatpush1.msra.mxu0 0.0
    %4182 = vmatprep.subr.mxu0 0.0
    %4183 = vmatpush1.msra.mxu0 0.0
    %4184 = vmatprep.subr.mxu0 0.0
    %4185 = vmatpush1.msra.mxu0 0.0
    %4186 = vmatprep.subr.mxu0 0.0
    %4187 = vmatpush1.msra.mxu0 0.0
    %4188 = vmatprep.subr.mxu0 0.0
    %4189 = vmatpush1.msra.mxu0 0.0
    %4190 = vmatprep.subr.mxu0 0.0
    %4191 = vmatpush1.msra.mxu0 0.0
    %4192 = vmatprep.subr.mxu0 0.0
    %4193 = vmatpush1.msra.mxu0 0.0
    %4194 = vmatprep.subr.mxu0 0.0
    %4195 = vmatpush1.msra.mxu0 0.0
    %4196 = vmatprep.subr.mxu0 0.0
    %4197 = vmatpush1.msra.mxu0 0.0
    %4198 = vmatprep.subr.mxu0 0.0
    %4199 = vmatpush1.msra.mxu0 0.0
    %4200 = vmatprep.subr.mxu0 0.0
    %4201 = vmatpush1.msra.mxu0 0.0
    %4202 = vmatprep.subr.mxu0 0.0
    %4203 = vmatpush1.msra.mxu0 0.0
    %4204 = vmatprep.subr.mxu0 0.0
    %4205 = vmatpush1.msra.mxu0 0.0
    %4206 = vmatprep.subr.mxu0 0.0
    %4207 = vmatpush1.msra.mxu0 0.0
    %4208 = vmatprep.subr.mxu0 0.0
    %4209 = vmatpush1.msra.mxu0 0.0
    %4210 = vmatprep.subr.mxu0 0.0
    %4211 = vmatpush1.msra.mxu0 0.0
    %4212 = vmatprep.subr.mxu0 0.0
    %4213 = vmatpush1.msra.mxu0 0.0
    %4214 = vmatprep.mubr.f32.mxu0 0.0
    %4215 = vmatmul.mubr.f32.gmra.mrb[0].mxu0 %v4127
    %v4216 = vpop.f32.mrb[0].mxu0
    %v4217 = vadd.f32 %v4088, %v4216
    %v4218 = vpop.f32.mrb[0].mxu0
    %4219 = vmatprep.mubr.f32.mxu0 0.0
    %4220 = vmatmul.mubr.f32.gmra.mrb[0].mxu0 %v4130
    %v4221 = vpop.f32.mrb[0].mxu0
    %v4222 = vadd.f32 %v4093, %v4221
    %v4223 = vpop.f32.mrb[0].mxu0
    %4224 = vmatprep.mubr.f32.mxu0 0.0
    %4225 = vmatmul.mubr.f32.gmra.mrb[0].mxu0 %v4133
    %v4226 = vpop.f32.mrb[0].mxu0
    %v4227 = vadd.f32 %v4098, %v4226
    %v4228 = vpop.f32.mrb[0].mxu0
    %4229 = vmatprep.mubr.f32.mxu0 0.0
    %4230 = vmatmul.mubr.f32.gmra.mrb[0].mxu0 %v4136
    %v4231 = vpop.f32.mrb[0].mxu0
    %v4232 = vadd.f32 %v4103, %v4231
    %v4233 = vpop.f32.mrb[0].mxu0
    %4234 = vmatprep.mubr.f32.mxu0 0.0
    %4235 = vmatmul.mubr.f32.gmra.mrb[0].mxu0 %v4139
    %v4236 = vpop.f32.mrb[0].mxu0
    %v4237 = vadd.f32 %v4108, %v4236
    %v4238 = vpop.f32.mrb[0].mxu0
    %4239 = vmatprep.mubr.f32.mxu0 0.0
    %4240 = vmatmul.mubr.f32.gmra.mrb[0].mxu0 %v4142
    %v4241 = vpop.f32.mrb[0].mxu0
    %v4242 = vadd.f32 %v4113, %v4241
    %v4243 = vpop.f32.mrb[0].mxu0
    %4244 = vmatprep.mubr.f32.mxu0 0.0
    %4245 = vmatmul.mubr.f32.gmra.mrb[0].mxu0 %v4145
    %v4246 = vpop.f32.mrb[0].mxu0
    %v4247 = vadd.f32 %v4118, %v4246
    %v4248 = vpop.f32.mrb[0].mxu0
    %4249 = vmatprep.mubr.f32.mxu0 0.0
    %4250 = vmatmul.mubr.f32.gmra.mrb[0].mxu0 %v4148
    %v4251 = vpop.f32.mrb[0].mxu0
    %v4252 = vadd.f32 %v4123, %v4251
    %v4253 = vpop.f32.mrb[0].mxu0
    %4254 = vdwg.mxu0
    %v4255 = vmul.f32 %v3351, %v1674
    %v4256 = vmul.f32 %v3356, %v1674
    %v4257 = vmul.f32 %v3361, %v1674
    %v4258 = vmul.f32 %v3366, %v1674
    %v4259 = vmul.f32 %v3371, %v1674
    %v4260 = vmul.f32 %v3376, %v1674
    %v4261 = vmul.f32 %v3381, %v1674
    %v4262 = vmul.f32 %v3386, %v1674
    %v4264 = vsel %vm211, %v4255, 0
    %v4267 = vsel %vm211, %v4256, 0
    %v4270 = vsel %vm211, %v4257, 0
    %v4273 = vsel %vm211, %v4258, 0
    %v4276 = vsel %vm211, %v4259, 0
    %v4279 = vsel %vm211, %v4260, 0
    %v4282 = vsel %vm211, %v4261, 0
    %v4285 = vsel %vm211, %v4262, 0
    %4287 = vmatprep.subr.mxu0 0.0
    %4288 = vmatpush1.xpose.msra.mxu0 %v4264
    %4289 = vmatprep.subr.mxu0 0.0
    %4290 = vmatpush1.xpose.msra.mxu0 %v4267
    %4291 = vmatprep.subr.mxu0 0.0
    %4292 = vmatpush1.xpose.msra.mxu0 %v4270
    %4293 = vmatprep.subr.mxu0 0.0
    %4294 = vmatpush1.xpose.msra.mxu0 %v4273
    %4295 = vmatprep.subr.mxu0 0.0
    %4296 = vmatpush1.xpose.msra.mxu0 %v4276
    %4297 = vmatprep.subr.mxu0 0.0
    %4298 = vmatpush1.xpose.msra.mxu0 %v4279
    %4299 = vmatprep.subr.mxu0 0.0
    %4300 = vmatpush1.xpose.msra.mxu0 %v4282
    %4301 = vmatprep.subr.mxu0 0.0
    %4302 = vmatpush1.xpose.msra.mxu0 %v4285
    %4303 = vmatprep.subr.mxu0 0.0
    %4304 = vmatpush1.xpose.msra.mxu0 0.0
    %4305 = vmatprep.subr.mxu0 0.0
    %4306 = vmatpush1.xpose.msra.mxu0 0.0
    %4307 = vmatprep.subr.mxu0 0.0
    %4308 = vmatpush1.xpose.msra.mxu0 0.0
    %4309 = vmatprep.subr.mxu0 0.0
    %4310 = vmatpush1.xpose.msra.mxu0 0.0
    %4311 = vmatprep.subr.mxu0 0.0
    %4312 = vmatpush1.xpose.msra.mxu0 0.0
    %4313 = vmatprep.subr.mxu0 0.0
    %4314 = vmatpush1.xpose.msra.mxu0 0.0
    %4315 = vmatprep.subr.mxu0 0.0
    %4316 = vmatpush1.xpose.msra.mxu0 0.0
    %4317 = vmatprep.subr.mxu0 0.0
    %4318 = vmatpush1.xpose.msra.mxu0 0.0
    %4319 = vmatprep.subr.mxu0 0.0
    %4320 = vmatpush1.xpose.msra.mxu0 0.0
    %4321 = vmatprep.subr.mxu0 0.0
    %4322 = vmatpush1.xpose.msra.mxu0 0.0
    %4323 = vmatprep.subr.mxu0 0.0
    %4324 = vmatpush1.xpose.msra.mxu0 0.0
    %4325 = vmatprep.subr.mxu0 0.0
    %4326 = vmatpush1.xpose.msra.mxu0 0.0
    %4327 = vmatprep.subr.mxu0 0.0
    %4328 = vmatpush1.xpose.msra.mxu0 0.0
    %4329 = vmatprep.subr.mxu0 0.0
    %4330 = vmatpush1.xpose.msra.mxu0 0.0
    %4331 = vmatprep.subr.mxu0 0.0
    %4332 = vmatpush1.xpose.msra.mxu0 0.0
    %4333 = vmatprep.subr.mxu0 0.0
    %4334 = vmatpush1.xpose.msra.mxu0 0.0
    %4335 = vmatprep.subr.mxu0 0.0
    %4336 = vmatpush1.xpose.msra.mxu0 0.0
    %4337 = vmatprep.subr.mxu0 0.0
    %4338 = vmatpush1.xpose.msra.mxu0 0.0
    %4339 = vmatprep.subr.mxu0 0.0
    %4340 = vmatpush1.xpose.msra.mxu0 0.0
    %4341 = vmatprep.subr.mxu0 0.0
    %4342 = vmatpush1.xpose.msra.mxu0 0.0
    %4343 = vmatprep.subr.mxu0 0.0
    %4344 = vmatpush1.xpose.msra.mxu0 0.0
    %4345 = vmatprep.subr.mxu0 0.0
    %4346 = vmatpush1.xpose.msra.mxu0 0.0
    %4347 = vmatprep.subr.mxu0 0.0
    %4348 = vmatpush1.xpose.msra.mxu0 0.0
    %4349 = vmatprep.subr.mxu0 0.0
    %4350 = vmatpush1.xpose.msra.mxu0 0.0
    %4351 = vmatprep.mubr.f32.mxu0 0.0
    %4352 = vmatmul.mubr.f32.gmra.mrb[0].mxu0 %v3516
    %v4353 = vpop.f32.mrb[0].mxu0
    %v4354 = vadd.f32 %v73, %v4353
    %v4355 = vpop.f32.mrb[0].mxu0
    %4356 = vmatprep.mubr.f32.mxu0 0.0
    %4357 = vmatmul.mubr.f32.gmra.mrb[0].mxu0 %v3519
    %v4358 = vpop.f32.mrb[0].mxu0
    %v4359 = vadd.f32 %v74, %v4358
    %v4360 = vpop.f32.mrb[0].mxu0
    %4361 = vmatprep.mubr.f32.mxu0 0.0
    %4362 = vmatmul.mubr.f32.gmra.mrb[0].mxu0 %v3522
    %v4363 = vpop.f32.mrb[0].mxu0
    %v4364 = vadd.f32 %v75, %v4363
    %v4365 = vpop.f32.mrb[0].mxu0
    %4366 = vmatprep.mubr.f32.mxu0 0.0
    %4367 = vmatmul.mubr.f32.gmra.mrb[0].mxu0 %v3525
    %v4368 = vpop.f32.mrb[0].mxu0
    %v4369 = vadd.f32 %v76, %v4368
    %v4370 = vpop.f32.mrb[0].mxu0
    %4371 = vmatprep.mubr.f32.mxu0 0.0
    %4372 = vmatmul.mubr.f32.gmra.mrb[0].mxu0 %v3528
    %v4373 = vpop.f32.mrb[0].mxu0
    %v4374 = vadd.f32 %v77, %v4373
    %v4375 = vpop.f32.mrb[0].mxu0
    %4376 = vmatprep.mubr.f32.mxu0 0.0
    %4377 = vmatmul.mubr.f32.gmra.mrb[0].mxu0 %v3531
    %v4378 = vpop.f32.mrb[0].mxu0
    %v4379 = vadd.f32 %v78, %v4378
    %v4380 = vpop.f32.mrb[0].mxu0
    %4381 = vmatprep.mubr.f32.mxu0 0.0
    %4382 = vmatmul.mubr.f32.gmra.mrb[0].mxu0 %v3534
    %v4383 = vpop.f32.mrb[0].mxu0
    %v4384 = vadd.f32 %v79, %v4383
    %v4385 = vpop.f32.mrb[0].mxu0
    %4386 = vmatprep.mubr.f32.mxu0 0.0
    %4387 = vmatmul.mubr.f32.gmra.mrb[0].mxu0 %v3537
    %v4388 = vpop.f32.mrb[0].mxu0
    %v4389 = vadd.f32 %v80, %v4388
    %v4390 = vpop.f32.mrb[0].mxu0
    %4391 = vdwg.mxu0
    %v4392 = vsel %vm81, %v4354, -inf
    %4393 = vmax.xlane.f32.xlu0 %v4392
    %v4394 = vpop.xlane.xlu0 %4393
    %v4395 = vsel %vm81, %v4359, -inf
    %4396 = vmax.xlane.f32.xlu0 %v4395
    %v4397 = vpop.xlane.xlu0 %4396
    %v4398 = vsel %vm81, %v4364, -inf
    %4399 = vmax.xlane.f32.xlu0 %v4398
    %v4400 = vpop.xlane.xlu0 %4399
    %v4401 = vsel %vm81, %v4369, -inf
    %4402 = vmax.xlane.f32.xlu0 %v4401
    %v4403 = vpop.xlane.xlu0 %4402
    %v4404 = vsel %vm81, %v4374, -inf
    %4405 = vmax.xlane.f32.xlu0 %v4404
    %v4406 = vpop.xlane.xlu0 %4405
    %v4407 = vsel %vm81, %v4379, -inf
    %4408 = vmax.xlane.f32.xlu0 %v4407
    %v4409 = vpop.xlane.xlu0 %4408
    %v4410 = vsel %vm81, %v4384, -inf
    %4411 = vmax.xlane.f32.xlu0 %v4410
    %v4412 = vpop.xlane.xlu0 %4411
    %v4413 = vsel %vm81, %v4389, -inf
    %4414 = vmax.xlane.f32.xlu0 %v4413
    %v4415 = vpop.xlane.xlu0 %4414
    %v4416 = vsub.f32 %v4354, %v4394
    %v4417 = vsub.f32 %v4359, %v4397
    %v4418 = vsub.f32 %v4364, %v4400
    %v4419 = vsub.f32 %v4369, %v4403
    %v4420 = vsub.f32 %v4374, %v4406
    %v4421 = vsub.f32 %v4379, %v4409
    %v4422 = vsub.f32 %v4384, %v4412
    %v4423 = vsub.f32 %v4389, %v4415
    %v4424 = vmul.f32 %v4416, 1.442695
    %v4425 = vpow.pop %v4424
    %v4426 = vmul.f32 %v4417, 1.442695
    %v4427 = vpow.pop %v4426
    %v4428 = vmul.f32 %v4418, 1.442695
    %v4429 = vpow.pop %v4428
    %v4430 = vmul.f32 %v4419, 1.442695
    %v4431 = vpow.pop %v4430
    %v4432 = vmul.f32 %v4420, 1.442695
    %v4433 = vpow.pop %v4432
    %v4434 = vmul.f32 %v4421, 1.442695
    %v4435 = vpow.pop %v4434
    %v4436 = vmul.f32 %v4422, 1.442695
    %v4437 = vpow.pop %v4436
    %v4438 = vmul.f32 %v4423, 1.442695
    %v4439 = vpow.pop %v4438
    %v4440 = vsel %vm81, %v4425, 0.0
    %4441 = vadd.xlane.f32.xlu0 %v4440
    %v4442 = vpop.xlane.xlu0 %4441
    %v4443 = vsel %vm81, %v4427, 0.0
    %4444 = vadd.xlane.f32.xlu0 %v4443
    %v4445 = vpop.xlane.xlu0 %4444
    %v4446 = vsel %vm81, %v4429, 0.0
    %4447 = vadd.xlane.f32.xlu0 %v4446
    %v4448 = vpop.xlane.xlu0 %4447
    %v4449 = vsel %vm81, %v4431, 0.0
    %4450 = vadd.xlane.f32.xlu0 %v4449
    %v4451 = vpop.xlane.xlu0 %4450
    %v4452 = vsel %vm81, %v4433, 0.0
    %4453 = vadd.xlane.f32.xlu0 %v4452
    %v4454 = vpop.xlane.xlu0 %4453
    %v4455 = vsel %vm81, %v4435, 0.0
    %4456 = vadd.xlane.f32.xlu0 %v4455
    %v4457 = vpop.xlane.xlu0 %4456
    %v4458 = vsel %vm81, %v4437, 0.0
    %4459 = vadd.xlane.f32.xlu0 %v4458
    %v4460 = vpop.xlane.xlu0 %4459
    %v4461 = vsel %vm81, %v4439, 0.0
    %4462 = vadd.xlane.f32.xlu0 %v4461
    %v4463 = vpop.xlane.xlu0 %4462
    %v4464 = vrcp.pop %v4442
    %v4465 = vrcp.pop %v4445
    %v4466 = vrcp.pop %v4448
    %v4467 = vrcp.pop %v4451
    %v4468 = vrcp.pop %v4454
    %v4469 = vrcp.pop %v4457
    %v4470 = vrcp.pop %v4460
    %v4471 = vrcp.pop %v4463
    %v4472 = vmul.f32 %v4425, %v4464
    %v4473 = vmul.f32 %v4427, %v4465
    %v4474 = vmul.f32 %v4429, %v4466
    %v4475 = vmul.f32 %v4431, %v4467
    %v4476 = vmul.f32 %v4433, %v4468
    %v4477 = vmul.f32 %v4435, %v4469
    %v4478 = vmul.f32 %v4437, %v4470
    %v4479 = vmul.f32 %v4439, %v4471
    %v4480 = vmul.f32 %v3469, %v1674
    %v4481 = vmul.f32 %v3474, %v1674
    %v4482 = vmul.f32 %v3479, %v1674
    %v4483 = vmul.f32 %v3484, %v1674
    %v4484 = vmul.f32 %v3489, %v1674
    %v4485 = vmul.f32 %v3494, %v1674
    %v4486 = vmul.f32 %v3499, %v1674
    %v4487 = vmul.f32 %v3504, %v1674
    %v4489 = vsel %vm81, %v4472, 0
    %v4492 = vsel %vm81, %v4473, 0
    %v4495 = vsel %vm81, %v4474, 0
    %v4498 = vsel %vm81, %v4475, 0
    %v4501 = vsel %vm81, %v4476, 0
    %v4504 = vsel %vm81, %v4477, 0
    %v4507 = vsel %vm81, %v4478, 0
    %v4510 = vsel %vm81, %v4479, 0
    %4512 = vmatprep.subr.mxu0 0.0
    %4513 = vmatpush1.msra.mxu0 %v4480
    %4514 = vmatprep.subr.mxu0 0.0
    %4515 = vmatpush1.msra.mxu0 %v4481
    %4516 = vmatprep.subr.mxu0 0.0
    %4517 = vmatpush1.msra.mxu0 %v4482
    %4518 = vmatprep.subr.mxu0 0.0
    %4519 = vmatpush1.msra.mxu0 %v4483
    %4520 = vmatprep.subr.mxu0 0.0
    %4521 = vmatpush1.msra.mxu0 %v4484
    %4522 = vmatprep.subr.mxu0 0.0
    %4523 = vmatpush1.msra.mxu0 %v4485
    %4524 = vmatprep.subr.mxu0 0.0
    %4525 = vmatpush1.msra.mxu0 %v4486
    %4526 = vmatprep.subr.mxu0 0.0
    %4527 = vmatpush1.msra.mxu0 %v4487
    %4528 = vmatprep.subr.mxu0 0.0
    %4529 = vmatpush1.msra.mxu0 0.0
    %4530 = vmatprep.subr.mxu0 0.0
    %4531 = vmatpush1.msra.mxu0 0.0
    %4532 = vmatprep.subr.mxu0 0.0
    %4533 = vmatpush1.msra.mxu0 0.0
    %4534 = vmatprep.subr.mxu0 0.0
    %4535 = vmatpush1.msra.mxu0 0.0
    %4536 = vmatprep.subr.mxu0 0.0
    %4537 = vmatpush1.msra.mxu0 0.0
    %4538 = vmatprep.subr.mxu0 0.0
    %4539 = vmatpush1.msra.mxu0 0.0
    %4540 = vmatprep.subr.mxu0 0.0
    %4541 = vmatpush1.msra.mxu0 0.0
    %4542 = vmatprep.subr.mxu0 0.0
    %4543 = vmatpush1.msra.mxu0 0.0
    %4544 = vmatprep.subr.mxu0 0.0
    %4545 = vmatpush1.msra.mxu0 0.0
    %4546 = vmatprep.subr.mxu0 0.0
    %4547 = vmatpush1.msra.mxu0 0.0
    %4548 = vmatprep.subr.mxu0 0.0
    %4549 = vmatpush1.msra.mxu0 0.0
    %4550 = vmatprep.subr.mxu0 0.0
    %4551 = vmatpush1.msra.mxu0 0.0
    %4552 = vmatprep.subr.mxu0 0.0
    %4553 = vmatpush1.msra.mxu0 0.0
    %4554 = vmatprep.subr.mxu0 0.0
    %4555 = vmatpush1.msra.mxu0 0.0
    %4556 = vmatprep.subr.mxu0 0.0
    %4557 = vmatpush1.msra.mxu0 0.0
    %4558 = vmatprep.subr.mxu0 0.0
    %4559 = vmatpush1.msra.mxu0 0.0
    %4560 = vmatprep.subr.mxu0 0.0
    %4561 = vmatpush1.msra.mxu0 0.0
    %4562 = vmatprep.subr.mxu0 0.0
    %4563 = vmatpush1.msra.mxu0 0.0
    %4564 = vmatprep.subr.mxu0 0.0
    %4565 = vmatpush1.msra.mxu0 0.0
    %4566 = vmatprep.subr.mxu0 0.0
    %4567 = vmatpush1.msra.mxu0 0.0
    %4568 = vmatprep.subr.mxu0 0.0
    %4569 = vmatpush1.msra.mxu0 0.0
    %4570 = vmatprep.subr.mxu0 0.0
    %4571 = vmatpush1.msra.mxu0 0.0
    %4572 = vmatprep.subr.mxu0 0.0
    %4573 = vmatpush1.msra.mxu0 0.0
    %4574 = vmatprep.subr.mxu0 0.0
    %4575 = vmatpush1.msra.mxu0 0.0
    %4576 = vmatprep.mubr.f32.mxu0 0.0
    %4577 = vmatmul.mubr.f32.gmra.mrb[0].mxu0 %v4489
    %v4578 = vpop.f32.mrb[0].mxu0
    %v4579 = vadd.f32 0.0, %v4578
    %v4580 = vpop.f32.mrb[0].mxu0
    %4581 = vmatprep.mubr.f32.mxu0 0.0
    %4582 = vmatmul.mubr.f32.gmra.mrb[0].mxu0 %v4492
    %v4583 = vpop.f32.mrb[0].mxu0
    %v4584 = vadd.f32 0.0, %v4583
    %v4585 = vpop.f32.mrb[0].mxu0
    %4586 = vmatprep.mubr.f32.mxu0 0.0
    %4587 = vmatmul.mubr.f32.gmra.mrb[0].mxu0 %v4495
    %v4588 = vpop.f32.mrb[0].mxu0
    %v4589 = vadd.f32 0.0, %v4588
    %v4590 = vpop.f32.mrb[0].mxu0
    %4591 = vmatprep.mubr.f32.mxu0 0.0
    %4592 = vmatmul.mubr.f32.gmra.mrb[0].mxu0 %v4498
    %v4593 = vpop.f32.mrb[0].mxu0
    %v4594 = vadd.f32 0.0, %v4593
    %v4595 = vpop.f32.mrb[0].mxu0
    %4596 = vmatprep.mubr.f32.mxu0 0.0
    %4597 = vmatmul.mubr.f32.gmra.mrb[0].mxu0 %v4501
    %v4598 = vpop.f32.mrb[0].mxu0
    %v4599 = vadd.f32 0.0, %v4598
    %v4600 = vpop.f32.mrb[0].mxu0
    %4601 = vmatprep.mubr.f32.mxu0 0.0
    %4602 = vmatmul.mubr.f32.gmra.mrb[0].mxu0 %v4504
    %v4603 = vpop.f32.mrb[0].mxu0
    %v4604 = vadd.f32 0.0, %v4603
    %v4605 = vpop.f32.mrb[0].mxu0
    %4606 = vmatprep.mubr.f32.mxu0 0.0
    %4607 = vmatmul.mubr.f32.gmra.mrb[0].mxu0 %v4507
    %v4608 = vpop.f32.mrb[0].mxu0
    %v4609 = vadd.f32 0.0, %v4608
    %v4610 = vpop.f32.mrb[0].mxu0
    %4611 = vmatprep.mubr.f32.mxu0 0.0
    %4612 = vmatmul.mubr.f32.gmra.mrb[0].mxu0 %v4510
    %v4613 = vpop.f32.mrb[0].mxu0
    %v4614 = vadd.f32 0.0, %v4613
    %v4615 = vpop.f32.mrb[0].mxu0
    %4616 = vdwg.mxu0
    %v4617 = vadd.f32 %v4217, %v4579
    %v4618 = vadd.f32 %v4222, %v4584
    %v4619 = vadd.f32 %v4227, %v4589
    %v4620 = vadd.f32 %v4232, %v4594
    %v4621 = vadd.f32 %v4237, %v4599
    %v4622 = vadd.f32 %v4242, %v4604
    %v4623 = vadd.f32 %v4247, %v4609
    %v4624 = vadd.f32 %v4252, %v4614
    %v4625 = vmul.f32 %v3351, %v2052
    %v4626 = vmul.f32 %v3356, %v2052
    %v4627 = vmul.f32 %v3361, %v2052
    %v4628 = vmul.f32 %v3366, %v2052
    %v4629 = vmul.f32 %v3371, %v2052
    %v4630 = vmul.f32 %v3376, %v2052
    %v4631 = vmul.f32 %v3381, %v2052
    %v4632 = vmul.f32 %v3386, %v2052
    %v4634 = vsel %vm211, %v4625, 0
    %v4637 = vsel %vm211, %v4626, 0
    %v4640 = vsel %vm211, %v4627, 0
    %v4643 = vsel %vm211, %v4628, 0
    %v4646 = vsel %vm211, %v4629, 0
    %v4649 = vsel %vm211, %v4630, 0
    %v4652 = vsel %vm211, %v4631, 0
    %v4655 = vsel %vm211, %v4632, 0
    %4657 = vmatprep.subr.mxu0 0.0
    %4658 = vmatpush1.xpose.msra.mxu0 %v4634
    %4659 = vmatprep.subr.mxu0 0.0
    %4660 = vmatpush1.xpose.msra.mxu0 %v4637
    %4661 = vmatprep.subr.mxu0 0.0
    %4662 = vmatpush1.xpose.msra.mxu0 %v4640
    %4663 = vmatprep.subr.mxu0 0.0
    %4664 = vmatpush1.xpose.msra.mxu0 %v4643
    %4665 = vmatprep.subr.mxu0 0.0
    %4666 = vmatpush1.xpose.msra.mxu0 %v4646
    %4667 = vmatprep.subr.mxu0 0.0
    %4668 = vmatpush1.xpose.msra.mxu0 %v4649
    %4669 = vmatprep.subr.mxu0 0.0
    %4670 = vmatpush1.xpose.msra.mxu0 %v4652
    %4671 = vmatprep.subr.mxu0 0.0
    %4672 = vmatpush1.xpose.msra.mxu0 %v4655
    %4673 = vmatprep.subr.mxu0 0.0
    %4674 = vmatpush1.xpose.msra.mxu0 0.0
    %4675 = vmatprep.subr.mxu0 0.0
    %4676 = vmatpush1.xpose.msra.mxu0 0.0
    %4677 = vmatprep.subr.mxu0 0.0
    %4678 = vmatpush1.xpose.msra.mxu0 0.0
    %4679 = vmatprep.subr.mxu0 0.0
    %4680 = vmatpush1.xpose.msra.mxu0 0.0
    %4681 = vmatprep.subr.mxu0 0.0
    %4682 = vmatpush1.xpose.msra.mxu0 0.0
    %4683 = vmatprep.subr.mxu0 0.0
    %4684 = vmatpush1.xpose.msra.mxu0 0.0
    %4685 = vmatprep.subr.mxu0 0.0
    %4686 = vmatpush1.xpose.msra.mxu0 0.0
    %4687 = vmatprep.subr.mxu0 0.0
    %4688 = vmatpush1.xpose.msra.mxu0 0.0
    %4689 = vmatprep.subr.mxu0 0.0
    %4690 = vmatpush1.xpose.msra.mxu0 0.0
    %4691 = vmatprep.subr.mxu0 0.0
    %4692 = vmatpush1.xpose.msra.mxu0 0.0
    %4693 = vmatprep.subr.mxu0 0.0
    %4694 = vmatpush1.xpose.msra.mxu0 0.0
    %4695 = vmatprep.subr.mxu0 0.0
    %4696 = vmatpush1.xpose.msra.mxu0 0.0
    %4697 = vmatprep.subr.mxu0 0.0
    %4698 = vmatpush1.xpose.msra.mxu0 0.0
    %4699 = vmatprep.subr.mxu0 0.0
    %4700 = vmatpush1.xpose.msra.mxu0 0.0
    %4701 = vmatprep.subr.mxu0 0.0
    %4702 = vmatpush1.xpose.msra.mxu0 0.0
    %4703 = vmatprep.subr.mxu0 0.0
    %4704 = vmatpush1.xpose.msra.mxu0 0.0
    %4705 = vmatprep.subr.mxu0 0.0
    %4706 = vmatpush1.xpose.msra.mxu0 0.0
    %4707 = vmatprep.subr.mxu0 0.0
    %4708 = vmatpush1.xpose.msra.mxu0 0.0
    %4709 = vmatprep.subr.mxu0 0.0
    %4710 = vmatpush1.xpose.msra.mxu0 0.0
    %4711 = vmatprep.subr.mxu0 0.0
    %4712 = vmatpush1.xpose.msra.mxu0 0.0
    %4713 = vmatprep.subr.mxu0 0.0
    %4714 = vmatpush1.xpose.msra.mxu0 0.0
    %4715 = vmatprep.subr.mxu0 0.0
    %4716 = vmatpush1.xpose.msra.mxu0 0.0
    %4717 = vmatprep.subr.mxu0 0.0
    %4718 = vmatpush1.xpose.msra.mxu0 0.0
    %4719 = vmatprep.subr.mxu0 0.0
    %4720 = vmatpush1.xpose.msra.mxu0 0.0
    %4721 = vmatprep.mubr.f32.mxu0 0.0
    %4722 = vmatmul.mubr.f32.gmra.mrb[0].mxu0 %v3516
    %v4723 = vpop.f32.mrb[0].mxu0
    %v4724 = vadd.f32 %v73, %v4723
    %v4725 = vpop.f32.mrb[0].mxu0
    %4726 = vmatprep.mubr.f32.mxu0 0.0
    %4727 = vmatmul.mubr.f32.gmra.mrb[0].mxu0 %v3519
    %v4728 = vpop.f32.mrb[0].mxu0
    %v4729 = vadd.f32 %v74, %v4728
    %v4730 = vpop.f32.mrb[0].mxu0
    %4731 = vmatprep.mubr.f32.mxu0 0.0
    %4732 = vmatmul.mubr.f32.gmra.mrb[0].mxu0 %v3522
    %v4733 = vpop.f32.mrb[0].mxu0
    %v4734 = vadd.f32 %v75, %v4733
    %v4735 = vpop.f32.mrb[0].mxu0
    %4736 = vmatprep.mubr.f32.mxu0 0.0
    %4737 = vmatmul.mubr.f32.gmra.mrb[0].mxu0 %v3525
    %v4738 = vpop.f32.mrb[0].mxu0
    %v4739 = vadd.f32 %v76, %v4738
    %v4740 = vpop.f32.mrb[0].mxu0
    %4741 = vmatprep.mubr.f32.mxu0 0.0
    %4742 = vmatmul.mubr.f32.gmra.mrb[0].mxu0 %v3528
    %v4743 = vpop.f32.mrb[0].mxu0
    %v4744 = vadd.f32 %v77, %v4743
    %v4745 = vpop.f32.mrb[0].mxu0
    %4746 = vmatprep.mubr.f32.mxu0 0.0
    %4747 = vmatmul.mubr.f32.gmra.mrb[0].mxu0 %v3531
    %v4748 = vpop.f32.mrb[0].mxu0
    %v4749 = vadd.f32 %v78, %v4748
    %v4750 = vpop.f32.mrb[0].mxu0
    %4751 = vmatprep.mubr.f32.mxu0 0.0
    %4752 = vmatmul.mubr.f32.gmra.mrb[0].mxu0 %v3534
    %v4753 = vpop.f32.mrb[0].mxu0
    %v4754 = vadd.f32 %v79, %v4753
    %v4755 = vpop.f32.mrb[0].mxu0
    %4756 = vmatprep.mubr.f32.mxu0 0.0
    %4757 = vmatmul.mubr.f32.gmra.mrb[0].mxu0 %v3537
    %v4758 = vpop.f32.mrb[0].mxu0
    %v4759 = vadd.f32 %v80, %v4758
    %v4760 = vpop.f32.mrb[0].mxu0
    %4761 = vdwg.mxu0
    %v4762 = vsel %vm81, %v4724, -inf
    %4763 = vmax.xlane.f32.xlu0 %v4762
    %v4764 = vpop.xlane.xlu0 %4763
    %v4765 = vsel %vm81, %v4729, -inf
    %4766 = vmax.xlane.f32.xlu0 %v4765
    %v4767 = vpop.xlane.xlu0 %4766
    %v4768 = vsel %vm81, %v4734, -inf
    %4769 = vmax.xlane.f32.xlu0 %v4768
    %v4770 = vpop.xlane.xlu0 %4769
    %v4771 = vsel %vm81, %v4739, -inf
    %4772 = vmax.xlane.f32.xlu0 %v4771
    %v4773 = vpop.xlane.xlu0 %4772
    %v4774 = vsel %vm81, %v4744, -inf
    %4775 = vmax.xlane.f32.xlu0 %v4774
    %v4776 = vpop.xlane.xlu0 %4775
    %v4777 = vsel %vm81, %v4749, -inf
    %4778 = vmax.xlane.f32.xlu0 %v4777
    %v4779 = vpop.xlane.xlu0 %4778
    %v4780 = vsel %vm81, %v4754, -inf
    %4781 = vmax.xlane.f32.xlu0 %v4780
    %v4782 = vpop.xlane.xlu0 %4781
    %v4783 = vsel %vm81, %v4759, -inf
    %4784 = vmax.xlane.f32.xlu0 %v4783
    %v4785 = vpop.xlane.xlu0 %4784
    %v4786 = vsub.f32 %v4724, %v4764
    %v4787 = vsub.f32 %v4729, %v4767
    %v4788 = vsub.f32 %v4734, %v4770
    %v4789 = vsub.f32 %v4739, %v4773
    %v4790 = vsub.f32 %v4744, %v4776
    %v4791 = vsub.f32 %v4749, %v4779
    %v4792 = vsub.f32 %v4754, %v4782
    %v4793 = vsub.f32 %v4759, %v4785
    %v4794 = vmul.f32 %v4786, 1.442695
    %v4795 = vpow.pop %v4794
    %v4796 = vmul.f32 %v4787, 1.442695
    %v4797 = vpow.pop %v4796
    %v4798 = vmul.f32 %v4788, 1.442695
    %v4799 = vpow.pop %v4798
    %v4800 = vmul.f32 %v4789, 1.442695
    %v4801 = vpow.pop %v4800
    %v4802 = vmul.f32 %v4790, 1.442695
    %v4803 = vpow.pop %v4802
    %v4804 = vmul.f32 %v4791, 1.442695
    %v4805 = vpow.pop %v4804
    %v4806 = vmul.f32 %v4792, 1.442695
    %v4807 = vpow.pop %v4806
    %v4808 = vmul.f32 %v4793, 1.442695
    %v4809 = vpow.pop %v4808
    %v4810 = vsel %vm81, %v4795, 0.0
    %4811 = vadd.xlane.f32.xlu0 %v4810
    %v4812 = vpop.xlane.xlu0 %4811
    %v4813 = vsel %vm81, %v4797, 0.0
    %4814 = vadd.xlane.f32.xlu0 %v4813
    %v4815 = vpop.xlane.xlu0 %4814
    %v4816 = vsel %vm81, %v4799, 0.0
    %4817 = vadd.xlane.f32.xlu0 %v4816
    %v4818 = vpop.xlane.xlu0 %4817
    %v4819 = vsel %vm81, %v4801, 0.0
    %4820 = vadd.xlane.f32.xlu0 %v4819
    %v4821 = vpop.xlane.xlu0 %4820
    %v4822 = vsel %vm81, %v4803, 0.0
    %4823 = vadd.xlane.f32.xlu0 %v4822
    %v4824 = vpop.xlane.xlu0 %4823
    %v4825 = vsel %vm81, %v4805, 0.0
    %4826 = vadd.xlane.f32.xlu0 %v4825
    %v4827 = vpop.xlane.xlu0 %4826
    %v4828 = vsel %vm81, %v4807, 0.0
    %4829 = vadd.xlane.f32.xlu0 %v4828
    %v4830 = vpop.xlane.xlu0 %4829
    %v4831 = vsel %vm81, %v4809, 0.0
    %4832 = vadd.xlane.f32.xlu0 %v4831
    %v4833 = vpop.xlane.xlu0 %4832
    %v4834 = vrcp.pop %v4812
    %v4835 = vrcp.pop %v4815
    %v4836 = vrcp.pop %v4818
    %v4837 = vrcp.pop %v4821
    %v4838 = vrcp.pop %v4824
    %v4839 = vrcp.pop %v4827
    %v4840 = vrcp.pop %v4830
    %v4841 = vrcp.pop %v4833
    %v4842 = vmul.f32 %v4795, %v4834
    %v4843 = vmul.f32 %v4797, %v4835
    %v4844 = vmul.f32 %v4799, %v4836
    %v4845 = vmul.f32 %v4801, %v4837
    %v4846 = vmul.f32 %v4803, %v4838
    %v4847 = vmul.f32 %v4805, %v4839
    %v4848 = vmul.f32 %v4807, %v4840
    %v4849 = vmul.f32 %v4809, %v4841
    %v4850 = vmul.f32 %v3469, %v2052
    %v4851 = vmul.f32 %v3474, %v2052
    %v4852 = vmul.f32 %v3479, %v2052
    %v4853 = vmul.f32 %v3484, %v2052
    %v4854 = vmul.f32 %v3489, %v2052
    %v4855 = vmul.f32 %v3494, %v2052
    %v4856 = vmul.f32 %v3499, %v2052
    %v4857 = vmul.f32 %v3504, %v2052
    %v4859 = vsel %vm81, %v4842, 0
    %v4862 = vsel %vm81, %v4843, 0
    %v4865 = vsel %vm81, %v4844, 0
    %v4868 = vsel %vm81, %v4845, 0
    %v4871 = vsel %vm81, %v4846, 0
    %v4874 = vsel %vm81, %v4847, 0
    %v4877 = vsel %vm81, %v4848, 0
    %v4880 = vsel %vm81, %v4849, 0
    %4882 = vmatprep.subr.mxu0 0.0
    %4883 = vmatpush1.msra.mxu0 %v4850
    %4884 = vmatprep.subr.mxu0 0.0
    %4885 = vmatpush1.msra.mxu0 %v4851
    %4886 = vmatprep.subr.mxu0 0.0
    %4887 = vmatpush1.msra.mxu0 %v4852
    %4888 = vmatprep.subr.mxu0 0.0
    %4889 = vmatpush1.msra.mxu0 %v4853
    %4890 = vmatprep.subr.mxu0 0.0
    %4891 = vmatpush1.msra.mxu0 %v4854
    %4892 = vmatprep.subr.mxu0 0.0
    %4893 = vmatpush1.msra.mxu0 %v4855
    %4894 = vmatprep.subr.mxu0 0.0
    %4895 = vmatpush1.msra.mxu0 %v4856
    %4896 = vmatprep.subr.mxu0 0.0
    %4897 = vmatpush1.msra.mxu0 %v4857
    %4898 = vmatprep.subr.mxu0 0.0
    %4899 = vmatpush1.msra.mxu0 0.0
    %4900 = vmatprep.subr.mxu0 0.0
    %4901 = vmatpush1.msra.mxu0 0.0
    %4902 = vmatprep.subr.mxu0 0.0
    %4903 = vmatpush1.msra.mxu0 0.0
    %4904 = vmatprep.subr.mxu0 0.0
    %4905 = vmatpush1.msra.mxu0 0.0
    %4906 = vmatprep.subr.mxu0 0.0
    %4907 = vmatpush1.msra.mxu0 0.0
    %4908 = vmatprep.subr.mxu0 0.0
    %4909 = vmatpush1.msra.mxu0 0.0
    %4910 = vmatprep.subr.mxu0 0.0
    %4911 = vmatpush1.msra.mxu0 0.0
    %4912 = vmatprep.subr.mxu0 0.0
    %4913 = vmatpush1.msra.mxu0 0.0
    %4914 = vmatprep.subr.mxu0 0.0
    %4915 = vmatpush1.msra.mxu0 0.0
    %4916 = vmatprep.subr.mxu0 0.0
    %4917 = vmatpush1.msra.mxu0 0.0
    %4918 = vmatprep.subr.mxu0 0.0
    %4919 = vmatpush1.msra.mxu0 0.0
    %4920 = vmatprep.subr.mxu0 0.0
    %4921 = vmatpush1.msra.mxu0 0.0
    %4922 = vmatprep.subr.mxu0 0.0
    %4923 = vmatpush1.msra.mxu0 0.0
    %4924 = vmatprep.subr.mxu0 0.0
    %4925 = vmatpush1.msra.mxu0 0.0
    %4926 = vmatprep.subr.mxu0 0.0
    %4927 = vmatpush1.msra.mxu0 0.0
    %4928 = vmatprep.subr.mxu0 0.0
    %4929 = vmatpush1.msra.mxu0 0.0
    %4930 = vmatprep.subr.mxu0 0.0
    %4931 = vmatpush1.msra.mxu0 0.0
    %4932 = vmatprep.subr.mxu0 0.0
    %4933 = vmatpush1.msra.mxu0 0.0
    %4934 = vmatprep.subr.mxu0 0.0
    %4935 = vmatpush1.msra.mxu0 0.0
    %4936 = vmatprep.subr.mxu0 0.0
    %4937 = vmatpush1.msra.mxu0 0.0
    %4938 = vmatprep.subr.mxu0 0.0
    %4939 = vmatpush1.msra.mxu0 0.0
    %4940 = vmatprep.subr.mxu0 0.0
    %4941 = vmatpush1.msra.mxu0 0.0
    %4942 = vmatprep.subr.mxu0 0.0
    %4943 = vmatpush1.msra.mxu0 0.0
    %4944 = vmatprep.subr.mxu0 0.0
    %4945 = vmatpush1.msra.mxu0 0.0
    %4946 = vmatprep.mubr.f32.mxu0 0.0
    %4947 = vmatmul.mubr.f32.gmra.mrb[0].mxu0 %v4859
    %v4948 = vpop.f32.mrb[0].mxu0
    %v4949 = vadd.f32 0.0, %v4948
    %v4950 = vpop.f32.mrb[0].mxu0
    %4951 = vmatprep.mubr.f32.mxu0 0.0
    %4952 = vmatmul.mubr.f32.gmra.mrb[0].mxu0 %v4862
    %v4953 = vpop.f32.mrb[0].mxu0
    %v4954 = vadd.f32 0.0, %v4953
    %v4955 = vpop.f32.mrb[0].mxu0
    %4956 = vmatprep.mubr.f32.mxu0 0.0
    %4957 = vmatmul.mubr.f32.gmra.mrb[0].mxu0 %v4865
    %v4958 = vpop.f32.mrb[0].mxu0
    %v4959 = vadd.f32 0.0, %v4958
    %v4960 = vpop.f32.mrb[0].mxu0
    %4961 = vmatprep.mubr.f32.mxu0 0.0
    %4962 = vmatmul.mubr.f32.gmra.mrb[0].mxu0 %v4868
    %v4963 = vpop.f32.mrb[0].mxu0
    %v4964 = vadd.f32 0.0, %v4963
    %v4965 = vpop.f32.mrb[0].mxu0
    %4966 = vmatprep.mubr.f32.mxu0 0.0
    %4967 = vmatmul.mubr.f32.gmra.mrb[0].mxu0 %v4871
    %v4968 = vpop.f32.mrb[0].mxu0
    %v4969 = vadd.f32 0.0, %v4968
    %v4970 = vpop.f32.mrb[0].mxu0
    %4971 = vmatprep.mubr.f32.mxu0 0.0
    %4972 = vmatmul.mubr.f32.gmra.mrb[0].mxu0 %v4874
    %v4973 = vpop.f32.mrb[0].mxu0
    %v4974 = vadd.f32 0.0, %v4973
    %v4975 = vpop.f32.mrb[0].mxu0
    %4976 = vmatprep.mubr.f32.mxu0 0.0
    %4977 = vmatmul.mubr.f32.gmra.mrb[0].mxu0 %v4877
    %v4978 = vpop.f32.mrb[0].mxu0
    %v4979 = vadd.f32 0.0, %v4978
    %v4980 = vpop.f32.mrb[0].mxu0
    %4981 = vmatprep.mubr.f32.mxu0 0.0
    %4982 = vmatmul.mubr.f32.gmra.mrb[0].mxu0 %v4880
    %v4983 = vpop.f32.mrb[0].mxu0
    %v4984 = vadd.f32 0.0, %v4983
    %v4985 = vpop.f32.mrb[0].mxu0
    %4986 = vdwg.mxu0
    %v4987 = vadd.f32 %v4617, %v4949
    %v4988 = vadd.f32 %v4618, %v4954
    %v4989 = vadd.f32 %v4619, %v4959
    %v4990 = vadd.f32 %v4620, %v4964
    %v4991 = vadd.f32 %v4621, %v4969
    %v4992 = vadd.f32 %v4622, %v4974
    %v4993 = vadd.f32 %v4623, %v4979
    %v4994 = vadd.f32 %v4624, %v4984
    %s4995 = scalar_lea.vmem %s13, 32
    %v4996 = vld [vmem:[%s4995] sm:$0xff]
    %v4997 = vld [vmem:[%s4995 + $0x8] sm:$0xff]
    %v4998 = vld [vmem:[%s4995 + $0x10] sm:$0xff]
    %v4999 = vld [vmem:[%s4995 + $0x18] sm:$0xff]
    %s5000 = scalar_lea.vmem %s14, 1
    %v5001 = vld [vmem:[%s5000] sm:$0x1]
    %v5003 = vlaneseq
    %v5004 = vshrl.u32 %v5003, 7
    %v5005 = vsub.s32 0, %v5004
    %v5006 = vrot.slane %v5001, %v5005
    %v5009 = vsel %vm211, %v4987, 0
    %v5012 = vsel %vm211, %v4988, 0
    %v5015 = vsel %vm211, %v4989, 0
    %v5018 = vsel %vm211, %v4990, 0
    %v5021 = vsel %vm211, %v4991, 0
    %v5024 = vsel %vm211, %v4992, 0
    %v5027 = vsel %vm211, %v4993, 0
    %v5030 = vsel %vm211, %v4994, 0
    %5032 = vmatprep.subr.mxu0 0.0
    %5033 = vmatpush1.msra.mxu0 %v4996
    %5034 = vmatprep.subr.mxu0 0.0
    %5035 = vmatpush1.msra.mxu0 %v4997
    %5036 = vmatprep.subr.mxu0 0.0
    %5037 = vmatpush1.msra.mxu0 %v4998
    %5038 = vmatprep.subr.mxu0 0.0
    %5039 = vmatpush1.msra.mxu0 %v4999
    %5040 = vmatprep.subr.mxu0 0.0
    %5041 = vmatpush1.msra.mxu0 0.0
    %5042 = vmatprep.subr.mxu0 0.0
    %5043 = vmatpush1.msra.mxu0 0.0
    %5044 = vmatprep.subr.mxu0 0.0
    %5045 = vmatpush1.msra.mxu0 0.0
    %5046 = vmatprep.subr.mxu0 0.0
    %5047 = vmatpush1.msra.mxu0 0.0
    %5048 = vmatprep.subr.mxu0 0.0
    %5049 = vmatpush1.msra.mxu0 0.0
    %5050 = vmatprep.subr.mxu0 0.0
    %5051 = vmatpush1.msra.mxu0 0.0
    %5052 = vmatprep.subr.mxu0 0.0
    %5053 = vmatpush1.msra.mxu0 0.0
    %5054 = vmatprep.subr.mxu0 0.0
    %5055 = vmatpush1.msra.mxu0 0.0
    %5056 = vmatprep.subr.mxu0 0.0
    %5057 = vmatpush1.msra.mxu0 0.0
    %5058 = vmatprep.subr.mxu0 0.0
    %5059 = vmatpush1.msra.mxu0 0.0
    %5060 = vmatprep.subr.mxu0 0.0
    %5061 = vmatpush1.msra.mxu0 0.0
    %5062 = vmatprep.subr.mxu0 0.0
    %5063 = vmatpush1.msra.mxu0 0.0
    %5064 = vmatprep.subr.mxu0 0.0
    %5065 = vmatpush1.msra.mxu0 0.0
    %5066 = vmatprep.subr.mxu0 0.0
    %5067 = vmatpush1.msra.mxu0 0.0
    %5068 = vmatprep.subr.mxu0 0.0
    %5069 = vmatpush1.msra.mxu0 0.0
    %5070 = vmatprep.subr.mxu0 0.0
    %5071 = vmatpush1.msra.mxu0 0.0
    %5072 = vmatprep.subr.mxu0 0.0
    %5073 = vmatpush1.msra.mxu0 0.0
    %5074 = vmatprep.subr.mxu0 0.0
    %5075 = vmatpush1.msra.mxu0 0.0
    %5076 = vmatprep.subr.mxu0 0.0
    %5077 = vmatpush1.msra.mxu0 0.0
    %5078 = vmatprep.subr.mxu0 0.0
    %5079 = vmatpush1.msra.mxu0 0.0
    %5080 = vmatprep.subr.mxu0 0.0
    %5081 = vmatpush1.msra.mxu0 0.0
    %5082 = vmatprep.subr.mxu0 0.0
    %5083 = vmatpush1.msra.mxu0 0.0
    %5084 = vmatprep.subr.mxu0 0.0
    %5085 = vmatpush1.msra.mxu0 0.0
    %5086 = vmatprep.subr.mxu0 0.0
    %5087 = vmatpush1.msra.mxu0 0.0
    %5088 = vmatprep.subr.mxu0 0.0
    %5089 = vmatpush1.msra.mxu0 0.0
    %5090 = vmatprep.subr.mxu0 0.0
    %5091 = vmatpush1.msra.mxu0 0.0
    %5092 = vmatprep.subr.mxu0 0.0
    %5093 = vmatpush1.msra.mxu0 0.0
    %5094 = vmatprep.subr.mxu0 0.0
    %5095 = vmatpush1.msra.mxu0 0.0
    %5096 = vmatprep.mubr.f32.mxu0 0.0
    %5097 = vmatmul.mubr.f32.gmra.mrb[0].mxu0 %v5009
    %v5098 = vpop.f32.mrb[0].mxu0
    %v5099 = vadd.f32 %v5006, %v5098
    %v5100 = vpop.f32.mrb[0].mxu0
    %5101 = vmatprep.mubr.f32.mxu0 0.0
    %5102 = vmatmul.mubr.f32.gmra.mrb[0].mxu0 %v5012
    %v5103 = vpop.f32.mrb[0].mxu0
    %v5104 = vadd.f32 %v5006, %v5103
    %v5105 = vpop.f32.mrb[0].mxu0
    %5106 = vmatprep.mubr.f32.mxu0 0.0
    %5107 = vmatmul.mubr.f32.gmra.mrb[0].mxu0 %v5015
    %v5108 = vpop.f32.mrb[0].mxu0
    %v5109 = vadd.f32 %v5006, %v5108
    %v5110 = vpop.f32.mrb[0].mxu0
    %5111 = vmatprep.mubr.f32.mxu0 0.0
    %5112 = vmatmul.mubr.f32.gmra.mrb[0].mxu0 %v5018
    %v5113 = vpop.f32.mrb[0].mxu0
    %v5114 = vadd.f32 %v5006, %v5113
    %v5115 = vpop.f32.mrb[0].mxu0
    %5116 = vmatprep.mubr.f32.mxu0 0.0
    %5117 = vmatmul.mubr.f32.gmra.mrb[0].mxu0 %v5021
    %v5118 = vpop.f32.mrb[0].mxu0
    %v5119 = vadd.f32 %v5006, %v5118
    %v5120 = vpop.f32.mrb[0].mxu0
    %5121 = vmatprep.mubr.f32.mxu0 0.0
    %5122 = vmatmul.mubr.f32.gmra.mrb[0].mxu0 %v5024
    %v5123 = vpop.f32.mrb[0].mxu0
    %v5124 = vadd.f32 %v5006, %v5123
    %v5125 = vpop.f32.mrb[0].mxu0
    %5126 = vmatprep.mubr.f32.mxu0 0.0
    %5127 = vmatmul.mubr.f32.gmra.mrb[0].mxu0 %v5027
    %v5128 = vpop.f32.mrb[0].mxu0
    %v5129 = vadd.f32 %v5006, %v5128
    %v5130 = vpop.f32.mrb[0].mxu0
    %5131 = vmatprep.mubr.f32.mxu0 0.0
    %5132 = vmatmul.mubr.f32.gmra.mrb[0].mxu0 %v5030
    %v5133 = vpop.f32.mrb[0].mxu0
    %v5134 = vadd.f32 %v5006, %v5133
    %v5135 = vpop.f32.mrb[0].mxu0
    %5136 = vdwg.mxu0
    %v5137 = vld [vmem:[%s15] sm:$0xff]
    %v5138 = vld [vmem:[%s15 + $0x8] sm:$0xff]
    %v5139 = vld [vmem:[%s15 + $0x10] sm:$0xff]
    %v5140 = vld [vmem:[%s15 + $0x18] sm:$0xff]
    %v5141 = vld [vmem:[%s16] sm:$0x1]
    %v5143 = vlaneseq
    %v5144 = vshrl.u32 %v5143, 7
    %v5145 = vsub.s32 0, %v5144
    %v5146 = vrot.slane %v5141, %v5145
    %v5149 = vsel %vm211, %v5099, 0
    %v5152 = vsel %vm211, %v5104, 0
    %v5155 = vsel %vm211, %v5109, 0
    %v5158 = vsel %vm211, %v5114, 0
    %v5161 = vsel %vm211, %v5119, 0
    %v5164 = vsel %vm211, %v5124, 0
    %v5167 = vsel %vm211, %v5129, 0
    %v5170 = vsel %vm211, %v5134, 0
    %5172 = vmatprep.subr.mxu0 0.0
    %5173 = vmatpush1.msra.mxu0 %v5137
    %5174 = vmatprep.subr.mxu0 0.0
    %5175 = vmatpush1.msra.mxu0 %v5138
    %5176 = vmatprep.subr.mxu0 0.0
    %5177 = vmatpush1.msra.mxu0 %v5139
    %5178 = vmatprep.subr.mxu0 0.0
    %5179 = vmatpush1.msra.mxu0 %v5140
    %5180 = vmatprep.subr.mxu0 0.0
    %5181 = vmatpush1.msra.mxu0 0.0
    %5182 = vmatprep.subr.mxu0 0.0
    %5183 = vmatpush1.msra.mxu0 0.0
    %5184 = vmatprep.subr.mxu0 0.0
    %5185 = vmatpush1.msra.mxu0 0.0
    %5186 = vmatprep.subr.mxu0 0.0
    %5187 = vmatpush1.msra.mxu0 0.0
    %5188 = vmatprep.subr.mxu0 0.0
    %5189 = vmatpush1.msra.mxu0 0.0
    %5190 = vmatprep.subr.mxu0 0.0
    %5191 = vmatpush1.msra.mxu0 0.0
    %5192 = vmatprep.subr.mxu0 0.0
    %5193 = vmatpush1.msra.mxu0 0.0
    %5194 = vmatprep.subr.mxu0 0.0
    %5195 = vmatpush1.msra.mxu0 0.0
    %5196 = vmatprep.subr.mxu0 0.0
    %5197 = vmatpush1.msra.mxu0 0.0
    %5198 = vmatprep.subr.mxu0 0.0
    %5199 = vmatpush1.msra.mxu0 0.0
    %5200 = vmatprep.subr.mxu0 0.0
    %5201 = vmatpush1.msra.mxu0 0.0
    %5202 = vmatprep.subr.mxu0 0.0
    %5203 = vmatpush1.msra.mxu0 0.0
    %5204 = vmatprep.subr.mxu0 0.0
    %5205 = vmatpush1.msra.mxu0 0.0
    %5206 = vmatprep.subr.mxu0 0.0
    %5207 = vmatpush1.msra.mxu0 0.0
    %5208 = vmatprep.subr.mxu0 0.0
    %5209 = vmatpush1.msra.mxu0 0.0
    %5210 = vmatprep.subr.mxu0 0.0
    %5211 = vmatpush1.msra.mxu0 0.0
    %5212 = vmatprep.subr.mxu0 0.0
    %5213 = vmatpush1.msra.mxu0 0.0
    %5214 = vmatprep.subr.mxu0 0.0
    %5215 = vmatpush1.msra.mxu0 0.0
    %5216 = vmatprep.subr.mxu0 0.0
    %5217 = vmatpush1.msra.mxu0 0.0
    %5218 = vmatprep.subr.mxu0 0.0
    %5219 = vmatpush1.msra.mxu0 0.0
    %5220 = vmatprep.subr.mxu0 0.0
    %5221 = vmatpush1.msra.mxu0 0.0
    %5222 = vmatprep.subr.mxu0 0.0
    %5223 = vmatpush1.msra.mxu0 0.0
    %5224 = vmatprep.subr.mxu0 0.0
    %5225 = vmatpush1.msra.mxu0 0.0
    %5226 = vmatprep.subr.mxu0 0.0
    %5227 = vmatpush1.msra.mxu0 0.0
    %5228 = vmatprep.subr.mxu0 0.0
    %5229 = vmatpush1.msra.mxu0 0.0
    %5230 = vmatprep.subr.mxu0 0.0
    %5231 = vmatpush1.msra.mxu0 0.0
    %5232 = vmatprep.subr.mxu0 0.0
    %5233 = vmatpush1.msra.mxu0 0.0
    %5234 = vmatprep.subr.mxu0 0.0
    %5235 = vmatpush1.msra.mxu0 0.0
    %5236 = vmatprep.mubr.f32.mxu0 0.0
    %5237 = vmatmul.mubr.f32.gmra.mrb[0].mxu0 %v5149
    %v5238 = vpop.f32.mrb[0].mxu0
    %v5239 = vadd.f32 %v5146, %v5238
    %v5240 = vpop.f32.mrb[0].mxu0
    %5241 = vmatprep.mubr.f32.mxu0 0.0
    %5242 = vmatmul.mubr.f32.gmra.mrb[0].mxu0 %v5152
    %v5243 = vpop.f32.mrb[0].mxu0
    %v5244 = vadd.f32 %v5146, %v5243
    %v5245 = vpop.f32.mrb[0].mxu0
    %5246 = vmatprep.mubr.f32.mxu0 0.0
    %5247 = vmatmul.mubr.f32.gmra.mrb[0].mxu0 %v5155
    %v5248 = vpop.f32.mrb[0].mxu0
    %v5249 = vadd.f32 %v5146, %v5248
    %v5250 = vpop.f32.mrb[0].mxu0
    %5251 = vmatprep.mubr.f32.mxu0 0.0
    %5252 = vmatmul.mubr.f32.gmra.mrb[0].mxu0 %v5158
    %v5253 = vpop.f32.mrb[0].mxu0
    %v5254 = vadd.f32 %v5146, %v5253
    %v5255 = vpop.f32.mrb[0].mxu0
    %5256 = vmatprep.mubr.f32.mxu0 0.0
    %5257 = vmatmul.mubr.f32.gmra.mrb[0].mxu0 %v5161
    %v5258 = vpop.f32.mrb[0].mxu0
    %v5259 = vadd.f32 %v5146, %v5258
    %v5260 = vpop.f32.mrb[0].mxu0
    %5261 = vmatprep.mubr.f32.mxu0 0.0
    %5262 = vmatmul.mubr.f32.gmra.mrb[0].mxu0 %v5164
    %v5263 = vpop.f32.mrb[0].mxu0
    %v5264 = vadd.f32 %v5146, %v5263
    %v5265 = vpop.f32.mrb[0].mxu0
    %5266 = vmatprep.mubr.f32.mxu0 0.0
    %5267 = vmatmul.mubr.f32.gmra.mrb[0].mxu0 %v5167
    %v5268 = vpop.f32.mrb[0].mxu0
    %v5269 = vadd.f32 %v5146, %v5268
    %v5270 = vpop.f32.mrb[0].mxu0
    %5271 = vmatprep.mubr.f32.mxu0 0.0
    %5272 = vmatmul.mubr.f32.gmra.mrb[0].mxu0 %v5170
    %v5273 = vpop.f32.mrb[0].mxu0
    %v5274 = vadd.f32 %v5146, %v5273
    %v5275 = vpop.f32.mrb[0].mxu0
    %5276 = vdwg.mxu0
    %vm5277 = vcmask 130048
    %5278 = vst.msk [vmem:[#allocation2] sm:$0xff] %vm5277, %v5239
    %5279 = vst.msk [vmem:[#allocation2 + $0x8] sm:$0xff] %vm5277, %v5244
    %5280 = vst.msk [vmem:[#allocation2 + $0x10] sm:$0xff] %vm5277, %v5249
    %5281 = vst.msk [vmem:[#allocation2 + $0x18] sm:$0xff] %vm5277, %v5254
    %5282 = vst.msk [vmem:[#allocation2 + $0x20] sm:$0xff] %vm5277, %v5259
    %5283 = vst.msk [vmem:[#allocation2 + $0x28] sm:$0xff] %vm5277, %v5264
    %5284 = vst.msk [vmem:[#allocation2 + $0x30] sm:$0xff] %vm5277, %v5269
    %5285 = vst.msk [vmem:[#allocation2 + $0x38] sm:$0xff] %vm5277, %v5274
    // Predicated region
    $region70: #{timings_transformer_forward.1} parent=1 // pred_check
      _
    $region71: #{timings_transformer_forward.1} parent=1 // pred_check_branch
      %5287 = sbr.rel (0) target = $region73
    $region72: #{timings_transformer_forward.1} parent=1 // pred_region
      %s5289 = ssub.s32 1024, 1024
      %5290 = vsyncadd [#allocation3], %s5289
      %s5291 = sshll.u32 [#allocation2], 4
      %s5292 = int_to_ptr.vmem [resolvable:$true] %s5291
      %5297 = dma.vmem_to_hbm [thread:$0]  %s5292, 1024, %s17, [#allocation3], 128, 128, 8
    $region73: #{timings_transformer_forward.1} parent=1 // pred_fallthru
      _
    // Predicated region
    $region74: #{timings_transformer_forward.1} parent=1 // pred_check
      _
    $region75: #{timings_transformer_forward.1} parent=1 // pred_check_branch
      %5299 = sbr.rel (0) target = $region77
    $region76: #{timings_transformer_forward.1} parent=1 // pred_region
      %5300 = dma.done [#allocation3], 1024
    $region77: #{timings_transformer_forward.1} parent=1 // pred_fallthru
      _
    %5301 = vsyncpa [#allocation3], 1

</llo_original>
